<compile_context>
chip_gen: v6e
topology: v6e:2x2x1
jax: 0.10.0
libtpu: 0.0.40
codegen_flags: <defaults>
</compile_context>

<pallas_src>
import math
import functools

import jax
import jax.numpy as jnp
from jax.experimental import pallas as pl
from jax.experimental.pallas import tpu as pltpu


def _block_vmem_bytes(bblk, T, D, H, hidden, out_cols):
    """Rough per-grid-step VMEM footprint (bytes) for one batch block."""
    bt = bblk * T
    hb = H * bblk
    io = 2 * (2 * bt * D * 2)          # h_input + h_cond_prior blocks (bf16, double-buffered)
    io += 2 * (bt * out_cols * 4)      # phi output block (f32, double-buffered)
    inter = 3 * bt * D * 4             # q, k, v (f32)
    inter += 3 * hb * T * D * 2        # per-head stacked q/k/v (bf16)
    inter += 2 * hb * T * T * 4        # scores + probs (f32)  <- dominant at large T
    inter += hb * T * D * 4            # per-(head,batch) attention outputs (f32)
    inter += bt * (D + hidden + out_cols) * 4   # o/attn, z1, phi
    return io + inter


def _encoder_head_kernel(h_in_ref, h_cp_ref,
                         wq_ref, wk_ref, wv_ref, bq_ref, bk_ref, bv_ref,
                         wo_ref, bo_ref,
                         w1cp_ref, w1att_ref, b1_ref, w2_ref, b2_ref,
                         phi_ref,
                         *, num_heads, head_dim, d_model, bblk, seq_len):
    f32 = jnp.float32
    bf16 = jnp.bfloat16
    BT = bblk * seq_len

    # [Bblk, T, D] -> [Bblk*T, D]  (leading-dim merge; layout-free)
    x = h_in_ref[...].reshape(BT, d_model)                       # bf16

    # --- attention in-projection (1/sqrt(head_dim) folded into wq/bq) ---
    q = jnp.dot(x, wq_ref[...], preferred_element_type=f32) + bq_ref[...]
    k = jnp.dot(x, wk_ref[...], preferred_element_type=f32) + bk_ref[...]
    v = jnp.dot(x, wv_ref[...], preferred_element_type=f32) + bv_ref[...]

    q3 = q.reshape(bblk, seq_len, d_model).astype(bf16)
    k3 = k.reshape(bblk, seq_len, d_model).astype(bf16)
    v3 = v.reshape(bblk, seq_len, d_model).astype(bf16)

    # Per-head lane masks (compile-time constants). Heads are separated by
    # masking lane groups rather than slicing dh-wide lane windows: no
    # cross-lane data movement, and the contraction stays one MXU pass.
    lane = jax.lax.broadcasted_iota(jnp.int32, (1, 1, d_model), 2)
    masks = [(lane >= h * head_dim) & (lane < (h + 1) * head_dim)
             for h in range(num_heads)]

    zero_b = jnp.zeros_like(q3)
    qm = jnp.concatenate(
        [jnp.where(masks[h], q3, zero_b) for h in range(num_heads)], axis=0)
    km = jnp.concatenate([k3] * num_heads, axis=0)               # [H*Bblk, T, D]
    vm = jnp.concatenate([v3] * num_heads, axis=0)

    # --- batched attention over all (head, batch) pairs; softmax in f32 ---
    s = jnp.einsum('zqd,zkd->zqk', qm, km,
                   preferred_element_type=f32)                   # [H*Bblk, T, T]
    s = s - jnp.max(s, axis=-1, keepdims=True)
    p = jnp.exp(s)
    p = p * pl.reciprocal(jnp.sum(p, axis=-1, keepdims=True), approx=True)
    oz = jnp.einsum('zqk,zkd->zqd', p.astype(bf16), vm,
                    preferred_element_type=f32)                  # [H*Bblk, T, D]

    # Fold heads back by keeping each head's lane group and summing: the result
    # is already the interleaved [Bblk, T, D] attention output, so the
    # out-projection is a single full-width matmul (no per-head MXU loop).
    o = jnp.zeros((bblk, seq_len, d_model), f32)
    for h in range(num_heads):
        o = o + jnp.where(masks[h], oz[h * bblk:(h + 1) * bblk], 0.0)
    attn = jnp.dot(o.reshape(BT, d_model).astype(bf16), wo_ref[...],
                   preferred_element_type=f32) + bo_ref[...]

    # --- MLP on cat(h_cond_prior, attn): concat eliminated by splitting w1 ---
    hcp = h_cp_ref[...].reshape(BT, d_model)                     # bf16
    z1 = (jnp.dot(hcp, w1cp_ref[...], preferred_element_type=f32)
          + jnp.dot(attn.astype(bf16), w1att_ref[...], preferred_element_type=f32)
          + b1_ref[...])
    z1 = jnp.maximum(z1, 0.0)                                    # ReLU
    phi = jnp.dot(z1.astype(bf16), w2_ref[...],
                  preferred_element_type=f32) + b2_ref[...]      # [BT, out_cols]

    phi_ref[...] = phi.reshape(bblk, seq_len, phi.shape[-1]).astype(phi_ref.dtype)


def encoder_head_forward(h_input, h_cond_prior, params, *,
                         num_heads, z_dim, hidden, batch_block=None):
    B, T, D = h_input.shape
    assert D % num_heads == 0
    head_dim = D // num_heads
    wqkv, bqkv, wo, bo, w1, b1, w2, b2 = params
    f32, bf16 = jnp.float32, jnp.bfloat16

    # --- trace-time weight surgery (free, outside the kernel) ---
    scale = 1.0 / math.sqrt(head_dim)
    wq = (wqkv[:, :D] * scale).astype(bf16)
    wk = wqkv[:, D:2 * D].astype(bf16)
    wv = wqkv[:, 2 * D:].astype(bf16)
    bq = (bqkv[:, :D] * scale).astype(f32)
    bk = bqkv[:, D:2 * D].astype(f32)
    bv = bqkv[:, 2 * D:].astype(f32)
    wo_b = wo.astype(bf16)
    bo_b = bo.astype(f32)
    w1_cp = w1[:D].astype(bf16)          # multiplies h_cond_prior
    w1_attn = w1[D:].astype(bf16)        # multiplies the attention output
    b1_b = b1.astype(f32)

    # Lane-dense output: pad final projection to a multiple of 128 lanes so the
    # phi store is unmasked; mu/logvar are sliced off after the call.
    out_dim = 2 * z_dim
    out_cols = max(128, ((out_dim + 127) // 128) * 128)
    w2_p = jnp.pad(w2.astype(f32), ((0, 0), (0, out_cols - out_dim))).astype(bf16)
    b2_p = jnp.pad(b2.astype(f32), ((0, 0), (0, out_cols - out_dim)))

    # bf16 activations at the boundary: halves DMA and feeds the MXU at bf16 peak.
    h_input = h_input.astype(bf16)
    h_cond_prior = h_cond_prior.astype(bf16)

    # --- explicit per-generation VMEM model ---
    weight_bytes = 2 * (4 * D * D + 2 * D * hidden + hidden * out_cols)   # bf16 weights
    weight_bytes += 4 * (4 * D + hidden + out_cols)                       # f32 biases
    try:
        vmem_phys = int(pltpu.get_tpu_info().vmem_capacity_bytes)
    except Exception:
        vmem_phys = 64 * 1024 * 1024     # conservative: v7x per-TensorCore VMEM
    vmem_budget = int(0.6 * vmem_phys)   # headroom for compiler scratch / spills

    if batch_block is None:
        # Largest divisor of B that fits the VMEM model; capped at B//2 so the
        # grid has >= 2 steps (both TensorCores busy on 2-TC chips); rows per
        # step soft-capped around 1024 (per-step overhead amortization sweet spot).
        cap = B if B == 1 else B // 2
        batch_block = 1
        for d in range(1, cap + 1):
            if B % d != 0:
                continue
            need = _block_vmem_bytes(d, T, D, num_heads, hidden, out_cols) + weight_bytes
            if need > vmem_budget:
                break
            if d * T <= 1024 or batch_block * T < 128:
                batch_block = d
    assert B % batch_block == 0  # TODO(synk): pad the batch when not divisible.

    est = _block_vmem_bytes(batch_block, T, D, num_heads, hidden, out_cols) + weight_bytes
    vmem_limit = int(min(0.9 * vmem_phys, max(2 * est, 32 * 1024 * 1024)))

    kernel = functools.partial(
        _encoder_head_kernel,
        num_heads=num_heads, head_dim=head_dim, d_model=D,
        bblk=batch_block, seq_len=T)

    # Weights/biases: whole array resident in VMEM, single copy, not pipelined
    # (no double-buffering waste).
    wres = pl.BlockSpec(memory_space=pltpu.MemorySpace.VMEM)

    # TODO(synk): if the activation-block DMA becomes exposed on v6e after the
    # bf16/large-block changes, bump these two specs to pipeline_mode=pl.Buffered(3).
    grid_spec = pltpu.PrefetchScalarGridSpec(
        num_scalar_prefetch=0,
        grid=(B // batch_block,),
        in_specs=[
            pl.BlockSpec((batch_block, T, D), lambda b: (b, 0, 0)),   # h_input
            pl.BlockSpec((batch_block, T, D), lambda b: (b, 0, 0)),   # h_cond_prior
            wres, wres, wres,            # wq, wk, wv
            wres, wres, wres,            # bq, bk, bv
            wres, wres,                  # wo, bo
            wres, wres, wres,            # w1_cp, w1_attn, b1
            wres, wres,                  # w2, b2
        ],
        out_specs=pl.BlockSpec((batch_block, T, out_cols), lambda b: (b, 0, 0)),
    )

    phi = pl.pallas_call(
        kernel,
        out_shape=jax.ShapeDtypeStruct((B, T, out_cols), f32),
        grid_spec=grid_spec,
        compiler_params=pltpu.CompilerParams(
            dimension_semantics=("parallel",),   # batch blocks are independent
            vmem_limit_bytes=vmem_limit),
    )(h_input, h_cond_prior, wq, wk, wv, bq, bk, bv, wo_b, bo_b,
      w1_cp, w1_attn, b1_b, w2_p, b2_p)

    # torch.chunk(phi, 2, -1): slice off the (padded) lane-dense output.
    mu = phi[..., :z_dim]
    logvar = phi[..., z_dim:out_dim]
    return mu, logvar


def _reference_forward(h_input, h_cond_prior, params, *, num_heads, z_dim):
    # Pure-JAX f32 reference of the same math, for verification.
    wqkv, bqkv, wo, bo, w1, b1, w2, b2 = params
    B, T, D = h_input.shape
    dh = D // num_heads
    qkv = h_input @ wqkv + bqkv                                   # [B, T, 3D]
    q, k, v = qkv[..., :D], qkv[..., D:2 * D], qkv[..., 2 * D:]

    def split_heads(x):
        return x.reshape(B, T, num_heads, dh).transpose(0, 2, 1, 3)  # [B, H, T, dh]

    qh, kh, vh = split_heads(q) / math.sqrt(dh), split_heads(k), split_heads(v)
    s = jnp.einsum('bhqd,bhkd->bhqk', qh, kh)
    p = jax.nn.softmax(s, axis=-1)
    attn = jnp.einsum('bhqk,bhkd->bhqd', p, vh).transpose(0, 2, 1, 3).reshape(B, T, D)
    attn = attn @ wo + bo
    hcat = jnp.concatenate([h_cond_prior, attn], axis=-1)
    z1 = jax.nn.relu(hcat @ w1 + b1)
    phi = z1 @ w2 + b2
    return phi[..., :z_dim], phi[..., z_dim:]


if __name__ == "__main__":
    # Small shapes implied by the forward: [B, T, D] sequences.
    B, T, D = 8, 8, 32
    NUM_HEADS, HIDDEN, Z_DIM = 4, 64, 16

    key = jax.random.PRNGKey(0)
    ks = jax.random.split(key, 12)

    h_input = jax.random.normal(ks[0], (B, T, D), dtype=jnp.float32)
    h_cond_prior = jax.random.normal(ks[1], (B, T, D), dtype=jnp.float32)

    # Deterministic synthetic parameters (attention in/out proj + 2-layer MLP).
    wqkv = 0.1 * jax.random.normal(ks[2], (D, 3 * D), dtype=jnp.float32)
    bqkv = 0.1 * jax.random.normal(ks[3], (1, 3 * D), dtype=jnp.float32)
    wo = 0.1 * jax.random.normal(ks[4], (D, D), dtype=jnp.float32)
    bo = 0.1 * jax.random.normal(ks[5], (1, D), dtype=jnp.float32)
    w1 = 0.1 * jax.random.normal(ks[6], (2 * D, HIDDEN), dtype=jnp.float32)
    b1 = 0.1 * jax.random.normal(ks[7], (1, HIDDEN), dtype=jnp.float32)
    w2 = 0.1 * jax.random.normal(ks[8], (HIDDEN, 2 * Z_DIM), dtype=jnp.float32)
    b2 = 0.1 * jax.random.normal(ks[9], (1, 2 * Z_DIM), dtype=jnp.float32)
    params = (wqkv, bqkv, wo, bo, w1, b1, w2, b2)

    mu, logvar = encoder_head_forward(
        h_input, h_cond_prior, params,
        num_heads=NUM_HEADS, z_dim=Z_DIM, hidden=HIDDEN)
    jax.block_until_ready((mu, logvar))

    mu_ref, logvar_ref = _reference_forward(
        h_input, h_cond_prior, params, num_heads=NUM_HEADS, z_dim=Z_DIM)

    assert mu.shape == (B, T, Z_DIM) and logvar.shape == (B, T, Z_DIM)
    # Tolerance accounts for bf16 MXU operands (f32 accumulation) and the EUP
    # approx reciprocal in the softmax normalization.
    assert jnp.allclose(mu, mu_ref, atol=5e-2, rtol=5e-2)
    assert jnp.allclose(logvar, logvar_ref, atol=5e-2, rtol=5e-2)

    print("KERNEL_OK")
</pallas_src>

<mosaic_0001>
module attributes {stable_mosaic.version = 11 : i64} {
  func.func @_encoder_head_kernel(%arg0: i32, %arg1: memref<4x8x32xbf16, #tpu.memory_space<vmem>>, %arg2: memref<4x8x32xbf16, #tpu.memory_space<vmem>>, %arg3: memref<32x32xbf16, #tpu.memory_space<vmem>>, %arg4: memref<32x32xbf16, #tpu.memory_space<vmem>>, %arg5: memref<32x32xbf16, #tpu.memory_space<vmem>>, %arg6: memref<1x32xf32, #tpu.memory_space<vmem>>, %arg7: memref<1x32xf32, #tpu.memory_space<vmem>>, %arg8: memref<1x32xf32, #tpu.memory_space<vmem>>, %arg9: memref<32x32xbf16, #tpu.memory_space<vmem>>, %arg10: memref<1x32xf32, #tpu.memory_space<vmem>>, %arg11: memref<32x64xbf16, #tpu.memory_space<vmem>>, %arg12: memref<32x64xbf16, #tpu.memory_space<vmem>>, %arg13: memref<1x64xf32, #tpu.memory_space<vmem>>, %arg14: memref<64x128xbf16, #tpu.memory_space<vmem>>, %arg15: memref<1x128xf32, #tpu.memory_space<vmem>>, %arg16: memref<4x8x128xf32, #tpu.memory_space<vmem>>) attributes {dimension_semantics = [#tpu.dimension_semantics<parallel>], iteration_bounds = array<i64: 2>, scalar_prefetch = 0 : i64, scratch_operands = 0 : i64, tpu.core_type = #tpu.core_type<tc>, window_params = [{transform_indices = @transform_0, window_bounds = array<i64: 4, 8, 32>}, {transform_indices = @transform_1, window_bounds = array<i64: 4, 8, 32>}, {pipeline_mode = #tpu.pipeline_mode<synchronous>, transform_indices = @transform_2, window_bounds = array<i64: 32, 32>}, {pipeline_mode = #tpu.pipeline_mode<synchronous>, transform_indices = @transform_3, window_bounds = array<i64: 32, 32>}, {pipeline_mode = #tpu.pipeline_mode<synchronous>, transform_indices = @transform_4, window_bounds = array<i64: 32, 32>}, {pipeline_mode = #tpu.pipeline_mode<synchronous>, transform_indices = @transform_5, window_bounds = array<i64: 1, 32>}, {pipeline_mode = #tpu.pipeline_mode<synchronous>, transform_indices = @transform_6, window_bounds = array<i64: 1, 32>}, {pipeline_mode = #tpu.pipeline_mode<synchronous>, transform_indices = @transform_7, window_bounds = array<i64: 1, 32>}, {pipeline_mode = #tpu.pipeline_mode<synchronous>, transform_indices = @transform_8, window_bounds = array<i64: 32, 32>}, {pipeline_mode = #tpu.pipeline_mode<synchronous>, transform_indices = @transform_9, window_bounds = array<i64: 1, 32>}, {pipeline_mode = #tpu.pipeline_mode<synchronous>, transform_indices = @transform_10, window_bounds = array<i64: 32, 64>}, {pipeline_mode = #tpu.pipeline_mode<synchronous>, transform_indices = @transform_11, window_bounds = array<i64: 32, 64>}, {pipeline_mode = #tpu.pipeline_mode<synchronous>, transform_indices = @transform_12, window_bounds = array<i64: 1, 64>}, {pipeline_mode = #tpu.pipeline_mode<synchronous>, transform_indices = @transform_13, window_bounds = array<i64: 64, 128>}, {pipeline_mode = #tpu.pipeline_mode<synchronous>, transform_indices = @transform_14, window_bounds = array<i64: 1, 128>}, {transform_indices = @transform_15, window_bounds = array<i64: 4, 8, 128>}]} {
    %c0 = arith.constant 0 : index
    %c0_0 = arith.constant 0 : index
    %c0_1 = arith.constant 0 : index
    %0 = vector.load %arg1[%c0, %c0_0, %c0_1] : memref<4x8x32xbf16, #tpu.memory_space<vmem>>, vector<4x8x32xbf16>
    %1 = vector.shape_cast %0 : vector<4x8x32xbf16> to vector<32x32xbf16>
    %c0_2 = arith.constant 0 : index
    %c0_3 = arith.constant 0 : index
    %2 = vector.load %arg3[%c0_2, %c0_3] : memref<32x32xbf16, #tpu.memory_space<vmem>>, vector<32x32xbf16>
    %cst = arith.constant dense<0.000000e+00> : vector<32x32xf32>
    %3 = tpu.matmul %1, %2, %cst {dimension_numbers = #tpu.dot_dimension_numbers<[1], [0], [0], [1], [0, 0, 1, 1], [], []>} : vector<32x32xbf16>, vector<32x32xbf16>, vector<32x32xf32> -> vector<32x32xf32>
    %c0_4 = arith.constant 0 : index
    %c0_5 = arith.constant 0 : index
    %4 = vector.load %arg6[%c0_4, %c0_5] : memref<1x32xf32, #tpu.memory_space<vmem>>, vector<1x32xf32>
    %5 = vector.broadcast %4 : vector<1x32xf32> to vector<32x32xf32>
    %6 = arith.addf %3, %5 : vector<32x32xf32>
    %c0_6 = arith.constant 0 : index
    %c0_7 = arith.constant 0 : index
    %7 = vector.load %arg4[%c0_6, %c0_7] : memref<32x32xbf16, #tpu.memory_space<vmem>>, vector<32x32xbf16>
    %cst_8 = arith.constant dense<0.000000e+00> : vector<32x32xf32>
    %8 = tpu.matmul %1, %7, %cst_8 {dimension_numbers = #tpu.dot_dimension_numbers<[1], [0], [0], [1], [0, 0, 1, 1], [], []>} : vector<32x32xbf16>, vector<32x32xbf16>, vector<32x32xf32> -> vector<32x32xf32>
    %c0_9 = arith.constant 0 : index
    %c0_10 = arith.constant 0 : index
    %9 = vector.load %arg7[%c0_9, %c0_10] : memref<1x32xf32, #tpu.memory_space<vmem>>, vector<1x32xf32>
    %10 = vector.broadcast %9 : vector<1x32xf32> to vector<32x32xf32>
    %11 = arith.addf %8, %10 : vector<32x32xf32>
    %c0_11 = arith.constant 0 : index
    %c0_12 = arith.constant 0 : index
    %12 = vector.load %arg5[%c0_11, %c0_12] : memref<32x32xbf16, #tpu.memory_space<vmem>>, vector<32x32xbf16>
    %cst_13 = arith.constant dense<0.000000e+00> : vector<32x32xf32>
    %13 = tpu.matmul %1, %12, %cst_13 {dimension_numbers = #tpu.dot_dimension_numbers<[1], [0], [0], [1], [0, 0, 1, 1], [], []>} : vector<32x32xbf16>, vector<32x32xbf16>, vector<32x32xf32> -> vector<32x32xf32>
    %c0_14 = arith.constant 0 : index
    %c0_15 = arith.constant 0 : index
    %14 = vector.load %arg8[%c0_14, %c0_15] : memref<1x32xf32, #tpu.memory_space<vmem>>, vector<1x32xf32>
    %15 = vector.broadcast %14 : vector<1x32xf32> to vector<32x32xf32>
    %16 = arith.addf %13, %15 : vector<32x32xf32>
    %17 = vector.shape_cast %6 : vector<32x32xf32> to vector<4x8x32xf32>
    %18 = arith.truncf %17 : vector<4x8x32xf32> to vector<4x8x32xbf16>
    %19 = vector.shape_cast %11 : vector<32x32xf32> to vector<4x8x32xf32>
    %20 = arith.truncf %19 : vector<4x8x32xf32> to vector<4x8x32xbf16>
    %21 = vector.shape_cast %16 : vector<32x32xf32> to vector<4x8x32xf32>
    %22 = arith.truncf %21 : vector<4x8x32xf32> to vector<4x8x32xbf16>
    %23 = tpu.iota {dimensions = array<i32: 2>} : vector<1x1x32xi32>
    %c0_i32 = arith.constant 0 : i32
    %24 = vector.broadcast %c0_i32 : i32 to vector<1x1x32xi32>
    %25 = arith.cmpi sge, %23, %24 : vector<1x1x32xi32>
    %c8_i32 = arith.constant 8 : i32
    %26 = vector.broadcast %c8_i32 : i32 to vector<1x1x32xi32>
    %27 = arith.cmpi slt, %23, %26 : vector<1x1x32xi32>
    %28 = arith.andi %25, %27 : vector<1x1x32xi1>
    %c8_i32_16 = arith.constant 8 : i32
    %29 = vector.broadcast %c8_i32_16 : i32 to vector<1x1x32xi32>
    %30 = arith.cmpi sge, %23, %29 : vector<1x1x32xi32>
    %c16_i32 = arith.constant 16 : i32
    %31 = vector.broadcast %c16_i32 : i32 to vector<1x1x32xi32>
    %32 = arith.cmpi slt, %23, %31 : vector<1x1x32xi32>
    %33 = arith.andi %30, %32 : vector<1x1x32xi1>
    %c16_i32_17 = arith.constant 16 : i32
    %34 = vector.broadcast %c16_i32_17 : i32 to vector<1x1x32xi32>
    %35 = arith.cmpi sge, %23, %34 : vector<1x1x32xi32>
    %c24_i32 = arith.constant 24 : i32
    %36 = vector.broadcast %c24_i32 : i32 to vector<1x1x32xi32>
    %37 = arith.cmpi slt, %23, %36 : vector<1x1x32xi32>
    %38 = arith.andi %35, %37 : vector<1x1x32xi1>
    %c24_i32_18 = arith.constant 24 : i32
    %39 = vector.broadcast %c24_i32_18 : i32 to vector<1x1x32xi32>
    %40 = arith.cmpi sge, %23, %39 : vector<1x1x32xi32>
    %c32_i32 = arith.constant 32 : i32
    %41 = vector.broadcast %c32_i32 : i32 to vector<1x1x32xi32>
    %42 = arith.cmpi slt, %23, %41 : vector<1x1x32xi32>
    %43 = arith.andi %40, %42 : vector<1x1x32xi1>
    %cst_19 = arith.constant 0.000000e+00 : bf16
    %44 = vector.broadcast %cst_19 : bf16 to vector<4x8x32xbf16>
    %45 = vector.shape_cast %28 : vector<1x1x32xi1> to vector<1x1x32xi1>
    %46 = vector.broadcast %45 : vector<1x1x32xi1> to vector<4x8x32xi1>
    %47 = arith.select %46, %18, %44 : vector<4x8x32xi1>, vector<4x8x32xbf16>
    %48 = vector.shape_cast %33 : vector<1x1x32xi1> to vector<1x1x32xi1>
    %49 = vector.broadcast %48 : vector<1x1x32xi1> to vector<4x8x32xi1>
    %50 = arith.select %49, %18, %44 : vector<4x8x32xi1>, vector<4x8x32xbf16>
    %51 = vector.shape_cast %38 : vector<1x1x32xi1> to vector<1x1x32xi1>
    %52 = vector.broadcast %51 : vector<1x1x32xi1> to vector<4x8x32xi1>
    %53 = arith.select %52, %18, %44 : vector<4x8x32xi1>, vector<4x8x32xbf16>
    %54 = vector.shape_cast %43 : vector<1x1x32xi1> to vector<1x1x32xi1>
    %55 = vector.broadcast %54 : vector<1x1x32xi1> to vector<4x8x32xi1>
    %56 = arith.select %55, %18, %44 : vector<4x8x32xi1>, vector<4x8x32xbf16>
    %57 = tpu.concatenate %47, %50, %53, %56 in 0 : vector<4x8x32xbf16>, vector<4x8x32xbf16>, vector<4x8x32xbf16>, vector<4x8x32xbf16> -> vector<16x8x32xbf16>
    %58 = tpu.concatenate %20, %20, %20, %20 in 0 : vector<4x8x32xbf16>, vector<4x8x32xbf16>, vector<4x8x32xbf16>, vector<4x8x32xbf16> -> vector<16x8x32xbf16>
    %59 = tpu.concatenate %22, %22, %22, %22 in 0 : vector<4x8x32xbf16>, vector<4x8x32xbf16>, vector<4x8x32xbf16>, vector<4x8x32xbf16> -> vector<16x8x32xbf16>
    "tpu.trace_start"() <{level = 10 : i32, message = "zqd,zkd->zqk"}> : () -> ()
    %cst_20 = arith.constant dense<0.000000e+00> : vector<16x8x8xf32>
    %60 = tpu.matmul %57, %58, %cst_20 {dimension_numbers = #tpu.dot_dimension_numbers<[2], [2], [1], [1], [0, 0, 0, 1, 1, 1], [0], [0]>} : vector<16x8x32xbf16>, vector<16x8x32xbf16>, vector<16x8x8xf32> -> vector<16x8x8xf32>
    "tpu.trace_stop"() : () -> ()
    %cst_21 = arith.constant dense<0xFF800000> : vector<16x8xf32>
    %61 = vector.multi_reduction <maximumf>, %60, %cst_21 [2] : vector<16x8x8xf32> to vector<16x8xf32>
    %62 = vector.shape_cast %61 : vector<16x8xf32> to vector<16x8x1xf32>
    %63 = vector.broadcast %62 : vector<16x8x1xf32> to vector<16x8x8xf32>
    %64 = arith.subf %60, %63 : vector<16x8x8xf32>
    %65 = math.exp %64 : vector<16x8x8xf32>
    %cst_22 = arith.constant dense<0.000000e+00> : vector<16x8xf32>
    %66 = vector.multi_reduction <add>, %65, %cst_22 [2] : vector<16x8x8xf32> to vector<16x8xf32>
    %67 = vector.shape_cast %66 : vector<16x8xf32> to vector<16x8x1xf32>
    %68 = tpu.reciprocal %67 {approx = true} : vector<16x8x1xf32> -> vector<16x8x1xf32>
    %69 = vector.broadcast %68 : vector<16x8x1xf32> to vector<16x8x8xf32>
    %70 = arith.mulf %65, %69 : vector<16x8x8xf32>
    %71 = arith.truncf %70 : vector<16x8x8xf32> to vector<16x8x8xbf16>
    "tpu.trace_start"() <{level = 10 : i32, message = "zqk,zkd->zqd"}> : () -> ()
    %cst_23 = arith.constant dense<0.000000e+00> : vector<16x8x32xf32>
    %72 = tpu.matmul %71, %59, %cst_23 {dimension_numbers = #tpu.dot_dimension_numbers<[2], [1], [1], [2], [0, 0, 0, 1, 1, 2], [0], [0]>} : vector<16x8x8xbf16>, vector<16x8x32xbf16>, vector<16x8x32xf32> -> vector<16x8x32xf32>
    %cst_24 = arith.constant 0.000000e+00 : f32
    "tpu.trace_stop"() : () -> ()
    %73 = vector.broadcast %cst_24 : f32 to vector<4x8x32xf32>
    %74 = vector.extract_strided_slice %72 {offsets = [0, 0, 0], sizes = [4, 8, 32], strides = [1, 1, 1]} : vector<16x8x32xf32> to vector<4x8x32xf32>
    %cst_25 = arith.constant 0.000000e+00 : f32
    %75 = vector.shape_cast %28 : vector<1x1x32xi1> to vector<1x1x32xi1>
    %76 = vector.broadcast %75 : vector<1x1x32xi1> to vector<4x8x32xi1>
    %77 = vector.broadcast %cst_25 : f32 to vector<4x8x32xf32>
    %78 = arith.select %76, %74, %77 : vector<4x8x32xi1>, vector<4x8x32xf32>
    %79 = arith.addf %73, %78 : vector<4x8x32xf32>
    %80 = vector.extract_strided_slice %72 {offsets = [4, 0, 0], sizes = [4, 8, 32], strides = [1, 1, 1]} : vector<16x8x32xf32> to vector<4x8x32xf32>
    %cst_26 = arith.constant 0.000000e+00 : f32
    %81 = vector.shape_cast %33 : vector<1x1x32xi1> to vector<1x1x32xi1>
    %82 = vector.broadcast %81 : vector<1x1x32xi1> to vector<4x8x32xi1>
    %83 = vector.broadcast %cst_26 : f32 to vector<4x8x32xf32>
    %84 = arith.select %82, %80, %83 : vector<4x8x32xi1>, vector<4x8x32xf32>
    %85 = arith.addf %79, %84 : vector<4x8x32xf32>
    %86 = vector.extract_strided_slice %72 {offsets = [8, 0, 0], sizes = [4, 8, 32], strides = [1, 1, 1]} : vector<16x8x32xf32> to vector<4x8x32xf32>
    %cst_27 = arith.constant 0.000000e+00 : f32
    %87 = vector.shape_cast %38 : vector<1x1x32xi1> to vector<1x1x32xi1>
    %88 = vector.broadcast %87 : vector<1x1x32xi1> to vector<4x8x32xi1>
    %89 = vector.broadcast %cst_27 : f32 to vector<4x8x32xf32>
    %90 = arith.select %88, %86, %89 : vector<4x8x32xi1>, vector<4x8x32xf32>
    %91 = arith.addf %85, %90 : vector<4x8x32xf32>
    %92 = vector.extract_strided_slice %72 {offsets = [12, 0, 0], sizes = [4, 8, 32], strides = [1, 1, 1]} : vector<16x8x32xf32> to vector<4x8x32xf32>
    %cst_28 = arith.constant 0.000000e+00 : f32
    %93 = vector.shape_cast %43 : vector<1x1x32xi1> to vector<1x1x32xi1>
    %94 = vector.broadcast %93 : vector<1x1x32xi1> to vector<4x8x32xi1>
    %95 = vector.broadcast %cst_28 : f32 to vector<4x8x32xf32>
    %96 = arith.select %94, %92, %95 : vector<4x8x32xi1>, vector<4x8x32xf32>
    %97 = arith.addf %91, %96 : vector<4x8x32xf32>
    %98 = vector.shape_cast %97 : vector<4x8x32xf32> to vector<32x32xf32>
    %99 = arith.truncf %98 : vector<32x32xf32> to vector<32x32xbf16>
    %c0_29 = arith.constant 0 : index
    %c0_30 = arith.constant 0 : index
    %100 = vector.load %arg9[%c0_29, %c0_30] : memref<32x32xbf16, #tpu.memory_space<vmem>>, vector<32x32xbf16>
    %cst_31 = arith.constant dense<0.000000e+00> : vector<32x32xf32>
    %101 = tpu.matmul %99, %100, %cst_31 {dimension_numbers = #tpu.dot_dimension_numbers<[1], [0], [0], [1], [0, 0, 1, 1], [], []>} : vector<32x32xbf16>, vector<32x32xbf16>, vector<32x32xf32> -> vector<32x32xf32>
    %c0_32 = arith.constant 0 : index
    %c0_33 = arith.constant 0 : index
    %102 = vector.load %arg10[%c0_32, %c0_33] : memref<1x32xf32, #tpu.memory_space<vmem>>, vector<1x32xf32>
    %103 = vector.broadcast %102 : vector<1x32xf32> to vector<32x32xf32>
    %104 = arith.addf %101, %103 : vector<32x32xf32>
    %c0_34 = arith.constant 0 : index
    %c0_35 = arith.constant 0 : index
    %c0_36 = arith.constant 0 : index
    %105 = vector.load %arg2[%c0_34, %c0_35, %c0_36] : memref<4x8x32xbf16, #tpu.memory_space<vmem>>, vector<4x8x32xbf16>
    %106 = vector.shape_cast %105 : vector<4x8x32xbf16> to vector<32x32xbf16>
    %c0_37 = arith.constant 0 : index
    %c0_38 = arith.constant 0 : index
    %107 = vector.load %arg11[%c0_37, %c0_38] : memref<32x64xbf16, #tpu.memory_space<vmem>>, vector<32x64xbf16>
    %cst_39 = arith.constant dense<0.000000e+00> : vector<32x64xf32>
    %108 = tpu.matmul %106, %107, %cst_39 {dimension_numbers = #tpu.dot_dimension_numbers<[1], [0], [0], [1], [0, 0, 1, 1], [], []>} : vector<32x32xbf16>, vector<32x64xbf16>, vector<32x64xf32> -> vector<32x64xf32>
    %109 = arith.truncf %104 : vector<32x32xf32> to vector<32x32xbf16>
    %c0_40 = arith.constant 0 : index
    %c0_41 = arith.constant 0 : index
    %110 = vector.load %arg12[%c0_40, %c0_41] : memref<32x64xbf16, #tpu.memory_space<vmem>>, vector<32x64xbf16>
    %cst_42 = arith.constant dense<0.000000e+00> : vector<32x64xf32>
    %111 = tpu.matmul %109, %110, %cst_42 {dimension_numbers = #tpu.dot_dimension_numbers<[1], [0], [0], [1], [0, 0, 1, 1], [], []>} : vector<32x32xbf16>, vector<32x64xbf16>, vector<32x64xf32> -> vector<32x64xf32>
    %112 = arith.addf %108, %111 : vector<32x64xf32>
    %c0_43 = arith.constant 0 : index
    %c0_44 = arith.constant 0 : index
    %113 = vector.load %arg13[%c0_43, %c0_44] : memref<1x64xf32, #tpu.memory_space<vmem>>, vector<1x64xf32>
    %114 = vector.broadcast %113 : vector<1x64xf32> to vector<32x64xf32>
    %115 = arith.addf %112, %114 : vector<32x64xf32>
    %cst_45 = arith.constant 0.000000e+00 : f32
    %116 = vector.broadcast %cst_45 : f32 to vector<32x64xf32>
    %117 = arith.maximumf %115, %116 : vector<32x64xf32>
    %118 = arith.truncf %117 : vector<32x64xf32> to vector<32x64xbf16>
    %c0_46 = arith.constant 0 : index
    %c0_47 = arith.constant 0 : index
    %119 = vector.load %arg14[%c0_46, %c0_47] : memref<64x128xbf16, #tpu.memory_space<vmem>>, vector<64x128xbf16>
    %cst_48 = arith.constant dense<0.000000e+00> : vector<32x128xf32>
    %120 = tpu.matmul %118, %119, %cst_48 {dimension_numbers = #tpu.dot_dimension_numbers<[1], [0], [0], [1], [0, 0, 1, 1], [], []>} : vector<32x64xbf16>, vector<64x128xbf16>, vector<32x128xf32> -> vector<32x128xf32>
    %c0_49 = arith.constant 0 : index
    %c0_50 = arith.constant 0 : index
    %121 = vector.load %arg15[%c0_49, %c0_50] : memref<1x128xf32, #tpu.memory_space<vmem>>, vector<1x128xf32>
    %122 = vector.broadcast %121 : vector<1x128xf32> to vector<32x128xf32>
    %123 = arith.addf %120, %122 : vector<32x128xf32>
    %124 = vector.shape_cast %123 : vector<32x128xf32> to vector<4x8x128xf32>
    %c0_51 = arith.constant 0 : index
    %c0_52 = arith.constant 0 : index
    %c0_53 = arith.constant 0 : index
    %125 = vector.load %arg16[%c0_51, %c0_52, %c0_53] : memref<4x8x128xf32, #tpu.memory_space<vmem>>, vector<4x8x128xf32>
    tpu.vector_store %arg16[%c0_51, %c0_52, %c0_53], %124 {strides = array<i32>} : memref<4x8x128xf32, #tpu.memory_space<vmem>>, vector<4x8x128xf32>,
    return
  }
  func.func @transform_0(%arg0: i32) -> (i32, i32, i32) {
    %c0_i32 = arith.constant 0 : i32
    %c0_i32_0 = arith.constant 0 : i32
    %c0_i32_1 = arith.constant 0 : i32
    return %arg0, %c0_i32, %c0_i32_0 : i32, i32, i32
  }
  func.func @transform_1(%arg0: i32) -> (i32, i32, i32) {
    %c0_i32 = arith.constant 0 : i32
    %c0_i32_0 = arith.constant 0 : i32
    %c0_i32_1 = arith.constant 0 : i32
    return %arg0, %c0_i32, %c0_i32_0 : i32, i32, i32
  }
  func.func @transform_2(%arg0: i32) -> (i32, i32) {
    %c0_i32 = arith.constant 0 : i32
    %c0_i32_0 = arith.constant 0 : i32
    %c0_i32_1 = arith.constant 0 : i32
    return %c0_i32, %c0_i32_0 : i32, i32
  }
  func.func @transform_3(%arg0: i32) -> (i32, i32) {
    %c0_i32 = arith.constant 0 : i32
    %c0_i32_0 = arith.constant 0 : i32
    %c0_i32_1 = arith.constant 0 : i32
    return %c0_i32, %c0_i32_0 : i32, i32
  }
  func.func @transform_4(%arg0: i32) -> (i32, i32) {
    %c0_i32 = arith.constant 0 : i32
    %c0_i32_0 = arith.constant 0 : i32
    %c0_i32_1 = arith.constant 0 : i32
    return %c0_i32, %c0_i32_0 : i32, i32
  }
  func.func @transform_5(%arg0: i32) -> (i32, i32) {
    %c0_i32 = arith.constant 0 : i32
    %c0_i32_0 = arith.constant 0 : i32
    %c0_i32_1 = arith.constant 0 : i32
    return %c0_i32, %c0_i32_0 : i32, i32
  }
  func.func @transform_6(%arg0: i32) -> (i32, i32) {
    %c0_i32 = arith.constant 0 : i32
    %c0_i32_0 = arith.constant 0 : i32
    %c0_i32_1 = arith.constant 0 : i32
    return %c0_i32, %c0_i32_0 : i32, i32
  }
  func.func @transform_7(%arg0: i32) -> (i32, i32) {
    %c0_i32 = arith.constant 0 : i32
    %c0_i32_0 = arith.constant 0 : i32
    %c0_i32_1 = arith.constant 0 : i32
    return %c0_i32, %c0_i32_0 : i32, i32
  }
  func.func @transform_8(%arg0: i32) -> (i32, i32) {
    %c0_i32 = arith.constant 0 : i32
    %c0_i32_0 = arith.constant 0 : i32
    %c0_i32_1 = arith.constant 0 : i32
    return %c0_i32, %c0_i32_0 : i32, i32
  }
  func.func @transform_9(%arg0: i32) -> (i32, i32) {
    %c0_i32 = arith.constant 0 : i32
    %c0_i32_0 = arith.constant 0 : i32
    %c0_i32_1 = arith.constant 0 : i32
    return %c0_i32, %c0_i32_0 : i32, i32
  }
  func.func @transform_10(%arg0: i32) -> (i32, i32) {
    %c0_i32 = arith.constant 0 : i32
    %c0_i32_0 = arith.constant 0 : i32
    %c0_i32_1 = arith.constant 0 : i32
    return %c0_i32, %c0_i32_0 : i32, i32
  }
  func.func @transform_11(%arg0: i32) -> (i32, i32) {
    %c0_i32 = arith.constant 0 : i32
    %c0_i32_0 = arith.constant 0 : i32
    %c0_i32_1 = arith.constant 0 : i32
    return %c0_i32, %c0_i32_0 : i32, i32
  }
  func.func @transform_12(%arg0: i32) -> (i32, i32) {
    %c0_i32 = arith.constant 0 : i32
    %c0_i32_0 = arith.constant 0 : i32
    %c0_i32_1 = arith.constant 0 : i32
    return %c0_i32, %c0_i32_0 : i32, i32
  }
  func.func @transform_13(%arg0: i32) -> (i32, i32) {
    %c0_i32 = arith.constant 0 : i32
    %c0_i32_0 = arith.constant 0 : i32
    %c0_i32_1 = arith.constant 0 : i32
    return %c0_i32, %c0_i32_0 : i32, i32
  }
  func.func @transform_14(%arg0: i32) -> (i32, i32) {
    %c0_i32 = arith.constant 0 : i32
    %c0_i32_0 = arith.constant 0 : i32
    %c0_i32_1 = arith.constant 0 : i32
    return %c0_i32, %c0_i32_0 : i32, i32
  }
  func.func @transform_15(%arg0: i32) -> (i32, i32, i32) {
    %c0_i32 = arith.constant 0 : i32
    %c0_i32_0 = arith.constant 0 : i32
    %c0_i32_1 = arith.constant 0 : i32
    return %arg0, %c0_i32, %c0_i32_0 : i32, i32, i32
  }
}

</mosaic_0001>

<llo_original>
// kernel: tpu_custom_call.1
$region0: #{tpu_custom_call.1}
  #allocation0 [shape = 'u32[]', space=smem, size = 0x4, offset = 0x4, fixed_abs, tag = 'smem constant byte address 0x4 - core index']
  #allocation1 [shape = 'u32[144,128]{1,0:T(1,128)}', space=vmem, size = 0x12000, scoped, tag = 'internal scratch']
  %s0 = inlined_call_operand.hbm [shape: bf16[8,8,32], index: 0, kind: input, shape index: {}]
  %s1 = inlined_call_operand.hbm [shape: bf16[8,8,32], index: 1, kind: input, shape index: {}]
  %s2 = inlined_call_operand.hbm [shape: bf16[32,32], index: 2, kind: input, shape index: {}]
  %s3 = inlined_call_operand.hbm [shape: bf16[32,32], index: 3, kind: input, shape index: {}]
  %s4 = inlined_call_operand.hbm [shape: bf16[32,32], index: 4, kind: input, shape index: {}]
  %s5 = inlined_call_operand.vmem [shape: f32[1,32], index: 5, kind: input, shape index: {}]
  %s6 = inlined_call_operand.vmem [shape: f32[1,32], index: 6, kind: input, shape index: {}]
  %s7 = inlined_call_operand.hbm [shape: f32[1,32], index: 7, kind: input, shape index: {}]
  %s8 = inlined_call_operand.hbm [shape: bf16[32,32], index: 8, kind: input, shape index: {}]
  %s9 = inlined_call_operand.hbm [shape: f32[1,32], index: 9, kind: input, shape index: {}]
  %s10 = inlined_call_operand.vmem [shape: bf16[32,64], index: 10, kind: input, shape index: {}]
  %s11 = inlined_call_operand.hbm [shape: bf16[32,64], index: 11, kind: input, shape index: {}]
  %s12 = inlined_call_operand.vmem [shape: f32[1,64], index: 12, kind: input, shape index: {}]
  %s13 = inlined_call_operand.hbm [shape: bf16[64,128], index: 13, kind: input, shape index: {}]
  %s14 = inlined_call_operand.vmem [shape: f32[1,128], index: 14, kind: input, shape index: {}]
  %s15 = inlined_call_operand.hbm [shape: f32[8,8,128], index: 15, kind: output, shape index: {}]
  %s16 = sld [smem:[#allocation0]]
  $region133: #{tpu_custom_call.1} parent=0
    _
  %s18 = ssub.s32 1, %s16
  %s19 = scalar_select 0, %s18, %s16
  $region1: #{tpu_custom_call.1} parent=0
    #allocation2 [shape = 'u8[16384]{0}', space=vmem, size = 0x4000, scoped, tag = 'input window, operand 0']
    #allocation3 [shape = 's32[2]{0}', space=sflag, size = 0x8, scoped, tag = 'scoped memory for tpu_custom_call.1']
    #allocation4 [shape = 's32[2]{0}', space=sflag, size = 0x8, scoped, tag = 'scoped memory for tpu_custom_call.1']
    #allocation5 [shape = 'u8[16384]{0}', space=vmem, size = 0x4000, scoped, tag = 'input window, operand 1']
    #allocation6 [shape = 's32[2]{0}', space=sflag, size = 0x8, scoped, tag = 'scoped memory for tpu_custom_call.1']
    #allocation7 [shape = 'u8[8192]{0}', space=vmem, size = 0x2000, scoped, tag = 'input window, operand 2, single buffered']
    #allocation8 [shape = 'u8[8192]{0}', space=vmem, size = 0x2000, scoped, tag = 'input window, operand 3, single buffered']
    #allocation9 [shape = 's32[1]{0}', space=sflag, size = 0x4, scoped, tag = 'scoped memory for tpu_custom_call.1']
    #allocation10 [shape = 'u8[8192]{0}', space=vmem, size = 0x2000, scoped, tag = 'input window, operand 4, single buffered']
    #allocation11 [shape = 'u8[512]{0}', space=vmem, size = 0x400, scoped, tag = 'input window, operand 7, single buffered']
    #allocation12 [shape = 's32[1]{0}', space=sflag, size = 0x4, scoped, tag = 'scoped memory for tpu_custom_call.1']
    #allocation13 [shape = 'u8[8192]{0}', space=vmem, size = 0x2000, scoped, tag = 'input window, operand 8, single buffered']
    #allocation14 [shape = 'u8[512]{0}', space=vmem, size = 0x400, scoped, tag = 'input window, operand 9, single buffered']
    #allocation15 [shape = 's32[1]{0}', space=sflag, size = 0x4, scoped, tag = 'scoped memory for tpu_custom_call.1']
    #allocation16 [shape = 'u8[8192]{0}', space=vmem, size = 0x2000, scoped, tag = 'input window, operand 11, single buffered']
    #allocation17 [shape = 'u8[16384]{0}', space=vmem, size = 0x4000, scoped, tag = 'input window, operand 13, single buffered']
    #allocation18 [shape = 's32[1]{0}', space=sflag, size = 0x4, scoped, tag = 'scoped memory for tpu_custom_call.1']
    #allocation19 [shape = 'u8[32768]{0}', space=vmem, size = 0x8000, scoped, tag = 'output window, operand 0']
    %20 = vsyncpa [#allocation3], 0
    %s21 = scalar_lea.sflag [#allocation3], 1
    %22 = vsyncpa %s21, 0
    %23 = vsyncpa [#allocation6], 0
    %s24 = scalar_lea.sflag [#allocation6], 1
    %25 = vsyncpa %s24, 0
    %26 = vsyncpa [#allocation9], 0
    %27 = vsyncpa [#allocation12], 0
    %28 = vsyncpa [#allocation15], 0
    %29 = vsyncpa [#allocation18], 0
    %30 = vsyncpa [#allocation4], 0
    %s31 = scalar_lea.sflag [#allocation4], 1
    %32 = vsyncpa %s31, 0
    loop: start=0, step=1, limit=4
    $region2: #{tpu_custom_call.1} parent=1 // loop_pre_header
      _
    $region3: #{tpu_custom_call.1} parent=1 // loop_header
      %s34 = sphi 0, %s38
      %p35 = scmp.ge.s32.totalorder %s34, 4
      %s44 = sphi 0, %s46
      %s47 = sphi 0, %s44
      %s48 = sphi 0, %s47
      %s64 = sphi 0, %s48
      %s70 = sphi 0, %s72
      %s73 = sphi 0, %s70
      %s74 = sphi 0, %s73
      %s90 = sphi 0, %s74
      %s94 = sphi 0, %s94
      %s96 = sphi 0, %s94
      %s97 = sphi 0, %s96
      %s111 = sphi 0, %s97
      %s115 = sphi 0, %s115
      %s117 = sphi 0, %s115
      %s118 = sphi 0, %s117
      %s132 = sphi 0, %s118
      %s136 = sphi 0, %s136
      %s138 = sphi 0, %s136
      %s139 = sphi 0, %s138
      %s153 = sphi 0, %s139
      %s157 = sphi 0, %s157
      %s159 = sphi 0, %s157
      %s160 = sphi 0, %s159
      %s174 = sphi 0, %s160
      %s178 = sphi 0, %s178
      %s180 = sphi 0, %s178
      %s181 = sphi 0, %s180
      %s195 = sphi 0, %s181
      %s199 = sphi 0, %s199
      %s201 = sphi 0, %s199
      %s202 = sphi 0, %s201
      %s216 = sphi 0, %s202
      %s220 = sphi 0, %s220
      %s222 = sphi 0, %s220
      %s223 = sphi 0, %s222
      %s237 = sphi 0, %s223
      %s241 = sphi 0, %s241
      %s243 = sphi 0, %s241
      %s244 = sphi 0, %s243
      %s258 = sphi 0, %s244
      %s262 = sphi 0, %s262
      %s264 = sphi 0, %s262
      %s265 = sphi 0, %s264
      %s279 = sphi 0, %s265
      %s283 = sphi 0, %s283
      %s285 = sphi 0, %s283
      %s286 = sphi 0, %s285
      %s300 = sphi 0, %s286
      %s304 = sphi 0, %s304
      %s306 = sphi 0, %s304
      %s307 = sphi 0, %s306
      %s321 = sphi 0, %s307
      %s325 = sphi 0, %s325
      %s327 = sphi 0, %s325
      %s328 = sphi 0, %s327
      %s342 = sphi 0, %s328
      %s346 = sphi 0, %s346
      %s348 = sphi 0, %s346
      %s349 = sphi 0, %s348
      %s363 = sphi 0, %s349
      %s369 = sphi 0, %s371
      %s372 = sphi 0, %s369
      %s373 = sphi 0, %s372
      %s389 = sphi 0, %s373
    $region4: #{tpu_custom_call.1} parent=1 // loop_header_branch
      %37 = sbr.rel (%p35) target = $region8
    $region5: #{tpu_custom_call.1} parent=1 // loop_body
      %s39 = ssub.s32 %s34, 1
      %s40 = ssub.s32 %s34, 2
      %s41 = sadd.s32 %s34, 1
      %s42 = ssub.s32 %s34, %s41
      %p43 = scmp.eq.s32.totalorder %s42, 0
      %s45 = sadd.s32 %s44, 1
      %s46 = scalar_select %p43, %s44, %s45
      %p49 = pneg %p43
      %p50 = scmp.eq.s32.totalorder %s34, 1
      %p51 = por %p49, %p50
      %p52 = scmp.ne.s32.totalorder %s44, %s47
      %p53 = scmp.eq.s32.totalorder %s34, 0
      %p54 = por %p52, %p53
      %p55 = scmp.ne.s32.totalorder %s44, %s47
      %p56 = scmp.eq.s32.totalorder %s39, 1
      %p57 = por %p55, %p56
      %p58 = scmp.ne.s32.totalorder %s47, %s48
      %p59 = scmp.eq.s32.totalorder %s39, 0
      %p60 = por %p58, %p59
      %p61 = scmp.ne.s32.totalorder %s47, %s48
      %p62 = scmp.eq.s32.totalorder %s40, 1
      %p63 = por %p61, %p62
      %p65 = scmp.ne.s32.totalorder %s48, %s64
      %p66 = scmp.eq.s32.totalorder %s40, 0
      %p67 = por %p65, %p66
      %s68 = ssub.s32 %s34, %s41
      %p69 = scmp.eq.s32.totalorder %s68, 0
      %s71 = sadd.s32 %s70, 1
      %s72 = scalar_select %p69, %s70, %s71
      %p75 = pneg %p69
      %p76 = scmp.eq.s32.totalorder %s34, 1
      %p77 = por %p75, %p76
      %p78 = scmp.ne.s32.totalorder %s70, %s73
      %p79 = scmp.eq.s32.totalorder %s34, 0
      %p80 = por %p78, %p79
      %p81 = scmp.ne.s32.totalorder %s70, %s73
      %p82 = scmp.eq.s32.totalorder %s39, 1
      %p83 = por %p81, %p82
      %p84 = scmp.ne.s32.totalorder %s73, %s74
      %p85 = scmp.eq.s32.totalorder %s39, 0
      %p86 = por %p84, %p85
      %p87 = scmp.ne.s32.totalorder %s73, %s74
      %p88 = scmp.eq.s32.totalorder %s40, 1
      %p89 = por %p87, %p88
      %p91 = scmp.ne.s32.totalorder %s74, %s90
      %p92 = scmp.eq.s32.totalorder %s40, 0
      %p93 = por %p91, %p92
      %s95 = sadd.s32 %s94, 1
      %p98 = scmp.eq.s32.totalorder %s34, 1
      %p99 = scmp.ne.s32.totalorder %s94, %s96
      %p100 = scmp.eq.s32.totalorder %s34, 0
      %p101 = por %p99, %p100
      %p102 = scmp.ne.s32.totalorder %s94, %s96
      %p103 = scmp.eq.s32.totalorder %s39, 1
      %p104 = por %p102, %p103
      %p105 = scmp.ne.s32.totalorder %s96, %s97
      %p106 = scmp.eq.s32.totalorder %s39, 0
      %p107 = por %p105, %p106
      %p108 = scmp.ne.s32.totalorder %s96, %s97
      %p109 = scmp.eq.s32.totalorder %s40, 1
      %p110 = por %p108, %p109
      %p112 = scmp.ne.s32.totalorder %s97, %s111
      %p113 = scmp.eq.s32.totalorder %s40, 0
      %p114 = por %p112, %p113
      %s116 = sadd.s32 %s115, 1
      %p119 = scmp.eq.s32.totalorder %s34, 1
      %p120 = scmp.ne.s32.totalorder %s115, %s117
      %p121 = scmp.eq.s32.totalorder %s34, 0
      %p122 = por %p120, %p121
      %p123 = scmp.ne.s32.totalorder %s115, %s117
      %p124 = scmp.eq.s32.totalorder %s39, 1
      %p125 = por %p123, %p124
      %p126 = scmp.ne.s32.totalorder %s117, %s118
      %p127 = scmp.eq.s32.totalorder %s39, 0
      %p128 = por %p126, %p127
      %p129 = scmp.ne.s32.totalorder %s117, %s118
      %p130 = scmp.eq.s32.totalorder %s40, 1
      %p131 = por %p129, %p130
      %p133 = scmp.ne.s32.totalorder %s118, %s132
      %p134 = scmp.eq.s32.totalorder %s40, 0
      %p135 = por %p133, %p134
      %s137 = sadd.s32 %s136, 1
      %p140 = scmp.eq.s32.totalorder %s34, 1
      %p141 = scmp.ne.s32.totalorder %s136, %s138
      %p142 = scmp.eq.s32.totalorder %s34, 0
      %p143 = por %p141, %p142
      %p144 = scmp.ne.s32.totalorder %s136, %s138
      %p145 = scmp.eq.s32.totalorder %s39, 1
      %p146 = por %p144, %p145
      %p147 = scmp.ne.s32.totalorder %s138, %s139
      %p148 = scmp.eq.s32.totalorder %s39, 0
      %p149 = por %p147, %p148
      %p150 = scmp.ne.s32.totalorder %s138, %s139
      %p151 = scmp.eq.s32.totalorder %s40, 1
      %p152 = por %p150, %p151
      %p154 = scmp.ne.s32.totalorder %s139, %s153
      %p155 = scmp.eq.s32.totalorder %s40, 0
      %p156 = por %p154, %p155
      %s158 = sadd.s32 %s157, 1
      %p161 = scmp.eq.s32.totalorder %s34, 1
      %p162 = scmp.ne.s32.totalorder %s157, %s159
      %p163 = scmp.eq.s32.totalorder %s34, 0
      %p164 = por %p162, %p163
      %p165 = scmp.ne.s32.totalorder %s157, %s159
      %p166 = scmp.eq.s32.totalorder %s39, 1
      %p167 = por %p165, %p166
      %p168 = scmp.ne.s32.totalorder %s159, %s160
      %p169 = scmp.eq.s32.totalorder %s39, 0
      %p170 = por %p168, %p169
      %p171 = scmp.ne.s32.totalorder %s159, %s160
      %p172 = scmp.eq.s32.totalorder %s40, 1
      %p173 = por %p171, %p172
      %p175 = scmp.ne.s32.totalorder %s160, %s174
      %p176 = scmp.eq.s32.totalorder %s40, 0
      %p177 = por %p175, %p176
      %s179 = sadd.s32 %s178, 1
      %p182 = scmp.eq.s32.totalorder %s34, 1
      %p183 = scmp.ne.s32.totalorder %s178, %s180
      %p184 = scmp.eq.s32.totalorder %s34, 0
      %p185 = por %p183, %p184
      %p186 = scmp.ne.s32.totalorder %s178, %s180
      %p187 = scmp.eq.s32.totalorder %s39, 1
      %p188 = por %p186, %p187
      %p189 = scmp.ne.s32.totalorder %s180, %s181
      %p190 = scmp.eq.s32.totalorder %s39, 0
      %p191 = por %p189, %p190
      %p192 = scmp.ne.s32.totalorder %s180, %s181
      %p193 = scmp.eq.s32.totalorder %s40, 1
      %p194 = por %p192, %p193
      %p196 = scmp.ne.s32.totalorder %s181, %s195
      %p197 = scmp.eq.s32.totalorder %s40, 0
      %p198 = por %p196, %p197
      %s200 = sadd.s32 %s199, 1
      %p203 = scmp.eq.s32.totalorder %s34, 1
      %p204 = scmp.ne.s32.totalorder %s199, %s201
      %p205 = scmp.eq.s32.totalorder %s34, 0
      %p206 = por %p204, %p205
      %p207 = scmp.ne.s32.totalorder %s199, %s201
      %p208 = scmp.eq.s32.totalorder %s39, 1
      %p209 = por %p207, %p208
      %p210 = scmp.ne.s32.totalorder %s201, %s202
      %p211 = scmp.eq.s32.totalorder %s39, 0
      %p212 = por %p210, %p211
      %p213 = scmp.ne.s32.totalorder %s201, %s202
      %p214 = scmp.eq.s32.totalorder %s40, 1
      %p215 = por %p213, %p214
      %p217 = scmp.ne.s32.totalorder %s202, %s216
      %p218 = scmp.eq.s32.totalorder %s40, 0
      %p219 = por %p217, %p218
      %s221 = sadd.s32 %s220, 1
      %p224 = scmp.eq.s32.totalorder %s34, 1
      %p225 = scmp.ne.s32.totalorder %s220, %s222
      %p226 = scmp.eq.s32.totalorder %s34, 0
      %p227 = por %p225, %p226
      %p228 = scmp.ne.s32.totalorder %s220, %s222
      %p229 = scmp.eq.s32.totalorder %s39, 1
      %p230 = por %p228, %p229
      %p231 = scmp.ne.s32.totalorder %s222, %s223
      %p232 = scmp.eq.s32.totalorder %s39, 0
      %p233 = por %p231, %p232
      %p234 = scmp.ne.s32.totalorder %s222, %s223
      %p235 = scmp.eq.s32.totalorder %s40, 1
      %p236 = por %p234, %p235
      %p238 = scmp.ne.s32.totalorder %s223, %s237
      %p239 = scmp.eq.s32.totalorder %s40, 0
      %p240 = por %p238, %p239
      %s242 = sadd.s32 %s241, 1
      %p245 = scmp.eq.s32.totalorder %s34, 1
      %p246 = scmp.ne.s32.totalorder %s241, %s243
      %p247 = scmp.eq.s32.totalorder %s34, 0
      %p248 = por %p246, %p247
      %p249 = scmp.ne.s32.totalorder %s241, %s243
      %p250 = scmp.eq.s32.totalorder %s39, 1
      %p251 = por %p249, %p250
      %p252 = scmp.ne.s32.totalorder %s243, %s244
      %p253 = scmp.eq.s32.totalorder %s39, 0
      %p254 = por %p252, %p253
      %p255 = scmp.ne.s32.totalorder %s243, %s244
      %p256 = scmp.eq.s32.totalorder %s40, 1
      %p257 = por %p255, %p256
      %p259 = scmp.ne.s32.totalorder %s244, %s258
      %p260 = scmp.eq.s32.totalorder %s40, 0
      %p261 = por %p259, %p260
      %s263 = sadd.s32 %s262, 1
      %p266 = scmp.eq.s32.totalorder %s34, 1
      %p267 = scmp.ne.s32.totalorder %s262, %s264
      %p268 = scmp.eq.s32.totalorder %s34, 0
      %p269 = por %p267, %p268
      %p270 = scmp.ne.s32.totalorder %s262, %s264
      %p271 = scmp.eq.s32.totalorder %s39, 1
      %p272 = por %p270, %p271
      %p273 = scmp.ne.s32.totalorder %s264, %s265
      %p274 = scmp.eq.s32.totalorder %s39, 0
      %p275 = por %p273, %p274
      %p276 = scmp.ne.s32.totalorder %s264, %s265
      %p277 = scmp.eq.s32.totalorder %s40, 1
      %p278 = por %p276, %p277
      %p280 = scmp.ne.s32.totalorder %s265, %s279
      %p281 = scmp.eq.s32.totalorder %s40, 0
      %p282 = por %p280, %p281
      %s284 = sadd.s32 %s283, 1
      %p287 = scmp.eq.s32.totalorder %s34, 1
      %p288 = scmp.ne.s32.totalorder %s283, %s285
      %p289 = scmp.eq.s32.totalorder %s34, 0
      %p290 = por %p288, %p289
      %p291 = scmp.ne.s32.totalorder %s283, %s285
      %p292 = scmp.eq.s32.totalorder %s39, 1
      %p293 = por %p291, %p292
      %p294 = scmp.ne.s32.totalorder %s285, %s286
      %p295 = scmp.eq.s32.totalorder %s39, 0
      %p296 = por %p294, %p295
      %p297 = scmp.ne.s32.totalorder %s285, %s286
      %p298 = scmp.eq.s32.totalorder %s40, 1
      %p299 = por %p297, %p298
      %p301 = scmp.ne.s32.totalorder %s286, %s300
      %p302 = scmp.eq.s32.totalorder %s40, 0
      %p303 = por %p301, %p302
      %s305 = sadd.s32 %s304, 1
      %p308 = scmp.eq.s32.totalorder %s34, 1
      %p309 = scmp.ne.s32.totalorder %s304, %s306
      %p310 = scmp.eq.s32.totalorder %s34, 0
      %p311 = por %p309, %p310
      %p312 = scmp.ne.s32.totalorder %s304, %s306
      %p313 = scmp.eq.s32.totalorder %s39, 1
      %p314 = por %p312, %p313
      %p315 = scmp.ne.s32.totalorder %s306, %s307
      %p316 = scmp.eq.s32.totalorder %s39, 0
      %p317 = por %p315, %p316
      %p318 = scmp.ne.s32.totalorder %s306, %s307
      %p319 = scmp.eq.s32.totalorder %s40, 1
      %p320 = por %p318, %p319
      %p322 = scmp.ne.s32.totalorder %s307, %s321
      %p323 = scmp.eq.s32.totalorder %s40, 0
      %p324 = por %p322, %p323
      %s326 = sadd.s32 %s325, 1
      %p329 = scmp.eq.s32.totalorder %s34, 1
      %p330 = scmp.ne.s32.totalorder %s325, %s327
      %p331 = scmp.eq.s32.totalorder %s34, 0
      %p332 = por %p330, %p331
      %p333 = scmp.ne.s32.totalorder %s325, %s327
      %p334 = scmp.eq.s32.totalorder %s39, 1
      %p335 = por %p333, %p334
      %p336 = scmp.ne.s32.totalorder %s327, %s328
      %p337 = scmp.eq.s32.totalorder %s39, 0
      %p338 = por %p336, %p337
      %p339 = scmp.ne.s32.totalorder %s327, %s328
      %p340 = scmp.eq.s32.totalorder %s40, 1
      %p341 = por %p339, %p340
      %p343 = scmp.ne.s32.totalorder %s328, %s342
      %p344 = scmp.eq.s32.totalorder %s40, 0
      %p345 = por %p343, %p344
      %s347 = sadd.s32 %s346, 1
      %p350 = scmp.eq.s32.totalorder %s34, 1
      %p351 = scmp.ne.s32.totalorder %s346, %s348
      %p352 = scmp.eq.s32.totalorder %s34, 0
      %p353 = por %p351, %p352
      %p354 = scmp.ne.s32.totalorder %s346, %s348
      %p355 = scmp.eq.s32.totalorder %s39, 1
      %p356 = por %p354, %p355
      %p357 = scmp.ne.s32.totalorder %s348, %s349
      %p358 = scmp.eq.s32.totalorder %s39, 0
      %p359 = por %p357, %p358
      %p360 = scmp.ne.s32.totalorder %s348, %s349
      %p361 = scmp.eq.s32.totalorder %s40, 1
      %p362 = por %p360, %p361
      %p364 = scmp.ne.s32.totalorder %s349, %s363
      %p365 = scmp.eq.s32.totalorder %s40, 0
      %p366 = por %p364, %p365
      %s367 = ssub.s32 %s34, %s41
      %p368 = scmp.eq.s32.totalorder %s367, 0
      %s370 = sadd.s32 %s369, 1
      %s371 = scalar_select %p368, %s369, %s370
      %p374 = pneg %p368
      %p375 = scmp.eq.s32.totalorder %s34, 1
      %p376 = por %p374, %p375
      %p377 = scmp.ne.s32.totalorder %s369, %s372
      %p378 = scmp.eq.s32.totalorder %s34, 0
      %p379 = por %p377, %p378
      %p380 = scmp.ne.s32.totalorder %s369, %s372
      %p381 = scmp.eq.s32.totalorder %s39, 1
      %p382 = por %p380, %p381
      %p383 = scmp.ne.s32.totalorder %s372, %s373
      %p384 = scmp.eq.s32.totalorder %s39, 0
      %p385 = por %p383, %p384
      %p386 = scmp.ne.s32.totalorder %s372, %s373
      %p387 = scmp.eq.s32.totalorder %s40, 1
      %p388 = por %p386, %p387
      %p390 = scmp.ne.s32.totalorder %s373, %s389
      %p391 = scmp.eq.s32.totalorder %s40, 0
      %p392 = por %p390, %p391
      %p393 = scmp.le.s32.totalorder 1, %s34
      %p394 = scmp.lt.s32.totalorder %s34, 3
      %p395 = pnand %p393, %p394
      %p396 = pneg %p395
      // Predicated region
      $region9: #{tpu_custom_call.1} parent=5 // pred_check
        _
      $region10: #{tpu_custom_call.1} parent=5 // pred_check_branch
        %398 = sbr.rel (%p395) target = $region12
      $region11: #{tpu_custom_call.1} parent=5 // pred_region
        %s399 = ssub.s32 %s34, 1
        // Predicated region
        $region13: #{tpu_custom_call.1} parent=11 // pred_check
          %p400 = pneg %p107
        $region14: #{tpu_custom_call.1} parent=11 // pred_check_branch
          %402 = sbr.rel (%p400) target = $region16
        $region15: #{tpu_custom_call.1} parent=11 // pred_region
          %s404 = ssub.s32 256, 256
          %405 = vsyncadd [#allocation6], %s404
          %s406 = sshll.u32 [#allocation7], 4
          %s407 = int_to_ptr.vmem [resolvable:$true] %s406
          %412 = dma.hbm_to_vmem [thread:$0]  %s2, 256, %s407, [#allocation6], 64, 64, 4
        $region16: #{tpu_custom_call.1} parent=11 // pred_fallthru
          _
        // Predicated region
        $region17: #{tpu_custom_call.1} parent=11 // pred_check
          %p413 = pneg %p128
        $region18: #{tpu_custom_call.1} parent=11 // pred_check_branch
          %415 = sbr.rel (%p413) target = $region20
        $region19: #{tpu_custom_call.1} parent=11 // pred_region
          %s417 = ssub.s32 256, 256
          %418 = vsyncadd [#allocation9], %s417
          %s419 = sshll.u32 [#allocation8], 4
          %s420 = int_to_ptr.vmem [resolvable:$true] %s419
          %425 = dma.hbm_to_vmem [thread:$0]  %s3, 256, %s420, [#allocation9], 64, 64, 4
        $region20: #{tpu_custom_call.1} parent=11 // pred_fallthru
          _
        // Predicated region
        $region21: #{tpu_custom_call.1} parent=11 // pred_check
          %p426 = pneg %p149
        $region22: #{tpu_custom_call.1} parent=11 // pred_check_branch
          %428 = sbr.rel (%p426) target = $region24
        $region23: #{tpu_custom_call.1} parent=11 // pred_region
          %s430 = ssub.s32 256, 256
          %431 = vsyncadd [#allocation9], %s430
          %s432 = sshll.u32 [#allocation10], 4
          %s433 = int_to_ptr.vmem [resolvable:$true] %s432
          %438 = dma.hbm_to_vmem [thread:$0]  %s4, 256, %s433, [#allocation9], 64, 64, 4
        $region24: #{tpu_custom_call.1} parent=11 // pred_fallthru
          _
        // Predicated region
        $region25: #{tpu_custom_call.1} parent=11 // pred_check
          %p439 = pneg %p170
        $region26: #{tpu_custom_call.1} parent=11 // pred_check_branch
          %441 = sbr.rel (%p439) target = $region28
        $region27: #{tpu_custom_call.1} parent=11 // pred_region
          _
        $region28: #{tpu_custom_call.1} parent=11 // pred_fallthru
          _
        // Predicated region
        $region29: #{tpu_custom_call.1} parent=11 // pred_check
          %p442 = pneg %p191
        $region30: #{tpu_custom_call.1} parent=11 // pred_check_branch
          %444 = sbr.rel (%p442) target = $region32
        $region31: #{tpu_custom_call.1} parent=11 // pred_region
          _
        $region32: #{tpu_custom_call.1} parent=11 // pred_fallthru
          _
        // Predicated region
        $region33: #{tpu_custom_call.1} parent=11 // pred_check
          %p445 = pneg %p212
        $region34: #{tpu_custom_call.1} parent=11 // pred_check_branch
          %447 = sbr.rel (%p445) target = $region36
        $region35: #{tpu_custom_call.1} parent=11 // pred_region
          %s449 = ssub.s32 16, 16
          %450 = vsyncadd [#allocation12], %s449
          %s452 = sshll.u32 [#allocation11], 4
          %s453 = int_to_ptr.vmem [resolvable:$true] %s452
          %455 = dma.hbm_to_vmem [thread:$0]  %s7, 16, %s453, [#allocation12]
        $region36: #{tpu_custom_call.1} parent=11 // pred_fallthru
          _
        // Predicated region
        $region37: #{tpu_custom_call.1} parent=11 // pred_check
          %p456 = pneg %p233
        $region38: #{tpu_custom_call.1} parent=11 // pred_check_branch
          %458 = sbr.rel (%p456) target = $region40
        $region39: #{tpu_custom_call.1} parent=11 // pred_region
          %s460 = ssub.s32 256, 256
          %461 = vsyncadd [#allocation12], %s460
          %s462 = sshll.u32 [#allocation13], 4
          %s463 = int_to_ptr.vmem [resolvable:$true] %s462
          %468 = dma.hbm_to_vmem [thread:$0]  %s8, 256, %s463, [#allocation12], 64, 64, 4
        $region40: #{tpu_custom_call.1} parent=11 // pred_fallthru
          _
        // Predicated region
        $region41: #{tpu_custom_call.1} parent=11 // pred_check
          %p469 = pneg %p254
        $region42: #{tpu_custom_call.1} parent=11 // pred_check_branch
          %471 = sbr.rel (%p469) target = $region44
        $region43: #{tpu_custom_call.1} parent=11 // pred_region
          %s473 = ssub.s32 16, 16
          %474 = vsyncadd [#allocation15], %s473
          %s476 = sshll.u32 [#allocation14], 4
          %s477 = int_to_ptr.vmem [resolvable:$true] %s476
          %479 = dma.hbm_to_vmem [thread:$0]  %s9, 16, %s477, [#allocation15]
        $region44: #{tpu_custom_call.1} parent=11 // pred_fallthru
          _
        // Predicated region
        $region45: #{tpu_custom_call.1} parent=11 // pred_check
          %p480 = pneg %p275
        $region46: #{tpu_custom_call.1} parent=11 // pred_check_branch
          %482 = sbr.rel (%p480) target = $region48
        $region47: #{tpu_custom_call.1} parent=11 // pred_region
          _
        $region48: #{tpu_custom_call.1} parent=11 // pred_fallthru
          _
        // Predicated region
        $region49: #{tpu_custom_call.1} parent=11 // pred_check
          %p483 = pneg %p296
        $region50: #{tpu_custom_call.1} parent=11 // pred_check_branch
          %485 = sbr.rel (%p483) target = $region52
        $region51: #{tpu_custom_call.1} parent=11 // pred_region
          %s487 = ssub.s32 256, 256
          %488 = vsyncadd [#allocation15], %s487
          %s489 = sshll.u32 [#allocation16], 4
          %s490 = int_to_ptr.vmem [resolvable:$true] %s489
          %495 = dma.hbm_to_vmem [thread:$0]  %s11, 256, %s490, [#allocation15], 64, 64, 4
        $region52: #{tpu_custom_call.1} parent=11 // pred_fallthru
          _
        // Predicated region
        $region53: #{tpu_custom_call.1} parent=11 // pred_check
          %p496 = pneg %p317
        $region54: #{tpu_custom_call.1} parent=11 // pred_check_branch
          %498 = sbr.rel (%p496) target = $region56
        $region55: #{tpu_custom_call.1} parent=11 // pred_region
          _
        $region56: #{tpu_custom_call.1} parent=11 // pred_fallthru
          _
        // Predicated region
        $region57: #{tpu_custom_call.1} parent=11 // pred_check
          %p499 = pneg %p338
        $region58: #{tpu_custom_call.1} parent=11 // pred_check_branch
          %501 = sbr.rel (%p499) target = $region60
        $region59: #{tpu_custom_call.1} parent=11 // pred_region
          %s503 = ssub.s32 512, 512
          %504 = vsyncadd [#allocation18], %s503
          %s505 = sshll.u32 [#allocation17], 4
          %s506 = int_to_ptr.vmem [resolvable:$true] %s505
          %511 = dma.hbm_to_vmem [thread:$0]  %s13, 512, %s506, [#allocation18], 64, 64, 4
        $region60: #{tpu_custom_call.1} parent=11 // pred_fallthru
          _
        // Predicated region
        $region61: #{tpu_custom_call.1} parent=11 // pred_check
          %p512 = pneg %p359
        $region62: #{tpu_custom_call.1} parent=11 // pred_check_branch
          %514 = sbr.rel (%p512) target = $region64
        $region63: #{tpu_custom_call.1} parent=11 // pred_region
          _
        $region64: #{tpu_custom_call.1} parent=11 // pred_fallthru
          _
      $region12: #{tpu_custom_call.1} parent=5 // pred_fallthru
        _
      %p515 = scmp.lt.s32.totalorder %s34, 2
      // Predicated region
      $region65: #{tpu_custom_call.1} parent=5 // pred_check
        %p516 = pneg %p515
      $region66: #{tpu_custom_call.1} parent=5 // pred_check_branch
        %518 = sbr.rel (%p516) target = $region68
      $region67: #{tpu_custom_call.1} parent=5 // pred_region
        // Predicated region
        $region69: #{tpu_custom_call.1} parent=67 // pred_check
          %p519 = pneg %p54
        $region70: #{tpu_custom_call.1} parent=67 // pred_check_branch
          %521 = sbr.rel (%p519) target = $region72
        $region71: #{tpu_custom_call.1} parent=67 // pred_region
          %s522 = sand.u32 %s44, 1
          %s523 = scalar_lea.sflag [#allocation3], %s522
          %s524 = sand.u32 %s44, 1
          %s525 = smul.addr %s524, 16
          %s526 = scalar_lea.vmem [#allocation2], %s525
          %s527 = smul.u32 4, %s34
          %s529 = ssub.s32 256, 256
          %530 = vsyncadd %s523, %s529
          %s531 = smul.addr %s527, 64
          %s532 = scalar_lea.hbm %s0, %s531
          %s533 = sshll.u32 %s526, 4
          %s534 = int_to_ptr.vmem [resolvable:$true] %s533
          %539 = dma.hbm_to_vmem [thread:$0]  %s532, 256, %s534, %s523, 64, 64, 4
        $region72: #{tpu_custom_call.1} parent=67 // pred_fallthru
          _
        // Predicated region
        $region73: #{tpu_custom_call.1} parent=67 // pred_check
          %p540 = pneg %p80
        $region74: #{tpu_custom_call.1} parent=67 // pred_check_branch
          %542 = sbr.rel (%p540) target = $region76
        $region75: #{tpu_custom_call.1} parent=67 // pred_region
          %s543 = sand.u32 %s34, 1
          %s544 = scalar_lea.sflag [#allocation6], %s543
          %s545 = sand.u32 %s70, 1
          %s546 = smul.addr %s545, 16
          %s547 = scalar_lea.vmem [#allocation5], %s546
          %s548 = smul.u32 4, %s34
          %s550 = ssub.s32 256, 256
          %551 = vsyncadd %s544, %s550
          %s552 = smul.addr %s548, 64
          %s553 = scalar_lea.hbm %s1, %s552
          %s554 = sshll.u32 %s547, 4
          %s555 = int_to_ptr.vmem [resolvable:$true] %s554
          %560 = dma.hbm_to_vmem [thread:$0]  %s553, 256, %s555, %s544, 64, 64, 4
        $region76: #{tpu_custom_call.1} parent=67 // pred_fallthru
          _
      $region68: #{tpu_custom_call.1} parent=5 // pred_fallthru
        _
      %p561 = scmp.le.s32.totalorder 1, %s34
      %p562 = scmp.lt.s32.totalorder %s34, 3
      %p563 = pnand %p561, %p562
      %p564 = pneg %p563
      // Predicated region
      $region77: #{tpu_custom_call.1} parent=5 // pred_check
        _
      $region78: #{tpu_custom_call.1} parent=5 // pred_check_branch
        %566 = sbr.rel (%p563) target = $region80
      $region79: #{tpu_custom_call.1} parent=5 // pred_region
        %s567 = ssub.s32 %s34, 1
        %s568 = sand.u32 %s47, 1
        %s569 = scalar_lea.sflag [#allocation3], %s568
        %s570 = sand.u32 %s47, 1
        %s571 = smul.addr %s570, 16
        %s572 = scalar_lea.vmem [#allocation2], %s571
        // Predicated region
        $region81: #{tpu_custom_call.1} parent=79 // pred_check
          %p573 = pneg %p60
        $region82: #{tpu_custom_call.1} parent=79 // pred_check_branch
          %575 = sbr.rel (%p573) target = $region84
        $region83: #{tpu_custom_call.1} parent=79 // pred_region
          %576 = dma.done %s569, 256
        $region84: #{tpu_custom_call.1} parent=79 // pred_fallthru
          _
        %s577 = sand.u32 %s39, 1
        %s578 = scalar_lea.sflag [#allocation6], %s577
        %s579 = sand.u32 %s73, 1
        %s580 = smul.addr %s579, 16
        %s581 = scalar_lea.vmem [#allocation5], %s580
        // Predicated region
        $region85: #{tpu_custom_call.1} parent=79 // pred_check
          %p582 = pneg %p86
        $region86: #{tpu_custom_call.1} parent=79 // pred_check_branch
          %584 = sbr.rel (%p582) target = $region88
        $region87: #{tpu_custom_call.1} parent=79 // pred_region
          %585 = dma.done %s578, 256
        $region88: #{tpu_custom_call.1} parent=79 // pred_fallthru
          _
        // Predicated region
        $region89: #{tpu_custom_call.1} parent=79 // pred_check
          %p586 = pneg %p107
        $region90: #{tpu_custom_call.1} parent=79 // pred_check_branch
          %588 = sbr.rel (%p586) target = $region92
        $region91: #{tpu_custom_call.1} parent=79 // pred_region
          %589 = dma.done [#allocation6], 256
        $region92: #{tpu_custom_call.1} parent=79 // pred_fallthru
          _
        // Predicated region
        $region93: #{tpu_custom_call.1} parent=79 // pred_check
          %p590 = pneg %p128
        $region94: #{tpu_custom_call.1} parent=79 // pred_check_branch
          %592 = sbr.rel (%p590) target = $region96
        $region95: #{tpu_custom_call.1} parent=79 // pred_region
          %593 = dma.done [#allocation9], 256
        $region96: #{tpu_custom_call.1} parent=79 // pred_fallthru
          _
        // Predicated region
        $region97: #{tpu_custom_call.1} parent=79 // pred_check
          %p594 = pneg %p149
        $region98: #{tpu_custom_call.1} parent=79 // pred_check_branch
          %596 = sbr.rel (%p594) target = $region100
        $region99: #{tpu_custom_call.1} parent=79 // pred_region
          %597 = dma.done [#allocation9], 256
        $region100: #{tpu_custom_call.1} parent=79 // pred_fallthru
          _
        // Predicated region
        $region101: #{tpu_custom_call.1} parent=79 // pred_check
          %p598 = pneg %p212
        $region102: #{tpu_custom_call.1} parent=79 // pred_check_branch
          %600 = sbr.rel (%p598) target = $region104
        $region103: #{tpu_custom_call.1} parent=79 // pred_region
          %601 = dma.done [#allocation12], 16
        $region104: #{tpu_custom_call.1} parent=79 // pred_fallthru
          _
        // Predicated region
        $region105: #{tpu_custom_call.1} parent=79 // pred_check
          %p602 = pneg %p233
        $region106: #{tpu_custom_call.1} parent=79 // pred_check_branch
          %604 = sbr.rel (%p602) target = $region108
        $region107: #{tpu_custom_call.1} parent=79 // pred_region
          %605 = dma.done [#allocation12], 256
        $region108: #{tpu_custom_call.1} parent=79 // pred_fallthru
          _
        // Predicated region
        $region109: #{tpu_custom_call.1} parent=79 // pred_check
          %p606 = pneg %p254
        $region110: #{tpu_custom_call.1} parent=79 // pred_check_branch
          %608 = sbr.rel (%p606) target = $region112
        $region111: #{tpu_custom_call.1} parent=79 // pred_region
          %609 = dma.done [#allocation15], 16
        $region112: #{tpu_custom_call.1} parent=79 // pred_fallthru
          _
        // Predicated region
        $region113: #{tpu_custom_call.1} parent=79 // pred_check
          %p610 = pneg %p296
        $region114: #{tpu_custom_call.1} parent=79 // pred_check_branch
          %612 = sbr.rel (%p610) target = $region116
        $region115: #{tpu_custom_call.1} parent=79 // pred_region
          %613 = dma.done [#allocation15], 256
        $region116: #{tpu_custom_call.1} parent=79 // pred_fallthru
          _
        // Predicated region
        $region117: #{tpu_custom_call.1} parent=79 // pred_check
          %p614 = pneg %p338
        $region118: #{tpu_custom_call.1} parent=79 // pred_check_branch
          %616 = sbr.rel (%p614) target = $region120
        $region119: #{tpu_custom_call.1} parent=79 // pred_region
          %617 = dma.done [#allocation18], 512
        $region120: #{tpu_custom_call.1} parent=79 // pred_fallthru
          _
        %s618 = sand.u32 %s47, 1
        %s619 = scalar_lea.sflag [#allocation3], %s618
        %s620 = sand.u32 %s47, 1
        %s621 = smul.addr %s620, 16
        %s622 = scalar_lea.vmem [#allocation2], %s621
        %p623 = pneg %p60
        %p624 = pneg %p57
        %s625 = sand.u32 %s39, 1
        %s626 = scalar_lea.sflag [#allocation6], %s625
        %s627 = sand.u32 %s73, 1
        %s628 = smul.addr %s627, 16
        %s629 = scalar_lea.vmem [#allocation5], %s628
        %p630 = pneg %p86
        %p631 = pneg %p83
        %p632 = pneg %p107
        %p633 = pneg %p104
        %p634 = pneg %p128
        %p635 = pneg %p125
        %p636 = pneg %p149
        %p637 = pneg %p146
        %p638 = pneg %p170
        %p639 = pneg %p167
        %p640 = pneg %p191
        %p641 = pneg %p188
        %p642 = pneg %p212
        %p643 = pneg %p209
        %p644 = pneg %p233
        %p645 = pneg %p230
        %p646 = pneg %p254
        %p647 = pneg %p251
        %p648 = pneg %p275
        %p649 = pneg %p272
        %p650 = pneg %p296
        %p651 = pneg %p293
        %p652 = pneg %p317
        %p653 = pneg %p314
        %p654 = pneg %p338
        %p655 = pneg %p335
        %p656 = pneg %p359
        %p657 = pneg %p356
        %p658 = pneg %p385
        %p659 = pneg %p382
        %s660 = sand.u32 %s372, 1
        %s661 = scalar_lea.sflag [#allocation4], %s660
        %s662 = sand.u32 %s372, 1
        %s663 = smul.addr %s662, 32
        %s664 = scalar_lea.vmem [#allocation19], %s663
        %s665 = smul.u32 4, %s39
        %s666 = smul.u32 4, %s39
        %s667 = smul.u32 4, %s39
        %v669 = vld [vmem:[%s572] sm:$0xf]
        %v670 = vld [vmem:[%s572 + $0x4] sm:$0xf]
        %v671 = vld [vmem:[%s572 + $0x8] sm:$0xf]
        %v672 = vld [vmem:[%s572 + $0xc] sm:$0xf]
        %v673 = vld [vmem:[#allocation7] sm:$0xf]
        %v674 = vld [vmem:[#allocation7 + $0x4] sm:$0xf]
        %v675 = vld [vmem:[#allocation7 + $0x8] sm:$0xf]
        %v676 = vld [vmem:[#allocation7 + $0xc] sm:$0xf]
        %v677 = vld [vmem:[%s5] sm:$0x1]
        %v679 = vlaneseq
        %v680 = vshrl.u32 %v679, 7
        %v681 = vsub.s32 0, %v680
        %v682 = vrot.slane %v677, %v681
        %v688 = vunpack.c.l.b16 %v669
        %v689 = vunpack.c.l.b16 %v670
        %v690 = vunpack.c.l.b16 %v671
        %v691 = vunpack.c.l.b16 %v672
        %v692 = vpack.c.b16 %v689, %v688
        %v693 = vpack.c.b16 %v691, %v690
        %v698 = vunpack.c.l.b16 %v673
        %v699 = vunpack.c.l.b16 %v674
        %v700 = vunpack.c.l.b16 %v675
        %v701 = vunpack.c.l.b16 %v676
        %v702 = vpack.c.b16 %v699, %v698
        %v703 = vpack.c.b16 %v701, %v700
        %vm706 = vcmask 261120
        %v708 = vsel %vm706, %v692, 0
        %v711 = vsel %vm706, %v693, 0
        %713 = vmatprep.subr.bf16.mxu0 0
        %714 = vmatpush1.bf16.msra.mxu0 0
        %715 = vmatprep.subr.bf16.mxu0 0
        %716 = vmatpush1.bf16.msra.mxu0 0
        %717 = vmatprep.subr.bf16.mxu0 0
        %718 = vmatpush1.bf16.msra.mxu0 0
        %719 = vmatprep.subr.bf16.mxu0 0
        %720 = vmatpush1.bf16.msra.mxu0 0
        %721 = vmatprep.subr.bf16.mxu0 0
        %722 = vmatpush1.bf16.msra.mxu0 0
        %723 = vmatprep.subr.bf16.mxu0 0
        %724 = vmatpush1.bf16.msra.mxu0 0
        %725 = vmatprep.subr.bf16.mxu0 0
        %726 = vmatpush1.bf16.msra.mxu0 %v703
        %727 = vmatprep.subr.bf16.mxu0 0
        %728 = vmatpush1.bf16.msra.mxu0 %v702
        %729 = vmatprep.subr.bf16.mxu0 0
        %730 = vmatpush2.bf16.msra.mxu0 0
        %731 = vmatprep.subr.bf16.mxu0 0
        %732 = vmatpush2.bf16.msra.mxu0 0
        %733 = vmatprep.subr.bf16.mxu0 0
        %734 = vmatpush2.bf16.msra.mxu0 0
        %735 = vmatprep.subr.bf16.mxu0 0
        %736 = vmatpush2.bf16.msra.mxu0 0
        %737 = vmatprep.subr.bf16.mxu0 0
        %738 = vmatpush2.bf16.msra.mxu0 0
        %739 = vmatprep.subr.bf16.mxu0 0
        %740 = vmatpush2.bf16.msra.mxu0 0
        %741 = vmatprep.subr.bf16.mxu0 0
        %742 = vmatpush2.bf16.msra.mxu0 0
        %743 = vmatprep.subr.bf16.mxu0 0
        %744 = vmatpush2.bf16.msra.mxu0 0
        %745 = vmatprep.mubr.bf16.mxu0 0
        %746 = vmatmul.mubr.bf16.gmra.mxu0 %v708
        %v747 = vpop.f32.mrf.mxu0
        %v748 = vadd.f32 %v682, %v747
        %v749 = vpop.f32.mrf.mxu0
        %v750 = vpop.f32.mrf.mxu0
        %v751 = vadd.f32 %v682, %v750
        %v752 = vpop.f32.mrf.mxu0
        %753 = vmatprep.mubr.bf16.mxu0 0
        %754 = vmatmul.mubr.bf16.gmra.mxu0 %v711
        %v755 = vpop.f32.mrf.mxu0
        %v756 = vadd.f32 %v682, %v755
        %v757 = vpop.f32.mrf.mxu0
        %v758 = vpop.f32.mrf.mxu0
        %v759 = vadd.f32 %v682, %v758
        %v760 = vpop.f32.mrf.mxu0
        %761 = vdwg.mxu0
        %v762 = vld [vmem:[#allocation8] sm:$0xf]
        %v763 = vld [vmem:[#allocation8 + $0x4] sm:$0xf]
        %v764 = vld [vmem:[#allocation8 + $0x8] sm:$0xf]
        %v765 = vld [vmem:[#allocation8 + $0xc] sm:$0xf]
        %v766 = vld [vmem:[%s6] sm:$0x1]
        %v768 = vlaneseq
        %v769 = vshrl.u32 %v768, 7
        %v770 = vsub.s32 0, %v769
        %v771 = vrot.slane %v766, %v770
        %v777 = vunpack.c.l.b16 %v762
        %v778 = vunpack.c.l.b16 %v763
        %v779 = vunpack.c.l.b16 %v764
        %v780 = vunpack.c.l.b16 %v765
        %v781 = vpack.c.b16 %v778, %v777
        %v782 = vpack.c.b16 %v780, %v779
        %785 = vmatprep.subr.bf16.mxu0 0
        %786 = vmatpush1.bf16.msra.mxu0 0
        %787 = vmatprep.subr.bf16.mxu0 0
        %788 = vmatpush1.bf16.msra.mxu0 0
        %789 = vmatprep.subr.bf16.mxu0 0
        %790 = vmatpush1.bf16.msra.mxu0 0
        %791 = vmatprep.subr.bf16.mxu0 0
        %792 = vmatpush1.bf16.msra.mxu0 0
        %793 = vmatprep.subr.bf16.mxu0 0
        %794 = vmatpush1.bf16.msra.mxu0 0
        %795 = vmatprep.subr.bf16.mxu0 0
        %796 = vmatpush1.bf16.msra.mxu0 0
        %797 = vmatprep.subr.bf16.mxu0 0
        %798 = vmatpush1.bf16.msra.mxu0 %v782
        %799 = vmatprep.subr.bf16.mxu0 0
        %800 = vmatpush1.bf16.msra.mxu0 %v781
        %801 = vmatprep.subr.bf16.mxu0 0
        %802 = vmatpush2.bf16.msra.mxu0 0
        %803 = vmatprep.subr.bf16.mxu0 0
        %804 = vmatpush2.bf16.msra.mxu0 0
        %805 = vmatprep.subr.bf16.mxu0 0
        %806 = vmatpush2.bf16.msra.mxu0 0
        %807 = vmatprep.subr.bf16.mxu0 0
        %808 = vmatpush2.bf16.msra.mxu0 0
        %809 = vmatprep.subr.bf16.mxu0 0
        %810 = vmatpush2.bf16.msra.mxu0 0
        %811 = vmatprep.subr.bf16.mxu0 0
        %812 = vmatpush2.bf16.msra.mxu0 0
        %813 = vmatprep.subr.bf16.mxu0 0
        %814 = vmatpush2.bf16.msra.mxu0 0
        %815 = vmatprep.subr.bf16.mxu0 0
        %816 = vmatpush2.bf16.msra.mxu0 0
        %817 = vmatprep.mubr.bf16.mxu0 0
        %818 = vmatmul.mubr.bf16.gmra.mxu0 %v708
        %v819 = vpop.f32.mrf.mxu0
        %v820 = vadd.f32 %v771, %v819
        %v821 = vpop.f32.mrf.mxu0
        %v822 = vpop.f32.mrf.mxu0
        %v823 = vadd.f32 %v771, %v822
        %v824 = vpop.f32.mrf.mxu0
        %825 = vmatprep.mubr.bf16.mxu0 0
        %826 = vmatmul.mubr.bf16.gmra.mxu0 %v711
        %v827 = vpop.f32.mrf.mxu0
        %v828 = vadd.f32 %v771, %v827
        %v829 = vpop.f32.mrf.mxu0
        %v830 = vpop.f32.mrf.mxu0
        %v831 = vadd.f32 %v771, %v830
        %v832 = vpop.f32.mrf.mxu0
        %833 = vdwg.mxu0
        %v834 = vld [vmem:[#allocation10] sm:$0xf]
        %v835 = vld [vmem:[#allocation10 + $0x4] sm:$0xf]
        %v836 = vld [vmem:[#allocation10 + $0x8] sm:$0xf]
        %v837 = vld [vmem:[#allocation10 + $0xc] sm:$0xf]
        %v838 = vld [vmem:[#allocation11] sm:$0x1]
        %v840 = vlaneseq
        %v841 = vshrl.u32 %v840, 7
        %v842 = vsub.s32 0, %v841
        %v843 = vrot.slane %v838, %v842
        %v849 = vunpack.c.l.b16 %v834
        %v850 = vunpack.c.l.b16 %v835
        %v851 = vunpack.c.l.b16 %v836
        %v852 = vunpack.c.l.b16 %v837
        %v853 = vpack.c.b16 %v850, %v849
        %v854 = vpack.c.b16 %v852, %v851
        %857 = vmatprep.subr.bf16.mxu0 0
        %858 = vmatpush1.bf16.msra.mxu0 0
        %859 = vmatprep.subr.bf16.mxu0 0
        %860 = vmatpush1.bf16.msra.mxu0 0
        %861 = vmatprep.subr.bf16.mxu0 0
        %862 = vmatpush1.bf16.msra.mxu0 0
        %863 = vmatprep.subr.bf16.mxu0 0
        %864 = vmatpush1.bf16.msra.mxu0 0
        %865 = vmatprep.subr.bf16.mxu0 0
        %866 = vmatpush1.bf16.msra.mxu0 0
        %867 = vmatprep.subr.bf16.mxu0 0
        %868 = vmatpush1.bf16.msra.mxu0 0
        %869 = vmatprep.subr.bf16.mxu0 0
        %870 = vmatpush1.bf16.msra.mxu0 %v854
        %871 = vmatprep.subr.bf16.mxu0 0
        %872 = vmatpush1.bf16.msra.mxu0 %v853
        %873 = vmatprep.subr.bf16.mxu0 0
        %874 = vmatpush2.bf16.msra.mxu0 0
        %875 = vmatprep.subr.bf16.mxu0 0
        %876 = vmatpush2.bf16.msra.mxu0 0
        %877 = vmatprep.subr.bf16.mxu0 0
        %878 = vmatpush2.bf16.msra.mxu0 0
        %879 = vmatprep.subr.bf16.mxu0 0
        %880 = vmatpush2.bf16.msra.mxu0 0
        %881 = vmatprep.subr.bf16.mxu0 0
        %882 = vmatpush2.bf16.msra.mxu0 0
        %883 = vmatprep.subr.bf16.mxu0 0
        %884 = vmatpush2.bf16.msra.mxu0 0
        %885 = vmatprep.subr.bf16.mxu0 0
        %886 = vmatpush2.bf16.msra.mxu0 0
        %887 = vmatprep.subr.bf16.mxu0 0
        %888 = vmatpush2.bf16.msra.mxu0 0
        %889 = vmatprep.mubr.bf16.mxu0 0
        %890 = vmatmul.mubr.bf16.gmra.mxu0 %v708
        %v891 = vpop.f32.mrf.mxu0
        %v892 = vadd.f32 %v843, %v891
        %v893 = vpop.f32.mrf.mxu0
        %v894 = vpop.f32.mrf.mxu0
        %v895 = vadd.f32 %v843, %v894
        %v896 = vpop.f32.mrf.mxu0
        %897 = vmatprep.mubr.bf16.mxu0 0
        %898 = vmatmul.mubr.bf16.gmra.mxu0 %v711
        %v899 = vpop.f32.mrf.mxu0
        %v900 = vadd.f32 %v843, %v899
        %v901 = vpop.f32.mrf.mxu0
        %v902 = vpop.f32.mrf.mxu0
        %v903 = vadd.f32 %v843, %v902
        %v904 = vpop.f32.mrf.mxu0
        %905 = vdwg.mxu0
        %v906 = vpack.c.bf16 %v748, %v748
        %v907 = vpack.c.bf16 %v751, %v751
        %v908 = vpack.c.bf16 %v756, %v756
        %v909 = vpack.c.bf16 %v759, %v759
        %v910 = vpack.c.bf16 %v820, %v820
        %v911 = vpack.c.bf16 %v823, %v823
        %v912 = vpack.c.bf16 %v828, %v828
        %v913 = vpack.c.bf16 %v831, %v831
        %v914 = vpack.c.bf16 %v892, %v892
        %v915 = vpack.c.bf16 %v895, %v895
        %v916 = vpack.c.bf16 %v900, %v900
        %v917 = vpack.c.bf16 %v903, %v903
        %v918 = vlaneseq
        %v919 = vand.u32 %v918, 127
        %vm920 = vcmp.ge.s32.totalorder %v919, 0
        %vm921 = vcmp.lt.s32.totalorder %v919, 8
        %vm922 = vmand %vm920, %vm921
        %vm923 = vcmp.ge.s32.totalorder %v919, 8
        %vm924 = vcmp.lt.s32.totalorder %v919, 16
        %vm925 = vmand %vm923, %vm924
        %vm926 = vcmp.ge.s32.totalorder %v919, 16
        %vm927 = vcmp.lt.s32.totalorder %v919, 24
        %vm928 = vmand %vm926, %vm927
        %vm929 = vcmp.ge.s32.totalorder %v919, 24
        %vm930 = vcmp.lt.s32.totalorder %v919, 32
        %vm931 = vmand %vm929, %vm930
        %v932 = vsel %vm922, 1, 0
        %vm933 = vcmp.eq.s32.totalorder %v932, 1
        %vm934 = vmpackc.low %vm933, %vm933
        %v935 = vsel %vm934, %v906, 0
        %v936 = vsel %vm934, %v907, 0
        %v937 = vsel %vm934, %v908, 0
        %v938 = vsel %vm934, %v909, 0
        %v939 = vsel %vm925, 1, 0
        %vm940 = vcmp.eq.s32.totalorder %v939, 1
        %vm941 = vmpackc.low %vm940, %vm940
        %v942 = vsel %vm941, %v906, 0
        %v943 = vsel %vm941, %v907, 0
        %v944 = vsel %vm941, %v908, 0
        %v945 = vsel %vm941, %v909, 0
        %v946 = vsel %vm928, 1, 0
        %vm947 = vcmp.eq.s32.totalorder %v946, 1
        %vm948 = vmpackc.low %vm947, %vm947
        %v949 = vsel %vm948, %v906, 0
        %v950 = vsel %vm948, %v907, 0
        %v951 = vsel %vm948, %v908, 0
        %v952 = vsel %vm948, %v909, 0
        %v953 = vsel %vm931, 1, 0
        %vm954 = vcmp.eq.s32.totalorder %v953, 1
        %vm955 = vmpackc.low %vm954, %vm954
        %v956 = vsel %vm955, %v906, 0
        %v957 = vsel %vm955, %v907, 0
        %v958 = vsel %vm955, %v908, 0
        %v959 = vsel %vm955, %v909, 0
        %v961 = vsel %vm706, %v935, 0
        %v964 = vsel %vm706, %v910, 0
        %966 = vmatprep.subr.bf16.mxu0 0
        %967 = vmatpush1.bf16.xpose.msra.mxu0 0
        %968 = vmatprep.subr.bf16.mxu0 0
        %969 = vmatpush1.bf16.xpose.msra.mxu0 0
        %970 = vmatprep.subr.bf16.mxu0 0
        %971 = vmatpush1.bf16.xpose.msra.mxu0 0
        %972 = vmatprep.subr.bf16.mxu0 0
        %973 = vmatpush1.bf16.xpose.msra.mxu0 0
        %974 = vmatprep.subr.bf16.mxu0 0
        %975 = vmatpush1.bf16.xpose.msra.mxu0 0
        %976 = vmatprep.subr.bf16.mxu0 0
        %977 = vmatpush1.bf16.xpose.msra.mxu0 0
        %978 = vmatprep.subr.bf16.mxu0 0
        %979 = vmatpush1.bf16.xpose.msra.mxu0 0
        %980 = vmatprep.subr.bf16.mxu0 0
        %981 = vmatpush1.bf16.xpose.msra.mxu0 %v964
        %982 = vmatprep.subr.bf16.mxu0 0
        %983 = vmatpush2.bf16.xpose.msra.mxu0 0
        %984 = vmatprep.subr.bf16.mxu0 0
        %985 = vmatpush2.bf16.xpose.msra.mxu0 0
        %986 = vmatprep.subr.bf16.mxu0 0
        %987 = vmatpush2.bf16.xpose.msra.mxu0 0
        %988 = vmatprep.subr.bf16.mxu0 0
        %989 = vmatpush2.bf16.xpose.msra.mxu0 0
        %990 = vmatprep.subr.bf16.mxu0 0
        %991 = vmatpush2.bf16.xpose.msra.mxu0 0
        %992 = vmatprep.subr.bf16.mxu0 0
        %993 = vmatpush2.bf16.xpose.msra.mxu0 0
        %994 = vmatprep.subr.bf16.mxu0 0
        %995 = vmatpush2.bf16.xpose.msra.mxu0 0
        %996 = vmatprep.subr.bf16.mxu0 0
        %997 = vmatpush2.bf16.xpose.msra.mxu0 0
        %998 = vmatprep.mubr.bf16.mxu0 0
        %999 = vmatmul.mubr.bf16.gmra.mxu0 %v961
        %v1000 = vpop.f32.mrf.mxu0
        %v1001 = vadd.f32 0.0, %v1000
        %v1002 = vpop.f32.mrf.mxu0
        %v1003 = vpop.f32.mrf.mxu0
        %v1004 = vpop.f32.mrf.mxu0
        %1005 = vdwg.mxu0
        %v1007 = vsel %vm706, %v936, 0
        %v1010 = vsel %vm706, %v911, 0
        %1012 = vmatprep.subr.bf16.mxu0 0
        %1013 = vmatpush1.bf16.xpose.msra.mxu0 0
        %1014 = vmatprep.subr.bf16.mxu0 0
        %1015 = vmatpush1.bf16.xpose.msra.mxu0 0
        %1016 = vmatprep.subr.bf16.mxu0 0
        %1017 = vmatpush1.bf16.xpose.msra.mxu0 0
        %1018 = vmatprep.subr.bf16.mxu0 0
        %1019 = vmatpush1.bf16.xpose.msra.mxu0 0
        %1020 = vmatprep.subr.bf16.mxu0 0
        %1021 = vmatpush1.bf16.xpose.msra.mxu0 0
        %1022 = vmatprep.subr.bf16.mxu0 0
        %1023 = vmatpush1.bf16.xpose.msra.mxu0 0
        %1024 = vmatprep.subr.bf16.mxu0 0
        %1025 = vmatpush1.bf16.xpose.msra.mxu0 0
        %1026 = vmatprep.subr.bf16.mxu0 0
        %1027 = vmatpush1.bf16.xpose.msra.mxu0 %v1010
        %1028 = vmatprep.subr.bf16.mxu0 0
        %1029 = vmatpush2.bf16.xpose.msra.mxu0 0
        %1030 = vmatprep.subr.bf16.mxu0 0
        %1031 = vmatpush2.bf16.xpose.msra.mxu0 0
        %1032 = vmatprep.subr.bf16.mxu0 0
        %1033 = vmatpush2.bf16.xpose.msra.mxu0 0
        %1034 = vmatprep.subr.bf16.mxu0 0
        %1035 = vmatpush2.bf16.xpose.msra.mxu0 0
        %1036 = vmatprep.subr.bf16.mxu0 0
        %1037 = vmatpush2.bf16.xpose.msra.mxu0 0
        %1038 = vmatprep.subr.bf16.mxu0 0
        %1039 = vmatpush2.bf16.xpose.msra.mxu0 0
        %1040 = vmatprep.subr.bf16.mxu0 0
        %1041 = vmatpush2.bf16.xpose.msra.mxu0 0
        %1042 = vmatprep.subr.bf16.mxu0 0
        %1043 = vmatpush2.bf16.xpose.msra.mxu0 0
        %1044 = vmatprep.mubr.bf16.mxu0 0
        %1045 = vmatmul.mubr.bf16.gmra.mxu0 %v1007
        %v1046 = vpop.f32.mrf.mxu0
        %v1047 = vadd.f32 0.0, %v1046
        %v1048 = vpop.f32.mrf.mxu0
        %v1049 = vpop.f32.mrf.mxu0
        %v1050 = vpop.f32.mrf.mxu0
        %1051 = vdwg.mxu0
        %v1053 = vsel %vm706, %v937, 0
        %v1056 = vsel %vm706, %v912, 0
        %1058 = vmatprep.subr.bf16.mxu0 0
        %1059 = vmatpush1.bf16.xpose.msra.mxu0 0
        %1060 = vmatprep.subr.bf16.mxu0 0
        %1061 = vmatpush1.bf16.xpose.msra.mxu0 0
        %1062 = vmatprep.subr.bf16.mxu0 0
        %1063 = vmatpush1.bf16.xpose.msra.mxu0 0
        %1064 = vmatprep.subr.bf16.mxu0 0
        %1065 = vmatpush1.bf16.xpose.msra.mxu0 0
        %1066 = vmatprep.subr.bf16.mxu0 0
        %1067 = vmatpush1.bf16.xpose.msra.mxu0 0
        %1068 = vmatprep.subr.bf16.mxu0 0
        %1069 = vmatpush1.bf16.xpose.msra.mxu0 0
        %1070 = vmatprep.subr.bf16.mxu0 0
        %1071 = vmatpush1.bf16.xpose.msra.mxu0 0
        %1072 = vmatprep.subr.bf16.mxu0 0
        %1073 = vmatpush1.bf16.xpose.msra.mxu0 %v1056
        %1074 = vmatprep.subr.bf16.mxu0 0
        %1075 = vmatpush2.bf16.xpose.msra.mxu0 0
        %1076 = vmatprep.subr.bf16.mxu0 0
        %1077 = vmatpush2.bf16.xpose.msra.mxu0 0
        %1078 = vmatprep.subr.bf16.mxu0 0
        %1079 = vmatpush2.bf16.xpose.msra.mxu0 0
        %1080 = vmatprep.subr.bf16.mxu0 0
        %1081 = vmatpush2.bf16.xpose.msra.mxu0 0
        %1082 = vmatprep.subr.bf16.mxu0 0
        %1083 = vmatpush2.bf16.xpose.msra.mxu0 0
        %1084 = vmatprep.subr.bf16.mxu0 0
        %1085 = vmatpush2.bf16.xpose.msra.mxu0 0
        %1086 = vmatprep.subr.bf16.mxu0 0
        %1087 = vmatpush2.bf16.xpose.msra.mxu0 0
        %1088 = vmatprep.subr.bf16.mxu0 0
        %1089 = vmatpush2.bf16.xpose.msra.mxu0 0
        %1090 = vmatprep.mubr.bf16.mxu0 0
        %1091 = vmatmul.mubr.bf16.gmra.mxu0 %v1053
        %v1092 = vpop.f32.mrf.mxu0
        %v1093 = vadd.f32 0.0, %v1092
        %v1094 = vpop.f32.mrf.mxu0
        %v1095 = vpop.f32.mrf.mxu0
        %v1096 = vpop.f32.mrf.mxu0
        %1097 = vdwg.mxu0
        %v1099 = vsel %vm706, %v938, 0
        %v1102 = vsel %vm706, %v913, 0
        %1104 = vmatprep.subr.bf16.mxu0 0
        %1105 = vmatpush1.bf16.xpose.msra.mxu0 0
        %1106 = vmatprep.subr.bf16.mxu0 0
        %1107 = vmatpush1.bf16.xpose.msra.mxu0 0
        %1108 = vmatprep.subr.bf16.mxu0 0
        %1109 = vmatpush1.bf16.xpose.msra.mxu0 0
        %1110 = vmatprep.subr.bf16.mxu0 0
        %1111 = vmatpush1.bf16.xpose.msra.mxu0 0
        %1112 = vmatprep.subr.bf16.mxu0 0
        %1113 = vmatpush1.bf16.xpose.msra.mxu0 0
        %1114 = vmatprep.subr.bf16.mxu0 0
        %1115 = vmatpush1.bf16.xpose.msra.mxu0 0
        %1116 = vmatprep.subr.bf16.mxu0 0
        %1117 = vmatpush1.bf16.xpose.msra.mxu0 0
        %1118 = vmatprep.subr.bf16.mxu0 0
        %1119 = vmatpush1.bf16.xpose.msra.mxu0 %v1102
        %1120 = vmatprep.subr.bf16.mxu0 0
        %1121 = vmatpush2.bf16.xpose.msra.mxu0 0
        %1122 = vmatprep.subr.bf16.mxu0 0
        %1123 = vmatpush2.bf16.xpose.msra.mxu0 0
        %1124 = vmatprep.subr.bf16.mxu0 0
        %1125 = vmatpush2.bf16.xpose.msra.mxu0 0
        %1126 = vmatprep.subr.bf16.mxu0 0
        %1127 = vmatpush2.bf16.xpose.msra.mxu0 0
        %1128 = vmatprep.subr.bf16.mxu0 0
        %1129 = vmatpush2.bf16.xpose.msra.mxu0 0
        %1130 = vmatprep.subr.bf16.mxu0 0
        %1131 = vmatpush2.bf16.xpose.msra.mxu0 0
        %1132 = vmatprep.subr.bf16.mxu0 0
        %1133 = vmatpush2.bf16.xpose.msra.mxu0 0
        %1134 = vmatprep.subr.bf16.mxu0 0
        %1135 = vmatpush2.bf16.xpose.msra.mxu0 0
        %1136 = vmatprep.mubr.bf16.mxu0 0
        %1137 = vmatmul.mubr.bf16.gmra.mxu0 %v1099
        %v1138 = vpop.f32.mrf.mxu0
        %v1139 = vadd.f32 0.0, %v1138
        %v1140 = vpop.f32.mrf.mxu0
        %v1141 = vpop.f32.mrf.mxu0
        %v1142 = vpop.f32.mrf.mxu0
        %1143 = vdwg.mxu0
        %v1145 = vsel %vm706, %v942, 0
        %1147 = vmatprep.subr.bf16.mxu0 0
        %1148 = vmatpush1.bf16.xpose.msra.mxu0 0
        %1149 = vmatprep.subr.bf16.mxu0 0
        %1150 = vmatpush1.bf16.xpose.msra.mxu0 0
        %1151 = vmatprep.subr.bf16.mxu0 0
        %1152 = vmatpush1.bf16.xpose.msra.mxu0 0
        %1153 = vmatprep.subr.bf16.mxu0 0
        %1154 = vmatpush1.bf16.xpose.msra.mxu0 0
        %1155 = vmatprep.subr.bf16.mxu0 0
        %1156 = vmatpush1.bf16.xpose.msra.mxu0 0
        %1157 = vmatprep.subr.bf16.mxu0 0
        %1158 = vmatpush1.bf16.xpose.msra.mxu0 0
        %1159 = vmatprep.subr.bf16.mxu0 0
        %1160 = vmatpush1.bf16.xpose.msra.mxu0 0
        %1161 = vmatprep.subr.bf16.mxu0 0
        %1162 = vmatpush1.bf16.xpose.msra.mxu0 %v964
        %1163 = vmatprep.subr.bf16.mxu0 0
        %1164 = vmatpush2.bf16.xpose.msra.mxu0 0
        %1165 = vmatprep.subr.bf16.mxu0 0
        %1166 = vmatpush2.bf16.xpose.msra.mxu0 0
        %1167 = vmatprep.subr.bf16.mxu0 0
        %1168 = vmatpush2.bf16.xpose.msra.mxu0 0
        %1169 = vmatprep.subr.bf16.mxu0 0
        %1170 = vmatpush2.bf16.xpose.msra.mxu0 0
        %1171 = vmatprep.subr.bf16.mxu0 0
        %1172 = vmatpush2.bf16.xpose.msra.mxu0 0
        %1173 = vmatprep.subr.bf16.mxu0 0
        %1174 = vmatpush2.bf16.xpose.msra.mxu0 0
        %1175 = vmatprep.subr.bf16.mxu0 0
        %1176 = vmatpush2.bf16.xpose.msra.mxu0 0
        %1177 = vmatprep.subr.bf16.mxu0 0
        %1178 = vmatpush2.bf16.xpose.msra.mxu0 0
        %1179 = vmatprep.mubr.bf16.mxu0 0
        %1180 = vmatmul.mubr.bf16.gmra.mxu0 %v1145
        %v1181 = vpop.f32.mrf.mxu0
        %v1182 = vadd.f32 0.0, %v1181
        %v1183 = vpop.f32.mrf.mxu0
        %v1184 = vpop.f32.mrf.mxu0
        %v1185 = vpop.f32.mrf.mxu0
        %1186 = vdwg.mxu0
        %v1188 = vsel %vm706, %v943, 0
        %1190 = vmatprep.subr.bf16.mxu0 0
        %1191 = vmatpush1.bf16.xpose.msra.mxu0 0
        %1192 = vmatprep.subr.bf16.mxu0 0
        %1193 = vmatpush1.bf16.xpose.msra.mxu0 0
        %1194 = vmatprep.subr.bf16.mxu0 0
        %1195 = vmatpush1.bf16.xpose.msra.mxu0 0
        %1196 = vmatprep.subr.bf16.mxu0 0
        %1197 = vmatpush1.bf16.xpose.msra.mxu0 0
        %1198 = vmatprep.subr.bf16.mxu0 0
        %1199 = vmatpush1.bf16.xpose.msra.mxu0 0
        %1200 = vmatprep.subr.bf16.mxu0 0
        %1201 = vmatpush1.bf16.xpose.msra.mxu0 0
        %1202 = vmatprep.subr.bf16.mxu0 0
        %1203 = vmatpush1.bf16.xpose.msra.mxu0 0
        %1204 = vmatprep.subr.bf16.mxu0 0
        %1205 = vmatpush1.bf16.xpose.msra.mxu0 %v1010
        %1206 = vmatprep.subr.bf16.mxu0 0
        %1207 = vmatpush2.bf16.xpose.msra.mxu0 0
        %1208 = vmatprep.subr.bf16.mxu0 0
        %1209 = vmatpush2.bf16.xpose.msra.mxu0 0
        %1210 = vmatprep.subr.bf16.mxu0 0
        %1211 = vmatpush2.bf16.xpose.msra.mxu0 0
        %1212 = vmatprep.subr.bf16.mxu0 0
        %1213 = vmatpush2.bf16.xpose.msra.mxu0 0
        %1214 = vmatprep.subr.bf16.mxu0 0
        %1215 = vmatpush2.bf16.xpose.msra.mxu0 0
        %1216 = vmatprep.subr.bf16.mxu0 0
        %1217 = vmatpush2.bf16.xpose.msra.mxu0 0
        %1218 = vmatprep.subr.bf16.mxu0 0
        %1219 = vmatpush2.bf16.xpose.msra.mxu0 0
        %1220 = vmatprep.subr.bf16.mxu0 0
        %1221 = vmatpush2.bf16.xpose.msra.mxu0 0
        %1222 = vmatprep.mubr.bf16.mxu0 0
        %1223 = vmatmul.mubr.bf16.gmra.mxu0 %v1188
        %v1224 = vpop.f32.mrf.mxu0
        %v1225 = vadd.f32 0.0, %v1224
        %v1226 = vpop.f32.mrf.mxu0
        %v1227 = vpop.f32.mrf.mxu0
        %v1228 = vpop.f32.mrf.mxu0
        %1229 = vdwg.mxu0
        %v1231 = vsel %vm706, %v944, 0
        %1233 = vmatprep.subr.bf16.mxu0 0
        %1234 = vmatpush1.bf16.xpose.msra.mxu0 0
        %1235 = vmatprep.subr.bf16.mxu0 0
        %1236 = vmatpush1.bf16.xpose.msra.mxu0 0
        %1237 = vmatprep.subr.bf16.mxu0 0
        %1238 = vmatpush1.bf16.xpose.msra.mxu0 0
        %1239 = vmatprep.subr.bf16.mxu0 0
        %1240 = vmatpush1.bf16.xpose.msra.mxu0 0
        %1241 = vmatprep.subr.bf16.mxu0 0
        %1242 = vmatpush1.bf16.xpose.msra.mxu0 0
        %1243 = vmatprep.subr.bf16.mxu0 0
        %1244 = vmatpush1.bf16.xpose.msra.mxu0 0
        %1245 = vmatprep.subr.bf16.mxu0 0
        %1246 = vmatpush1.bf16.xpose.msra.mxu0 0
        %1247 = vmatprep.subr.bf16.mxu0 0
        %1248 = vmatpush1.bf16.xpose.msra.mxu0 %v1056
        %1249 = vmatprep.subr.bf16.mxu0 0
        %1250 = vmatpush2.bf16.xpose.msra.mxu0 0
        %1251 = vmatprep.subr.bf16.mxu0 0
        %1252 = vmatpush2.bf16.xpose.msra.mxu0 0
        %1253 = vmatprep.subr.bf16.mxu0 0
        %1254 = vmatpush2.bf16.xpose.msra.mxu0 0
        %1255 = vmatprep.subr.bf16.mxu0 0
        %1256 = vmatpush2.bf16.xpose.msra.mxu0 0
        %1257 = vmatprep.subr.bf16.mxu0 0
        %1258 = vmatpush2.bf16.xpose.msra.mxu0 0
        %1259 = vmatprep.subr.bf16.mxu0 0
        %1260 = vmatpush2.bf16.xpose.msra.mxu0 0
        %1261 = vmatprep.subr.bf16.mxu0 0
        %1262 = vmatpush2.bf16.xpose.msra.mxu0 0
        %1263 = vmatprep.subr.bf16.mxu0 0
        %1264 = vmatpush2.bf16.xpose.msra.mxu0 0
        %1265 = vmatprep.mubr.bf16.mxu0 0
        %1266 = vmatmul.mubr.bf16.gmra.mxu0 %v1231
        %v1267 = vpop.f32.mrf.mxu0
        %v1268 = vadd.f32 0.0, %v1267
        %v1269 = vpop.f32.mrf.mxu0
        %v1270 = vpop.f32.mrf.mxu0
        %v1271 = vpop.f32.mrf.mxu0
        %1272 = vdwg.mxu0
        %v1274 = vsel %vm706, %v945, 0
        %1276 = vmatprep.subr.bf16.mxu0 0
        %1277 = vmatpush1.bf16.xpose.msra.mxu0 0
        %1278 = vmatprep.subr.bf16.mxu0 0
        %1279 = vmatpush1.bf16.xpose.msra.mxu0 0
        %1280 = vmatprep.subr.bf16.mxu0 0
        %1281 = vmatpush1.bf16.xpose.msra.mxu0 0
        %1282 = vmatprep.subr.bf16.mxu0 0
        %1283 = vmatpush1.bf16.xpose.msra.mxu0 0
        %1284 = vmatprep.subr.bf16.mxu0 0
        %1285 = vmatpush1.bf16.xpose.msra.mxu0 0
        %1286 = vmatprep.subr.bf16.mxu0 0
        %1287 = vmatpush1.bf16.xpose.msra.mxu0 0
        %1288 = vmatprep.subr.bf16.mxu0 0
        %1289 = vmatpush1.bf16.xpose.msra.mxu0 0
        %1290 = vmatprep.subr.bf16.mxu0 0
        %1291 = vmatpush1.bf16.xpose.msra.mxu0 %v1102
        %1292 = vmatprep.subr.bf16.mxu0 0
        %1293 = vmatpush2.bf16.xpose.msra.mxu0 0
        %1294 = vmatprep.subr.bf16.mxu0 0
        %1295 = vmatpush2.bf16.xpose.msra.mxu0 0
        %1296 = vmatprep.subr.bf16.mxu0 0
        %1297 = vmatpush2.bf16.xpose.msra.mxu0 0
        %1298 = vmatprep.subr.bf16.mxu0 0
        %1299 = vmatpush2.bf16.xpose.msra.mxu0 0
        %1300 = vmatprep.subr.bf16.mxu0 0
        %1301 = vmatpush2.bf16.xpose.msra.mxu0 0
        %1302 = vmatprep.subr.bf16.mxu0 0
        %1303 = vmatpush2.bf16.xpose.msra.mxu0 0
        %1304 = vmatprep.subr.bf16.mxu0 0
        %1305 = vmatpush2.bf16.xpose.msra.mxu0 0
        %1306 = vmatprep.subr.bf16.mxu0 0
        %1307 = vmatpush2.bf16.xpose.msra.mxu0 0
        %1308 = vmatprep.mubr.bf16.mxu0 0
        %1309 = vmatmul.mubr.bf16.gmra.mxu0 %v1274
        %v1310 = vpop.f32.mrf.mxu0
        %v1311 = vadd.f32 0.0, %v1310
        %v1312 = vpop.f32.mrf.mxu0
        %v1313 = vpop.f32.mrf.mxu0
        %v1314 = vpop.f32.mrf.mxu0
        %1315 = vdwg.mxu0
        %v1317 = vsel %vm706, %v949, 0
        %1319 = vmatprep.subr.bf16.mxu0 0
        %1320 = vmatpush1.bf16.xpose.msra.mxu0 0
        %1321 = vmatprep.subr.bf16.mxu0 0
        %1322 = vmatpush1.bf16.xpose.msra.mxu0 0
        %1323 = vmatprep.subr.bf16.mxu0 0
        %1324 = vmatpush1.bf16.xpose.msra.mxu0 0
        %1325 = vmatprep.subr.bf16.mxu0 0
        %1326 = vmatpush1.bf16.xpose.msra.mxu0 0
        %1327 = vmatprep.subr.bf16.mxu0 0
        %1328 = vmatpush1.bf16.xpose.msra.mxu0 0
        %1329 = vmatprep.subr.bf16.mxu0 0
        %1330 = vmatpush1.bf16.xpose.msra.mxu0 0
        %1331 = vmatprep.subr.bf16.mxu0 0
        %1332 = vmatpush1.bf16.xpose.msra.mxu0 0
        %1333 = vmatprep.subr.bf16.mxu0 0
        %1334 = vmatpush1.bf16.xpose.msra.mxu0 %v964
        %1335 = vmatprep.subr.bf16.mxu0 0
        %1336 = vmatpush2.bf16.xpose.msra.mxu0 0
        %1337 = vmatprep.subr.bf16.mxu0 0
        %1338 = vmatpush2.bf16.xpose.msra.mxu0 0
        %1339 = vmatprep.subr.bf16.mxu0 0
        %1340 = vmatpush2.bf16.xpose.msra.mxu0 0
        %1341 = vmatprep.subr.bf16.mxu0 0
        %1342 = vmatpush2.bf16.xpose.msra.mxu0 0
        %1343 = vmatprep.subr.bf16.mxu0 0
        %1344 = vmatpush2.bf16.xpose.msra.mxu0 0
        %1345 = vmatprep.subr.bf16.mxu0 0
        %1346 = vmatpush2.bf16.xpose.msra.mxu0 0
        %1347 = vmatprep.subr.bf16.mxu0 0
        %1348 = vmatpush2.bf16.xpose.msra.mxu0 0
        %1349 = vmatprep.subr.bf16.mxu0 0
        %1350 = vmatpush2.bf16.xpose.msra.mxu0 0
        %1351 = vmatprep.mubr.bf16.mxu0 0
        %1352 = vmatmul.mubr.bf16.gmra.mxu0 %v1317
        %v1353 = vpop.f32.mrf.mxu0
        %v1354 = vadd.f32 0.0, %v1353
        %v1355 = vpop.f32.mrf.mxu0
        %v1356 = vpop.f32.mrf.mxu0
        %v1357 = vpop.f32.mrf.mxu0
        %1358 = vdwg.mxu0
        %v1360 = vsel %vm706, %v950, 0
        %1362 = vmatprep.subr.bf16.mxu0 0
        %1363 = vmatpush1.bf16.xpose.msra.mxu0 0
        %1364 = vmatprep.subr.bf16.mxu0 0
        %1365 = vmatpush1.bf16.xpose.msra.mxu0 0
        %1366 = vmatprep.subr.bf16.mxu0 0
        %1367 = vmatpush1.bf16.xpose.msra.mxu0 0
        %1368 = vmatprep.subr.bf16.mxu0 0
        %1369 = vmatpush1.bf16.xpose.msra.mxu0 0
        %1370 = vmatprep.subr.bf16.mxu0 0
        %1371 = vmatpush1.bf16.xpose.msra.mxu0 0
        %1372 = vmatprep.subr.bf16.mxu0 0
        %1373 = vmatpush1.bf16.xpose.msra.mxu0 0
        %1374 = vmatprep.subr.bf16.mxu0 0
        %1375 = vmatpush1.bf16.xpose.msra.mxu0 0
        %1376 = vmatprep.subr.bf16.mxu0 0
        %1377 = vmatpush1.bf16.xpose.msra.mxu0 %v1010
        %1378 = vmatprep.subr.bf16.mxu0 0
        %1379 = vmatpush2.bf16.xpose.msra.mxu0 0
        %1380 = vmatprep.subr.bf16.mxu0 0
        %1381 = vmatpush2.bf16.xpose.msra.mxu0 0
        %1382 = vmatprep.subr.bf16.mxu0 0
        %1383 = vmatpush2.bf16.xpose.msra.mxu0 0
        %1384 = vmatprep.subr.bf16.mxu0 0
        %1385 = vmatpush2.bf16.xpose.msra.mxu0 0
        %1386 = vmatprep.subr.bf16.mxu0 0
        %1387 = vmatpush2.bf16.xpose.msra.mxu0 0
        %1388 = vmatprep.subr.bf16.mxu0 0
        %1389 = vmatpush2.bf16.xpose.msra.mxu0 0
        %1390 = vmatprep.subr.bf16.mxu0 0
        %1391 = vmatpush2.bf16.xpose.msra.mxu0 0
        %1392 = vmatprep.subr.bf16.mxu0 0
        %1393 = vmatpush2.bf16.xpose.msra.mxu0 0
        %1394 = vmatprep.mubr.bf16.mxu0 0
        %1395 = vmatmul.mubr.bf16.gmra.mxu0 %v1360
        %v1396 = vpop.f32.mrf.mxu0
        %v1397 = vadd.f32 0.0, %v1396
        %v1398 = vpop.f32.mrf.mxu0
        %v1399 = vpop.f32.mrf.mxu0
        %v1400 = vpop.f32.mrf.mxu0
        %1401 = vdwg.mxu0
        %v1403 = vsel %vm706, %v951, 0
        %1405 = vmatprep.subr.bf16.mxu0 0
        %1406 = vmatpush1.bf16.xpose.msra.mxu0 0
        %1407 = vmatprep.subr.bf16.mxu0 0
        %1408 = vmatpush1.bf16.xpose.msra.mxu0 0
        %1409 = vmatprep.subr.bf16.mxu0 0
        %1410 = vmatpush1.bf16.xpose.msra.mxu0 0
        %1411 = vmatprep.subr.bf16.mxu0 0
        %1412 = vmatpush1.bf16.xpose.msra.mxu0 0
        %1413 = vmatprep.subr.bf16.mxu0 0
        %1414 = vmatpush1.bf16.xpose.msra.mxu0 0
        %1415 = vmatprep.subr.bf16.mxu0 0
        %1416 = vmatpush1.bf16.xpose.msra.mxu0 0
        %1417 = vmatprep.subr.bf16.mxu0 0
        %1418 = vmatpush1.bf16.xpose.msra.mxu0 0
        %1419 = vmatprep.subr.bf16.mxu0 0
        %1420 = vmatpush1.bf16.xpose.msra.mxu0 %v1056
        %1421 = vmatprep.subr.bf16.mxu0 0
        %1422 = vmatpush2.bf16.xpose.msra.mxu0 0
        %1423 = vmatprep.subr.bf16.mxu0 0
        %1424 = vmatpush2.bf16.xpose.msra.mxu0 0
        %1425 = vmatprep.subr.bf16.mxu0 0
        %1426 = vmatpush2.bf16.xpose.msra.mxu0 0
        %1427 = vmatprep.subr.bf16.mxu0 0
        %1428 = vmatpush2.bf16.xpose.msra.mxu0 0
        %1429 = vmatprep.subr.bf16.mxu0 0
        %1430 = vmatpush2.bf16.xpose.msra.mxu0 0
        %1431 = vmatprep.subr.bf16.mxu0 0
        %1432 = vmatpush2.bf16.xpose.msra.mxu0 0
        %1433 = vmatprep.subr.bf16.mxu0 0
        %1434 = vmatpush2.bf16.xpose.msra.mxu0 0
        %1435 = vmatprep.subr.bf16.mxu0 0
        %1436 = vmatpush2.bf16.xpose.msra.mxu0 0
        %1437 = vmatprep.mubr.bf16.mxu0 0
        %1438 = vmatmul.mubr.bf16.gmra.mxu0 %v1403
        %v1439 = vpop.f32.mrf.mxu0
        %v1440 = vadd.f32 0.0, %v1439
        %v1441 = vpop.f32.mrf.mxu0
        %v1442 = vpop.f32.mrf.mxu0
        %v1443 = vpop.f32.mrf.mxu0
        %1444 = vdwg.mxu0
        %v1446 = vsel %vm706, %v952, 0
        %1448 = vmatprep.subr.bf16.mxu0 0
        %1449 = vmatpush1.bf16.xpose.msra.mxu0 0
        %1450 = vmatprep.subr.bf16.mxu0 0
        %1451 = vmatpush1.bf16.xpose.msra.mxu0 0
        %1452 = vmatprep.subr.bf16.mxu0 0
        %1453 = vmatpush1.bf16.xpose.msra.mxu0 0
        %1454 = vmatprep.subr.bf16.mxu0 0
        %1455 = vmatpush1.bf16.xpose.msra.mxu0 0
        %1456 = vmatprep.subr.bf16.mxu0 0
        %1457 = vmatpush1.bf16.xpose.msra.mxu0 0
        %1458 = vmatprep.subr.bf16.mxu0 0
        %1459 = vmatpush1.bf16.xpose.msra.mxu0 0
        %1460 = vmatprep.subr.bf16.mxu0 0
        %1461 = vmatpush1.bf16.xpose.msra.mxu0 0
        %1462 = vmatprep.subr.bf16.mxu0 0
        %1463 = vmatpush1.bf16.xpose.msra.mxu0 %v1102
        %1464 = vmatprep.subr.bf16.mxu0 0
        %1465 = vmatpush2.bf16.xpose.msra.mxu0 0
        %1466 = vmatprep.subr.bf16.mxu0 0
        %1467 = vmatpush2.bf16.xpose.msra.mxu0 0
        %1468 = vmatprep.subr.bf16.mxu0 0
        %1469 = vmatpush2.bf16.xpose.msra.mxu0 0
        %1470 = vmatprep.subr.bf16.mxu0 0
        %1471 = vmatpush2.bf16.xpose.msra.mxu0 0
        %1472 = vmatprep.subr.bf16.mxu0 0
        %1473 = vmatpush2.bf16.xpose.msra.mxu0 0
        %1474 = vmatprep.subr.bf16.mxu0 0
        %1475 = vmatpush2.bf16.xpose.msra.mxu0 0
        %1476 = vmatprep.subr.bf16.mxu0 0
        %1477 = vmatpush2.bf16.xpose.msra.mxu0 0
        %1478 = vmatprep.subr.bf16.mxu0 0
        %1479 = vmatpush2.bf16.xpose.msra.mxu0 0
        %1480 = vmatprep.mubr.bf16.mxu0 0
        %1481 = vmatmul.mubr.bf16.gmra.mxu0 %v1446
        %v1482 = vpop.f32.mrf.mxu0
        %v1483 = vadd.f32 0.0, %v1482
        %v1484 = vpop.f32.mrf.mxu0
        %v1485 = vpop.f32.mrf.mxu0
        %v1486 = vpop.f32.mrf.mxu0
        %1487 = vdwg.mxu0
        %v1489 = vsel %vm706, %v956, 0
        %1491 = vmatprep.subr.bf16.mxu0 0
        %1492 = vmatpush1.bf16.xpose.msra.mxu0 0
        %1493 = vmatprep.subr.bf16.mxu0 0
        %1494 = vmatpush1.bf16.xpose.msra.mxu0 0
        %1495 = vmatprep.subr.bf16.mxu0 0
        %1496 = vmatpush1.bf16.xpose.msra.mxu0 0
        %1497 = vmatprep.subr.bf16.mxu0 0
        %1498 = vmatpush1.bf16.xpose.msra.mxu0 0
        %1499 = vmatprep.subr.bf16.mxu0 0
        %1500 = vmatpush1.bf16.xpose.msra.mxu0 0
        %1501 = vmatprep.subr.bf16.mxu0 0
        %1502 = vmatpush1.bf16.xpose.msra.mxu0 0
        %1503 = vmatprep.subr.bf16.mxu0 0
        %1504 = vmatpush1.bf16.xpose.msra.mxu0 0
        %1505 = vmatprep.subr.bf16.mxu0 0
        %1506 = vmatpush1.bf16.xpose.msra.mxu0 %v964
        %1507 = vmatprep.subr.bf16.mxu0 0
        %1508 = vmatpush2.bf16.xpose.msra.mxu0 0
        %1509 = vmatprep.subr.bf16.mxu0 0
        %1510 = vmatpush2.bf16.xpose.msra.mxu0 0
        %1511 = vmatprep.subr.bf16.mxu0 0
        %1512 = vmatpush2.bf16.xpose.msra.mxu0 0
        %1513 = vmatprep.subr.bf16.mxu0 0
        %1514 = vmatpush2.bf16.xpose.msra.mxu0 0
        %1515 = vmatprep.subr.bf16.mxu0 0
        %1516 = vmatpush2.bf16.xpose.msra.mxu0 0
        %1517 = vmatprep.subr.bf16.mxu0 0
        %1518 = vmatpush2.bf16.xpose.msra.mxu0 0
        %1519 = vmatprep.subr.bf16.mxu0 0
        %1520 = vmatpush2.bf16.xpose.msra.mxu0 0
        %1521 = vmatprep.subr.bf16.mxu0 0
        %1522 = vmatpush2.bf16.xpose.msra.mxu0 0
        %1523 = vmatprep.mubr.bf16.mxu0 0
        %1524 = vmatmul.mubr.bf16.gmra.mxu0 %v1489
        %v1525 = vpop.f32.mrf.mxu0
        %v1526 = vadd.f32 0.0, %v1525
        %v1527 = vpop.f32.mrf.mxu0
        %v1528 = vpop.f32.mrf.mxu0
        %v1529 = vpop.f32.mrf.mxu0
        %1530 = vdwg.mxu0
        %v1532 = vsel %vm706, %v957, 0
        %1534 = vmatprep.subr.bf16.mxu0 0
        %1535 = vmatpush1.bf16.xpose.msra.mxu0 0
        %1536 = vmatprep.subr.bf16.mxu0 0
        %1537 = vmatpush1.bf16.xpose.msra.mxu0 0
        %1538 = vmatprep.subr.bf16.mxu0 0
        %1539 = vmatpush1.bf16.xpose.msra.mxu0 0
        %1540 = vmatprep.subr.bf16.mxu0 0
        %1541 = vmatpush1.bf16.xpose.msra.mxu0 0
        %1542 = vmatprep.subr.bf16.mxu0 0
        %1543 = vmatpush1.bf16.xpose.msra.mxu0 0
        %1544 = vmatprep.subr.bf16.mxu0 0
        %1545 = vmatpush1.bf16.xpose.msra.mxu0 0
        %1546 = vmatprep.subr.bf16.mxu0 0
        %1547 = vmatpush1.bf16.xpose.msra.mxu0 0
        %1548 = vmatprep.subr.bf16.mxu0 0
        %1549 = vmatpush1.bf16.xpose.msra.mxu0 %v1010
        %1550 = vmatprep.subr.bf16.mxu0 0
        %1551 = vmatpush2.bf16.xpose.msra.mxu0 0
        %1552 = vmatprep.subr.bf16.mxu0 0
        %1553 = vmatpush2.bf16.xpose.msra.mxu0 0
        %1554 = vmatprep.subr.bf16.mxu0 0
        %1555 = vmatpush2.bf16.xpose.msra.mxu0 0
        %1556 = vmatprep.subr.bf16.mxu0 0
        %1557 = vmatpush2.bf16.xpose.msra.mxu0 0
        %1558 = vmatprep.subr.bf16.mxu0 0
        %1559 = vmatpush2.bf16.xpose.msra.mxu0 0
        %1560 = vmatprep.subr.bf16.mxu0 0
        %1561 = vmatpush2.bf16.xpose.msra.mxu0 0
        %1562 = vmatprep.subr.bf16.mxu0 0
        %1563 = vmatpush2.bf16.xpose.msra.mxu0 0
        %1564 = vmatprep.subr.bf16.mxu0 0
        %1565 = vmatpush2.bf16.xpose.msra.mxu0 0
        %1566 = vmatprep.mubr.bf16.mxu0 0
        %1567 = vmatmul.mubr.bf16.gmra.mxu0 %v1532
        %v1568 = vpop.f32.mrf.mxu0
        %v1569 = vadd.f32 0.0, %v1568
        %v1570 = vpop.f32.mrf.mxu0
        %v1571 = vpop.f32.mrf.mxu0
        %v1572 = vpop.f32.mrf.mxu0
        %1573 = vdwg.mxu0
        %v1575 = vsel %vm706, %v958, 0
        %1577 = vmatprep.subr.bf16.mxu0 0
        %1578 = vmatpush1.bf16.xpose.msra.mxu0 0
        %1579 = vmatprep.subr.bf16.mxu0 0
        %1580 = vmatpush1.bf16.xpose.msra.mxu0 0
        %1581 = vmatprep.subr.bf16.mxu0 0
        %1582 = vmatpush1.bf16.xpose.msra.mxu0 0
        %1583 = vmatprep.subr.bf16.mxu0 0
        %1584 = vmatpush1.bf16.xpose.msra.mxu0 0
        %1585 = vmatprep.subr.bf16.mxu0 0
        %1586 = vmatpush1.bf16.xpose.msra.mxu0 0
        %1587 = vmatprep.subr.bf16.mxu0 0
        %1588 = vmatpush1.bf16.xpose.msra.mxu0 0
        %1589 = vmatprep.subr.bf16.mxu0 0
        %1590 = vmatpush1.bf16.xpose.msra.mxu0 0
        %1591 = vmatprep.subr.bf16.mxu0 0
        %1592 = vmatpush1.bf16.xpose.msra.mxu0 %v1056
        %1593 = vmatprep.subr.bf16.mxu0 0
        %1594 = vmatpush2.bf16.xpose.msra.mxu0 0
        %1595 = vmatprep.subr.bf16.mxu0 0
        %1596 = vmatpush2.bf16.xpose.msra.mxu0 0
        %1597 = vmatprep.subr.bf16.mxu0 0
        %1598 = vmatpush2.bf16.xpose.msra.mxu0 0
        %1599 = vmatprep.subr.bf16.mxu0 0
        %1600 = vmatpush2.bf16.xpose.msra.mxu0 0
        %1601 = vmatprep.subr.bf16.mxu0 0
        %1602 = vmatpush2.bf16.xpose.msra.mxu0 0
        %1603 = vmatprep.subr.bf16.mxu0 0
        %1604 = vmatpush2.bf16.xpose.msra.mxu0 0
        %1605 = vmatprep.subr.bf16.mxu0 0
        %1606 = vmatpush2.bf16.xpose.msra.mxu0 0
        %1607 = vmatprep.subr.bf16.mxu0 0
        %1608 = vmatpush2.bf16.xpose.msra.mxu0 0
        %1609 = vmatprep.mubr.bf16.mxu0 0
        %1610 = vmatmul.mubr.bf16.gmra.mxu0 %v1575
        %v1611 = vpop.f32.mrf.mxu0
        %v1612 = vadd.f32 0.0, %v1611
        %v1613 = vpop.f32.mrf.mxu0
        %v1614 = vpop.f32.mrf.mxu0
        %v1615 = vpop.f32.mrf.mxu0
        %1616 = vdwg.mxu0
        %v1618 = vsel %vm706, %v959, 0
        %1620 = vmatprep.subr.bf16.mxu0 0
        %1621 = vmatpush1.bf16.xpose.msra.mxu0 0
        %1622 = vmatprep.subr.bf16.mxu0 0
        %1623 = vmatpush1.bf16.xpose.msra.mxu0 0
        %1624 = vmatprep.subr.bf16.mxu0 0
        %1625 = vmatpush1.bf16.xpose.msra.mxu0 0
        %1626 = vmatprep.subr.bf16.mxu0 0
        %1627 = vmatpush1.bf16.xpose.msra.mxu0 0
        %1628 = vmatprep.subr.bf16.mxu0 0
        %1629 = vmatpush1.bf16.xpose.msra.mxu0 0
        %1630 = vmatprep.subr.bf16.mxu0 0
        %1631 = vmatpush1.bf16.xpose.msra.mxu0 0
        %1632 = vmatprep.subr.bf16.mxu0 0
        %1633 = vmatpush1.bf16.xpose.msra.mxu0 0
        %1634 = vmatprep.subr.bf16.mxu0 0
        %1635 = vmatpush1.bf16.xpose.msra.mxu0 %v1102
        %1636 = vmatprep.subr.bf16.mxu0 0
        %1637 = vmatpush2.bf16.xpose.msra.mxu0 0
        %1638 = vmatprep.subr.bf16.mxu0 0
        %1639 = vmatpush2.bf16.xpose.msra.mxu0 0
        %1640 = vmatprep.subr.bf16.mxu0 0
        %1641 = vmatpush2.bf16.xpose.msra.mxu0 0
        %1642 = vmatprep.subr.bf16.mxu0 0
        %1643 = vmatpush2.bf16.xpose.msra.mxu0 0
        %1644 = vmatprep.subr.bf16.mxu0 0
        %1645 = vmatpush2.bf16.xpose.msra.mxu0 0
        %1646 = vmatprep.subr.bf16.mxu0 0
        %1647 = vmatpush2.bf16.xpose.msra.mxu0 0
        %1648 = vmatprep.subr.bf16.mxu0 0
        %1649 = vmatpush2.bf16.xpose.msra.mxu0 0
        %1650 = vmatprep.subr.bf16.mxu0 0
        %1651 = vmatpush2.bf16.xpose.msra.mxu0 0
        %1652 = vmatprep.mubr.bf16.mxu0 0
        %1653 = vmatmul.mubr.bf16.gmra.mxu0 %v1618
        %v1654 = vpop.f32.mrf.mxu0
        %v1655 = vadd.f32 0.0, %v1654
        %v1656 = vpop.f32.mrf.mxu0
        %v1657 = vpop.f32.mrf.mxu0
        %v1658 = vpop.f32.mrf.mxu0
        %1659 = vdwg.mxu0
        %vm1660 = vcmask 64512
        %v1661 = vsel %vm1660, %v1001, -inf
        %1662 = vmax.xlane.f32.xlu0 %v1661
        %v1663 = vpop.xlane.xlu0 %1662
        %v1664 = vsel %vm1660, %v1047, -inf
        %1665 = vmax.xlane.f32.xlu0 %v1664
        %v1666 = vpop.xlane.xlu0 %1665
        %v1667 = vsel %vm1660, %v1093, -inf
        %1668 = vmax.xlane.f32.xlu0 %v1667
        %v1669 = vpop.xlane.xlu0 %1668
        %v1670 = vsel %vm1660, %v1139, -inf
        %1671 = vmax.xlane.f32.xlu0 %v1670
        %v1672 = vpop.xlane.xlu0 %1671
        %v1673 = vsel %vm1660, %v1182, -inf
        %1674 = vmax.xlane.f32.xlu0 %v1673
        %v1675 = vpop.xlane.xlu0 %1674
        %v1676 = vsel %vm1660, %v1225, -inf
        %1677 = vmax.xlane.f32.xlu0 %v1676
        %v1678 = vpop.xlane.xlu0 %1677
        %v1679 = vsel %vm1660, %v1268, -inf
        %1680 = vmax.xlane.f32.xlu0 %v1679
        %v1681 = vpop.xlane.xlu0 %1680
        %v1682 = vsel %vm1660, %v1311, -inf
        %1683 = vmax.xlane.f32.xlu0 %v1682
        %v1684 = vpop.xlane.xlu0 %1683
        %v1685 = vsel %vm1660, %v1354, -inf
        %1686 = vmax.xlane.f32.xlu0 %v1685
        %v1687 = vpop.xlane.xlu0 %1686
        %v1688 = vsel %vm1660, %v1397, -inf
        %1689 = vmax.xlane.f32.xlu0 %v1688
        %v1690 = vpop.xlane.xlu0 %1689
        %v1691 = vsel %vm1660, %v1440, -inf
        %1692 = vmax.xlane.f32.xlu0 %v1691
        %v1693 = vpop.xlane.xlu0 %1692
        %v1694 = vsel %vm1660, %v1483, -inf
        %1695 = vmax.xlane.f32.xlu0 %v1694
        %v1696 = vpop.xlane.xlu0 %1695
        %v1697 = vsel %vm1660, %v1526, -inf
        %1698 = vmax.xlane.f32.xlu0 %v1697
        %v1699 = vpop.xlane.xlu0 %1698
        %v1700 = vsel %vm1660, %v1569, -inf
        %1701 = vmax.xlane.f32.xlu0 %v1700
        %v1702 = vpop.xlane.xlu0 %1701
        %v1703 = vsel %vm1660, %v1612, -inf
        %1704 = vmax.xlane.f32.xlu0 %v1703
        %v1705 = vpop.xlane.xlu0 %1704
        %v1706 = vsel %vm1660, %v1655, -inf
        %1707 = vmax.xlane.f32.xlu0 %v1706
        %v1708 = vpop.xlane.xlu0 %1707
        %v1709 = vsub.f32 %v1001, %v1663
        %v1710 = vsub.f32 %v1047, %v1666
        %v1711 = vsub.f32 %v1093, %v1669
        %v1712 = vsub.f32 %v1139, %v1672
        %v1713 = vsub.f32 %v1182, %v1675
        %v1714 = vsub.f32 %v1225, %v1678
        %v1715 = vsub.f32 %v1268, %v1681
        %v1716 = vsub.f32 %v1311, %v1684
        %v1717 = vsub.f32 %v1354, %v1687
        %v1718 = vsub.f32 %v1397, %v1690
        %v1719 = vsub.f32 %v1440, %v1693
        %v1720 = vsub.f32 %v1483, %v1696
        %v1721 = vsub.f32 %v1526, %v1699
        %v1722 = vsub.f32 %v1569, %v1702
        %v1723 = vsub.f32 %v1612, %v1705
        %v1724 = vsub.f32 %v1655, %v1708
        %v1725 = vmul.f32 %v1709, 1.442695
        %v1726 = vpow.pop %v1725
        %v1727 = vmul.f32 %v1710, 1.442695
        %v1728 = vpow.pop %v1727
        %v1729 = vmul.f32 %v1711, 1.442695
        %v1730 = vpow.pop %v1729
        %v1731 = vmul.f32 %v1712, 1.442695
        %v1732 = vpow.pop %v1731
        %v1733 = vmul.f32 %v1713, 1.442695
        %v1734 = vpow.pop %v1733
        %v1735 = vmul.f32 %v1714, 1.442695
        %v1736 = vpow.pop %v1735
        %v1737 = vmul.f32 %v1715, 1.442695
        %v1738 = vpow.pop %v1737
        %v1739 = vmul.f32 %v1716, 1.442695
        %v1740 = vpow.pop %v1739
        %v1741 = vmul.f32 %v1717, 1.442695
        %v1742 = vpow.pop %v1741
        %v1743 = vmul.f32 %v1718, 1.442695
        %v1744 = vpow.pop %v1743
        %v1745 = vmul.f32 %v1719, 1.442695
        %v1746 = vpow.pop %v1745
        %v1747 = vmul.f32 %v1720, 1.442695
        %v1748 = vpow.pop %v1747
        %v1749 = vmul.f32 %v1721, 1.442695
        %v1750 = vpow.pop %v1749
        %v1751 = vmul.f32 %v1722, 1.442695
        %v1752 = vpow.pop %v1751
        %v1753 = vmul.f32 %v1723, 1.442695
        %v1754 = vpow.pop %v1753
        %v1755 = vmul.f32 %v1724, 1.442695
        %v1756 = vpow.pop %v1755
        %v1757 = vsel %vm1660, %v1726, 0.0
        %1758 = vadd.xlane.f32.xlu0 %v1757
        %v1759 = vpop.xlane.xlu0 %1758
        %v1760 = vsel %vm1660, %v1728, 0.0
        %1761 = vadd.xlane.f32.xlu0 %v1760
        %v1762 = vpop.xlane.xlu0 %1761
        %v1763 = vsel %vm1660, %v1730, 0.0
        %1764 = vadd.xlane.f32.xlu0 %v1763
        %v1765 = vpop.xlane.xlu0 %1764
        %v1766 = vsel %vm1660, %v1732, 0.0
        %1767 = vadd.xlane.f32.xlu0 %v1766
        %v1768 = vpop.xlane.xlu0 %1767
        %v1769 = vsel %vm1660, %v1734, 0.0
        %1770 = vadd.xlane.f32.xlu0 %v1769
        %v1771 = vpop.xlane.xlu0 %1770
        %v1772 = vsel %vm1660, %v1736, 0.0
        %1773 = vadd.xlane.f32.xlu0 %v1772
        %v1774 = vpop.xlane.xlu0 %1773
        %v1775 = vsel %vm1660, %v1738, 0.0
        %1776 = vadd.xlane.f32.xlu0 %v1775
        %v1777 = vpop.xlane.xlu0 %1776
        %v1778 = vsel %vm1660, %v1740, 0.0
        %1779 = vadd.xlane.f32.xlu0 %v1778
        %v1780 = vpop.xlane.xlu0 %1779
        %v1781 = vsel %vm1660, %v1742, 0.0
        %1782 = vadd.xlane.f32.xlu0 %v1781
        %v1783 = vpop.xlane.xlu0 %1782
        %v1784 = vsel %vm1660, %v1744, 0.0
        %1785 = vadd.xlane.f32.xlu0 %v1784
        %v1786 = vpop.xlane.xlu0 %1785
        %v1787 = vsel %vm1660, %v1746, 0.0
        %1788 = vadd.xlane.f32.xlu0 %v1787
        %v1789 = vpop.xlane.xlu0 %1788
        %v1790 = vsel %vm1660, %v1748, 0.0
        %1791 = vadd.xlane.f32.xlu0 %v1790
        %v1792 = vpop.xlane.xlu0 %1791
        %v1793 = vsel %vm1660, %v1750, 0.0
        %1794 = vadd.xlane.f32.xlu0 %v1793
        %v1795 = vpop.xlane.xlu0 %1794
        %v1796 = vsel %vm1660, %v1752, 0.0
        %1797 = vadd.xlane.f32.xlu0 %v1796
        %v1798 = vpop.xlane.xlu0 %1797
        %v1799 = vsel %vm1660, %v1754, 0.0
        %1800 = vadd.xlane.f32.xlu0 %v1799
        %v1801 = vpop.xlane.xlu0 %1800
        %v1802 = vsel %vm1660, %v1756, 0.0
        %1803 = vadd.xlane.f32.xlu0 %v1802
        %v1804 = vpop.xlane.xlu0 %1803
        %v1805 = vrcp.pop %v1759
        %v1806 = vrcp.pop %v1762
        %v1807 = vrcp.pop %v1765
        %v1808 = vrcp.pop %v1768
        %v1809 = vrcp.pop %v1771
        %v1810 = vrcp.pop %v1774
        %v1811 = vrcp.pop %v1777
        %v1812 = vrcp.pop %v1780
        %v1813 = vrcp.pop %v1783
        %v1814 = vrcp.pop %v1786
        %v1815 = vrcp.pop %v1789
        %v1816 = vrcp.pop %v1792
        %v1817 = vrcp.pop %v1795
        %v1818 = vrcp.pop %v1798
        %v1819 = vrcp.pop %v1801
        %v1820 = vrcp.pop %v1804
        %v1821 = vmul.f32 %v1726, %v1805
        %v1822 = vmul.f32 %v1728, %v1806
        %v1823 = vmul.f32 %v1730, %v1807
        %v1824 = vmul.f32 %v1732, %v1808
        %v1825 = vmul.f32 %v1734, %v1809
        %v1826 = vmul.f32 %v1736, %v1810
        %v1827 = vmul.f32 %v1738, %v1811
        %v1828 = vmul.f32 %v1740, %v1812
        %v1829 = vmul.f32 %v1742, %v1813
        %v1830 = vmul.f32 %v1744, %v1814
        %v1831 = vmul.f32 %v1746, %v1815
        %v1832 = vmul.f32 %v1748, %v1816
        %v1833 = vmul.f32 %v1750, %v1817
        %v1834 = vmul.f32 %v1752, %v1818
        %v1835 = vmul.f32 %v1754, %v1819
        %v1836 = vmul.f32 %v1756, %v1820
        %v1837 = vpack.c.bf16 %v1821, %v1821
        %v1838 = vpack.c.bf16 %v1822, %v1822
        %v1839 = vpack.c.bf16 %v1823, %v1823
        %v1840 = vpack.c.bf16 %v1824, %v1824
        %v1841 = vpack.c.bf16 %v1825, %v1825
        %v1842 = vpack.c.bf16 %v1826, %v1826
        %v1843 = vpack.c.bf16 %v1827, %v1827
        %v1844 = vpack.c.bf16 %v1828, %v1828
        %v1845 = vpack.c.bf16 %v1829, %v1829
        %v1846 = vpack.c.bf16 %v1830, %v1830
        %v1847 = vpack.c.bf16 %v1831, %v1831
        %v1848 = vpack.c.bf16 %v1832, %v1832
        %v1849 = vpack.c.bf16 %v1833, %v1833
        %v1850 = vpack.c.bf16 %v1834, %v1834
        %v1851 = vpack.c.bf16 %v1835, %v1835
        %v1852 = vpack.c.bf16 %v1836, %v1836
        %v1854 = vsel %vm1660, %v1837, 0
        %vm1856 = vcmask 1043456
        %v1858 = vsel %vm1856, %v914, 0
        %1860 = vmatprep.subr.bf16.mxu0 0
        %1861 = vmatpush1.bf16.msra.mxu0 0
        %1862 = vmatprep.subr.bf16.mxu0 0
        %1863 = vmatpush1.bf16.msra.mxu0 0
        %1864 = vmatprep.subr.bf16.mxu0 0
        %1865 = vmatpush1.bf16.msra.mxu0 0
        %1866 = vmatprep.subr.bf16.mxu0 0
        %1867 = vmatpush1.bf16.msra.mxu0 0
        %1868 = vmatprep.subr.bf16.mxu0 0
        %1869 = vmatpush1.bf16.msra.mxu0 0
        %1870 = vmatprep.subr.bf16.mxu0 0
        %1871 = vmatpush1.bf16.msra.mxu0 0
        %1872 = vmatprep.subr.bf16.mxu0 0
        %1873 = vmatpush1.bf16.msra.mxu0 0
        %1874 = vmatprep.subr.bf16.mxu0 0
        %1875 = vmatpush1.bf16.msra.mxu0 %v1858
        %1876 = vmatprep.subr.bf16.mxu0 0
        %1877 = vmatpush2.bf16.msra.mxu0 0
        %1878 = vmatprep.subr.bf16.mxu0 0
        %1879 = vmatpush2.bf16.msra.mxu0 0
        %1880 = vmatprep.subr.bf16.mxu0 0
        %1881 = vmatpush2.bf16.msra.mxu0 0
        %1882 = vmatprep.subr.bf16.mxu0 0
        %1883 = vmatpush2.bf16.msra.mxu0 0
        %1884 = vmatprep.subr.bf16.mxu0 0
        %1885 = vmatpush2.bf16.msra.mxu0 0
        %1886 = vmatprep.subr.bf16.mxu0 0
        %1887 = vmatpush2.bf16.msra.mxu0 0
        %1888 = vmatprep.subr.bf16.mxu0 0
        %1889 = vmatpush2.bf16.msra.mxu0 0
        %1890 = vmatprep.subr.bf16.mxu0 0
        %1891 = vmatpush2.bf16.msra.mxu0 0
        %1892 = vmatprep.mubr.bf16.mxu0 0
        %1893 = vmatmul.mubr.bf16.gmra.mxu0 %v1854
        %v1894 = vpop.f32.mrf.mxu0
        %v1895 = vadd.f32 0.0, %v1894
        %v1896 = vpop.f32.mrf.mxu0
        %v1897 = vpop.f32.mrf.mxu0
        %v1898 = vpop.f32.mrf.mxu0
        %1899 = vdwg.mxu0
        %v1901 = vsel %vm1660, %v1838, 0
        %v1904 = vsel %vm1856, %v915, 0
        %1906 = vmatprep.subr.bf16.mxu0 0
        %1907 = vmatpush1.bf16.msra.mxu0 0
        %1908 = vmatprep.subr.bf16.mxu0 0
        %1909 = vmatpush1.bf16.msra.mxu0 0
        %1910 = vmatprep.subr.bf16.mxu0 0
        %1911 = vmatpush1.bf16.msra.mxu0 0
        %1912 = vmatprep.subr.bf16.mxu0 0
        %1913 = vmatpush1.bf16.msra.mxu0 0
        %1914 = vmatprep.subr.bf16.mxu0 0
        %1915 = vmatpush1.bf16.msra.mxu0 0
        %1916 = vmatprep.subr.bf16.mxu0 0
        %1917 = vmatpush1.bf16.msra.mxu0 0
        %1918 = vmatprep.subr.bf16.mxu0 0
        %1919 = vmatpush1.bf16.msra.mxu0 0
        %1920 = vmatprep.subr.bf16.mxu0 0
        %1921 = vmatpush1.bf16.msra.mxu0 %v1904
        %1922 = vmatprep.subr.bf16.mxu0 0
        %1923 = vmatpush2.bf16.msra.mxu0 0
        %1924 = vmatprep.subr.bf16.mxu0 0
        %1925 = vmatpush2.bf16.msra.mxu0 0
        %1926 = vmatprep.subr.bf16.mxu0 0
        %1927 = vmatpush2.bf16.msra.mxu0 0
        %1928 = vmatprep.subr.bf16.mxu0 0
        %1929 = vmatpush2.bf16.msra.mxu0 0
        %1930 = vmatprep.subr.bf16.mxu0 0
        %1931 = vmatpush2.bf16.msra.mxu0 0
        %1932 = vmatprep.subr.bf16.mxu0 0
        %1933 = vmatpush2.bf16.msra.mxu0 0
        %1934 = vmatprep.subr.bf16.mxu0 0
        %1935 = vmatpush2.bf16.msra.mxu0 0
        %1936 = vmatprep.subr.bf16.mxu0 0
        %1937 = vmatpush2.bf16.msra.mxu0 0
        %1938 = vmatprep.mubr.bf16.mxu0 0
        %1939 = vmatmul.mubr.bf16.gmra.mxu0 %v1901
        %v1940 = vpop.f32.mrf.mxu0
        %v1941 = vadd.f32 0.0, %v1940
        %v1942 = vpop.f32.mrf.mxu0
        %v1943 = vpop.f32.mrf.mxu0
        %v1944 = vpop.f32.mrf.mxu0
        %1945 = vdwg.mxu0
        %v1947 = vsel %vm1660, %v1839, 0
        %v1950 = vsel %vm1856, %v916, 0
        %1952 = vmatprep.subr.bf16.mxu0 0
        %1953 = vmatpush1.bf16.msra.mxu0 0
        %1954 = vmatprep.subr.bf16.mxu0 0
        %1955 = vmatpush1.bf16.msra.mxu0 0
        %1956 = vmatprep.subr.bf16.mxu0 0
        %1957 = vmatpush1.bf16.msra.mxu0 0
        %1958 = vmatprep.subr.bf16.mxu0 0
        %1959 = vmatpush1.bf16.msra.mxu0 0
        %1960 = vmatprep.subr.bf16.mxu0 0
        %1961 = vmatpush1.bf16.msra.mxu0 0
        %1962 = vmatprep.subr.bf16.mxu0 0
        %1963 = vmatpush1.bf16.msra.mxu0 0
        %1964 = vmatprep.subr.bf16.mxu0 0
        %1965 = vmatpush1.bf16.msra.mxu0 0
        %1966 = vmatprep.subr.bf16.mxu0 0
        %1967 = vmatpush1.bf16.msra.mxu0 %v1950
        %1968 = vmatprep.subr.bf16.mxu0 0
        %1969 = vmatpush2.bf16.msra.mxu0 0
        %1970 = vmatprep.subr.bf16.mxu0 0
        %1971 = vmatpush2.bf16.msra.mxu0 0
        %1972 = vmatprep.subr.bf16.mxu0 0
        %1973 = vmatpush2.bf16.msra.mxu0 0
        %1974 = vmatprep.subr.bf16.mxu0 0
        %1975 = vmatpush2.bf16.msra.mxu0 0
        %1976 = vmatprep.subr.bf16.mxu0 0
        %1977 = vmatpush2.bf16.msra.mxu0 0
        %1978 = vmatprep.subr.bf16.mxu0 0
        %1979 = vmatpush2.bf16.msra.mxu0 0
        %1980 = vmatprep.subr.bf16.mxu0 0
        %1981 = vmatpush2.bf16.msra.mxu0 0
        %1982 = vmatprep.subr.bf16.mxu0 0
        %1983 = vmatpush2.bf16.msra.mxu0 0
        %1984 = vmatprep.mubr.bf16.mxu0 0
        %1985 = vmatmul.mubr.bf16.gmra.mxu0 %v1947
        %v1986 = vpop.f32.mrf.mxu0
        %v1987 = vadd.f32 0.0, %v1986
        %v1988 = vpop.f32.mrf.mxu0
        %v1989 = vpop.f32.mrf.mxu0
        %v1990 = vpop.f32.mrf.mxu0
        %1991 = vdwg.mxu0
        %v1993 = vsel %vm1660, %v1840, 0
        %v1996 = vsel %vm1856, %v917, 0
        %1998 = vmatprep.subr.bf16.mxu0 0
        %1999 = vmatpush1.bf16.msra.mxu0 0
        %2000 = vmatprep.subr.bf16.mxu0 0
        %2001 = vmatpush1.bf16.msra.mxu0 0
        %2002 = vmatprep.subr.bf16.mxu0 0
        %2003 = vmatpush1.bf16.msra.mxu0 0
        %2004 = vmatprep.subr.bf16.mxu0 0
        %2005 = vmatpush1.bf16.msra.mxu0 0
        %2006 = vmatprep.subr.bf16.mxu0 0
        %2007 = vmatpush1.bf16.msra.mxu0 0
        %2008 = vmatprep.subr.bf16.mxu0 0
        %2009 = vmatpush1.bf16.msra.mxu0 0
        %2010 = vmatprep.subr.bf16.mxu0 0
        %2011 = vmatpush1.bf16.msra.mxu0 0
        %2012 = vmatprep.subr.bf16.mxu0 0
        %2013 = vmatpush1.bf16.msra.mxu0 %v1996
        %2014 = vmatprep.subr.bf16.mxu0 0
        %2015 = vmatpush2.bf16.msra.mxu0 0
        %2016 = vmatprep.subr.bf16.mxu0 0
        %2017 = vmatpush2.bf16.msra.mxu0 0
        %2018 = vmatprep.subr.bf16.mxu0 0
        %2019 = vmatpush2.bf16.msra.mxu0 0
        %2020 = vmatprep.subr.bf16.mxu0 0
        %2021 = vmatpush2.bf16.msra.mxu0 0
        %2022 = vmatprep.subr.bf16.mxu0 0
        %2023 = vmatpush2.bf16.msra.mxu0 0
        %2024 = vmatprep.subr.bf16.mxu0 0
        %2025 = vmatpush2.bf16.msra.mxu0 0
        %2026 = vmatprep.subr.bf16.mxu0 0
        %2027 = vmatpush2.bf16.msra.mxu0 0
        %2028 = vmatprep.subr.bf16.mxu0 0
        %2029 = vmatpush2.bf16.msra.mxu0 0
        %2030 = vmatprep.mubr.bf16.mxu0 0
        %2031 = vmatmul.mubr.bf16.gmra.mxu0 %v1993
        %v2032 = vpop.f32.mrf.mxu0
        %v2033 = vadd.f32 0.0, %v2032
        %v2034 = vpop.f32.mrf.mxu0
        %v2035 = vpop.f32.mrf.mxu0
        %v2036 = vpop.f32.mrf.mxu0
        %2037 = vdwg.mxu0
        %v2039 = vsel %vm1660, %v1841, 0
        %2041 = vmatprep.subr.bf16.mxu0 0
        %2042 = vmatpush1.bf16.msra.mxu0 0
        %2043 = vmatprep.subr.bf16.mxu0 0
        %2044 = vmatpush1.bf16.msra.mxu0 0
        %2045 = vmatprep.subr.bf16.mxu0 0
        %2046 = vmatpush1.bf16.msra.mxu0 0
        %2047 = vmatprep.subr.bf16.mxu0 0
        %2048 = vmatpush1.bf16.msra.mxu0 0
        %2049 = vmatprep.subr.bf16.mxu0 0
        %2050 = vmatpush1.bf16.msra.mxu0 0
        %2051 = vmatprep.subr.bf16.mxu0 0
        %2052 = vmatpush1.bf16.msra.mxu0 0
        %2053 = vmatprep.subr.bf16.mxu0 0
        %2054 = vmatpush1.bf16.msra.mxu0 0
        %2055 = vmatprep.subr.bf16.mxu0 0
        %2056 = vmatpush1.bf16.msra.mxu0 %v1858
        %2057 = vmatprep.subr.bf16.mxu0 0
        %2058 = vmatpush2.bf16.msra.mxu0 0
        %2059 = vmatprep.subr.bf16.mxu0 0
        %2060 = vmatpush2.bf16.msra.mxu0 0
        %2061 = vmatprep.subr.bf16.mxu0 0
        %2062 = vmatpush2.bf16.msra.mxu0 0
        %2063 = vmatprep.subr.bf16.mxu0 0
        %2064 = vmatpush2.bf16.msra.mxu0 0
        %2065 = vmatprep.subr.bf16.mxu0 0
        %2066 = vmatpush2.bf16.msra.mxu0 0
        %2067 = vmatprep.subr.bf16.mxu0 0
        %2068 = vmatpush2.bf16.msra.mxu0 0
        %2069 = vmatprep.subr.bf16.mxu0 0
        %2070 = vmatpush2.bf16.msra.mxu0 0
        %2071 = vmatprep.subr.bf16.mxu0 0
        %2072 = vmatpush2.bf16.msra.mxu0 0
        %2073 = vmatprep.mubr.bf16.mxu0 0
        %2074 = vmatmul.mubr.bf16.gmra.mxu0 %v2039
        %v2075 = vpop.f32.mrf.mxu0
        %v2076 = vadd.f32 0.0, %v2075
        %v2077 = vpop.f32.mrf.mxu0
        %v2078 = vpop.f32.mrf.mxu0
        %v2079 = vpop.f32.mrf.mxu0
        %2080 = vdwg.mxu0
        %v2082 = vsel %vm1660, %v1842, 0
        %2084 = vmatprep.subr.bf16.mxu0 0
        %2085 = vmatpush1.bf16.msra.mxu0 0
        %2086 = vmatprep.subr.bf16.mxu0 0
        %2087 = vmatpush1.bf16.msra.mxu0 0
        %2088 = vmatprep.subr.bf16.mxu0 0
        %2089 = vmatpush1.bf16.msra.mxu0 0
        %2090 = vmatprep.subr.bf16.mxu0 0
        %2091 = vmatpush1.bf16.msra.mxu0 0
        %2092 = vmatprep.subr.bf16.mxu0 0
        %2093 = vmatpush1.bf16.msra.mxu0 0
        %2094 = vmatprep.subr.bf16.mxu0 0
        %2095 = vmatpush1.bf16.msra.mxu0 0
        %2096 = vmatprep.subr.bf16.mxu0 0
        %2097 = vmatpush1.bf16.msra.mxu0 0
        %2098 = vmatprep.subr.bf16.mxu0 0
        %2099 = vmatpush1.bf16.msra.mxu0 %v1904
        %2100 = vmatprep.subr.bf16.mxu0 0
        %2101 = vmatpush2.bf16.msra.mxu0 0
        %2102 = vmatprep.subr.bf16.mxu0 0
        %2103 = vmatpush2.bf16.msra.mxu0 0
        %2104 = vmatprep.subr.bf16.mxu0 0
        %2105 = vmatpush2.bf16.msra.mxu0 0
        %2106 = vmatprep.subr.bf16.mxu0 0
        %2107 = vmatpush2.bf16.msra.mxu0 0
        %2108 = vmatprep.subr.bf16.mxu0 0
        %2109 = vmatpush2.bf16.msra.mxu0 0
        %2110 = vmatprep.subr.bf16.mxu0 0
        %2111 = vmatpush2.bf16.msra.mxu0 0
        %2112 = vmatprep.subr.bf16.mxu0 0
        %2113 = vmatpush2.bf16.msra.mxu0 0
        %2114 = vmatprep.subr.bf16.mxu0 0
        %2115 = vmatpush2.bf16.msra.mxu0 0
        %2116 = vmatprep.mubr.bf16.mxu0 0
        %2117 = vmatmul.mubr.bf16.gmra.mxu0 %v2082
        %v2118 = vpop.f32.mrf.mxu0
        %v2119 = vadd.f32 0.0, %v2118
        %v2120 = vpop.f32.mrf.mxu0
        %v2121 = vpop.f32.mrf.mxu0
        %v2122 = vpop.f32.mrf.mxu0
        %2123 = vdwg.mxu0
        %v2125 = vsel %vm1660, %v1843, 0
        %2127 = vmatprep.subr.bf16.mxu0 0
        %2128 = vmatpush1.bf16.msra.mxu0 0
        %2129 = vmatprep.subr.bf16.mxu0 0
        %2130 = vmatpush1.bf16.msra.mxu0 0
        %2131 = vmatprep.subr.bf16.mxu0 0
        %2132 = vmatpush1.bf16.msra.mxu0 0
        %2133 = vmatprep.subr.bf16.mxu0 0
        %2134 = vmatpush1.bf16.msra.mxu0 0
        %2135 = vmatprep.subr.bf16.mxu0 0
        %2136 = vmatpush1.bf16.msra.mxu0 0
        %2137 = vmatprep.subr.bf16.mxu0 0
        %2138 = vmatpush1.bf16.msra.mxu0 0
        %2139 = vmatprep.subr.bf16.mxu0 0
        %2140 = vmatpush1.bf16.msra.mxu0 0
        %2141 = vmatprep.subr.bf16.mxu0 0
        %2142 = vmatpush1.bf16.msra.mxu0 %v1950
        %2143 = vmatprep.subr.bf16.mxu0 0
        %2144 = vmatpush2.bf16.msra.mxu0 0
        %2145 = vmatprep.subr.bf16.mxu0 0
        %2146 = vmatpush2.bf16.msra.mxu0 0
        %2147 = vmatprep.subr.bf16.mxu0 0
        %2148 = vmatpush2.bf16.msra.mxu0 0
        %2149 = vmatprep.subr.bf16.mxu0 0
        %2150 = vmatpush2.bf16.msra.mxu0 0
        %2151 = vmatprep.subr.bf16.mxu0 0
        %2152 = vmatpush2.bf16.msra.mxu0 0
        %2153 = vmatprep.subr.bf16.mxu0 0
        %2154 = vmatpush2.bf16.msra.mxu0 0
        %2155 = vmatprep.subr.bf16.mxu0 0
        %2156 = vmatpush2.bf16.msra.mxu0 0
        %2157 = vmatprep.subr.bf16.mxu0 0
        %2158 = vmatpush2.bf16.msra.mxu0 0
        %2159 = vmatprep.mubr.bf16.mxu0 0
        %2160 = vmatmul.mubr.bf16.gmra.mxu0 %v2125
        %v2161 = vpop.f32.mrf.mxu0
        %v2162 = vadd.f32 0.0, %v2161
        %v2163 = vpop.f32.mrf.mxu0
        %v2164 = vpop.f32.mrf.mxu0
        %v2165 = vpop.f32.mrf.mxu0
        %2166 = vdwg.mxu0
        %v2168 = vsel %vm1660, %v1844, 0
        %2170 = vmatprep.subr.bf16.mxu0 0
        %2171 = vmatpush1.bf16.msra.mxu0 0
        %2172 = vmatprep.subr.bf16.mxu0 0
        %2173 = vmatpush1.bf16.msra.mxu0 0
        %2174 = vmatprep.subr.bf16.mxu0 0
        %2175 = vmatpush1.bf16.msra.mxu0 0
        %2176 = vmatprep.subr.bf16.mxu0 0
        %2177 = vmatpush1.bf16.msra.mxu0 0
        %2178 = vmatprep.subr.bf16.mxu0 0
        %2179 = vmatpush1.bf16.msra.mxu0 0
        %2180 = vmatprep.subr.bf16.mxu0 0
        %2181 = vmatpush1.bf16.msra.mxu0 0
        %2182 = vmatprep.subr.bf16.mxu0 0
        %2183 = vmatpush1.bf16.msra.mxu0 0
        %2184 = vmatprep.subr.bf16.mxu0 0
        %2185 = vmatpush1.bf16.msra.mxu0 %v1996
        %2186 = vmatprep.subr.bf16.mxu0 0
        %2187 = vmatpush2.bf16.msra.mxu0 0
        %2188 = vmatprep.subr.bf16.mxu0 0
        %2189 = vmatpush2.bf16.msra.mxu0 0
        %2190 = vmatprep.subr.bf16.mxu0 0
        %2191 = vmatpush2.bf16.msra.mxu0 0
        %2192 = vmatprep.subr.bf16.mxu0 0
        %2193 = vmatpush2.bf16.msra.mxu0 0
        %2194 = vmatprep.subr.bf16.mxu0 0
        %2195 = vmatpush2.bf16.msra.mxu0 0
        %2196 = vmatprep.subr.bf16.mxu0 0
        %2197 = vmatpush2.bf16.msra.mxu0 0
        %2198 = vmatprep.subr.bf16.mxu0 0
        %2199 = vmatpush2.bf16.msra.mxu0 0
        %2200 = vmatprep.subr.bf16.mxu0 0
        %2201 = vmatpush2.bf16.msra.mxu0 0
        %2202 = vmatprep.mubr.bf16.mxu0 0
        %2203 = vmatmul.mubr.bf16.gmra.mxu0 %v2168
        %v2204 = vpop.f32.mrf.mxu0
        %v2205 = vadd.f32 0.0, %v2204
        %v2206 = vpop.f32.mrf.mxu0
        %v2207 = vpop.f32.mrf.mxu0
        %v2208 = vpop.f32.mrf.mxu0
        %2209 = vdwg.mxu0
        %v2211 = vsel %vm1660, %v1845, 0
        %2213 = vmatprep.subr.bf16.mxu0 0
        %2214 = vmatpush1.bf16.msra.mxu0 0
        %2215 = vmatprep.subr.bf16.mxu0 0
        %2216 = vmatpush1.bf16.msra.mxu0 0
        %2217 = vmatprep.subr.bf16.mxu0 0
        %2218 = vmatpush1.bf16.msra.mxu0 0
        %2219 = vmatprep.subr.bf16.mxu0 0
        %2220 = vmatpush1.bf16.msra.mxu0 0
        %2221 = vmatprep.subr.bf16.mxu0 0
        %2222 = vmatpush1.bf16.msra.mxu0 0
        %2223 = vmatprep.subr.bf16.mxu0 0
        %2224 = vmatpush1.bf16.msra.mxu0 0
        %2225 = vmatprep.subr.bf16.mxu0 0
        %2226 = vmatpush1.bf16.msra.mxu0 0
        %2227 = vmatprep.subr.bf16.mxu0 0
        %2228 = vmatpush1.bf16.msra.mxu0 %v1858
        %2229 = vmatprep.subr.bf16.mxu0 0
        %2230 = vmatpush2.bf16.msra.mxu0 0
        %2231 = vmatprep.subr.bf16.mxu0 0
        %2232 = vmatpush2.bf16.msra.mxu0 0
        %2233 = vmatprep.subr.bf16.mxu0 0
        %2234 = vmatpush2.bf16.msra.mxu0 0
        %2235 = vmatprep.subr.bf16.mxu0 0
        %2236 = vmatpush2.bf16.msra.mxu0 0
        %2237 = vmatprep.subr.bf16.mxu0 0
        %2238 = vmatpush2.bf16.msra.mxu0 0
        %2239 = vmatprep.subr.bf16.mxu0 0
        %2240 = vmatpush2.bf16.msra.mxu0 0
        %2241 = vmatprep.subr.bf16.mxu0 0
        %2242 = vmatpush2.bf16.msra.mxu0 0
        %2243 = vmatprep.subr.bf16.mxu0 0
        %2244 = vmatpush2.bf16.msra.mxu0 0
        %2245 = vmatprep.mubr.bf16.mxu0 0
        %2246 = vmatmul.mubr.bf16.gmra.mxu0 %v2211
        %v2247 = vpop.f32.mrf.mxu0
        %v2248 = vadd.f32 0.0, %v2247
        %v2249 = vpop.f32.mrf.mxu0
        %v2250 = vpop.f32.mrf.mxu0
        %v2251 = vpop.f32.mrf.mxu0
        %2252 = vdwg.mxu0
        %v2254 = vsel %vm1660, %v1846, 0
        %2256 = vmatprep.subr.bf16.mxu0 0
        %2257 = vmatpush1.bf16.msra.mxu0 0
        %2258 = vmatprep.subr.bf16.mxu0 0
        %2259 = vmatpush1.bf16.msra.mxu0 0
        %2260 = vmatprep.subr.bf16.mxu0 0
        %2261 = vmatpush1.bf16.msra.mxu0 0
        %2262 = vmatprep.subr.bf16.mxu0 0
        %2263 = vmatpush1.bf16.msra.mxu0 0
        %2264 = vmatprep.subr.bf16.mxu0 0
        %2265 = vmatpush1.bf16.msra.mxu0 0
        %2266 = vmatprep.subr.bf16.mxu0 0
        %2267 = vmatpush1.bf16.msra.mxu0 0
        %2268 = vmatprep.subr.bf16.mxu0 0
        %2269 = vmatpush1.bf16.msra.mxu0 0
        %2270 = vmatprep.subr.bf16.mxu0 0
        %2271 = vmatpush1.bf16.msra.mxu0 %v1904
        %2272 = vmatprep.subr.bf16.mxu0 0
        %2273 = vmatpush2.bf16.msra.mxu0 0
        %2274 = vmatprep.subr.bf16.mxu0 0
        %2275 = vmatpush2.bf16.msra.mxu0 0
        %2276 = vmatprep.subr.bf16.mxu0 0
        %2277 = vmatpush2.bf16.msra.mxu0 0
        %2278 = vmatprep.subr.bf16.mxu0 0
        %2279 = vmatpush2.bf16.msra.mxu0 0
        %2280 = vmatprep.subr.bf16.mxu0 0
        %2281 = vmatpush2.bf16.msra.mxu0 0
        %2282 = vmatprep.subr.bf16.mxu0 0
        %2283 = vmatpush2.bf16.msra.mxu0 0
        %2284 = vmatprep.subr.bf16.mxu0 0
        %2285 = vmatpush2.bf16.msra.mxu0 0
        %2286 = vmatprep.subr.bf16.mxu0 0
        %2287 = vmatpush2.bf16.msra.mxu0 0
        %2288 = vmatprep.mubr.bf16.mxu0 0
        %2289 = vmatmul.mubr.bf16.gmra.mxu0 %v2254
        %v2290 = vpop.f32.mrf.mxu0
        %v2291 = vadd.f32 0.0, %v2290
        %v2292 = vpop.f32.mrf.mxu0
        %v2293 = vpop.f32.mrf.mxu0
        %v2294 = vpop.f32.mrf.mxu0
        %2295 = vdwg.mxu0
        %v2297 = vsel %vm1660, %v1847, 0
        %2299 = vmatprep.subr.bf16.mxu0 0
        %2300 = vmatpush1.bf16.msra.mxu0 0
        %2301 = vmatprep.subr.bf16.mxu0 0
        %2302 = vmatpush1.bf16.msra.mxu0 0
        %2303 = vmatprep.subr.bf16.mxu0 0
        %2304 = vmatpush1.bf16.msra.mxu0 0
        %2305 = vmatprep.subr.bf16.mxu0 0
        %2306 = vmatpush1.bf16.msra.mxu0 0
        %2307 = vmatprep.subr.bf16.mxu0 0
        %2308 = vmatpush1.bf16.msra.mxu0 0
        %2309 = vmatprep.subr.bf16.mxu0 0
        %2310 = vmatpush1.bf16.msra.mxu0 0
        %2311 = vmatprep.subr.bf16.mxu0 0
        %2312 = vmatpush1.bf16.msra.mxu0 0
        %2313 = vmatprep.subr.bf16.mxu0 0
        %2314 = vmatpush1.bf16.msra.mxu0 %v1950
        %2315 = vmatprep.subr.bf16.mxu0 0
        %2316 = vmatpush2.bf16.msra.mxu0 0
        %2317 = vmatprep.subr.bf16.mxu0 0
        %2318 = vmatpush2.bf16.msra.mxu0 0
        %2319 = vmatprep.subr.bf16.mxu0 0
        %2320 = vmatpush2.bf16.msra.mxu0 0
        %2321 = vmatprep.subr.bf16.mxu0 0
        %2322 = vmatpush2.bf16.msra.mxu0 0
        %2323 = vmatprep.subr.bf16.mxu0 0
        %2324 = vmatpush2.bf16.msra.mxu0 0
        %2325 = vmatprep.subr.bf16.mxu0 0
        %2326 = vmatpush2.bf16.msra.mxu0 0
        %2327 = vmatprep.subr.bf16.mxu0 0
        %2328 = vmatpush2.bf16.msra.mxu0 0
        %2329 = vmatprep.subr.bf16.mxu0 0
        %2330 = vmatpush2.bf16.msra.mxu0 0
        %2331 = vmatprep.mubr.bf16.mxu0 0
        %2332 = vmatmul.mubr.bf16.gmra.mxu0 %v2297
        %v2333 = vpop.f32.mrf.mxu0
        %v2334 = vadd.f32 0.0, %v2333
        %v2335 = vpop.f32.mrf.mxu0
        %v2336 = vpop.f32.mrf.mxu0
        %v2337 = vpop.f32.mrf.mxu0
        %2338 = vdwg.mxu0
        %v2340 = vsel %vm1660, %v1848, 0
        %2342 = vmatprep.subr.bf16.mxu0 0
        %2343 = vmatpush1.bf16.msra.mxu0 0
        %2344 = vmatprep.subr.bf16.mxu0 0
        %2345 = vmatpush1.bf16.msra.mxu0 0
        %2346 = vmatprep.subr.bf16.mxu0 0
        %2347 = vmatpush1.bf16.msra.mxu0 0
        %2348 = vmatprep.subr.bf16.mxu0 0
        %2349 = vmatpush1.bf16.msra.mxu0 0
        %2350 = vmatprep.subr.bf16.mxu0 0
        %2351 = vmatpush1.bf16.msra.mxu0 0
        %2352 = vmatprep.subr.bf16.mxu0 0
        %2353 = vmatpush1.bf16.msra.mxu0 0
        %2354 = vmatprep.subr.bf16.mxu0 0
        %2355 = vmatpush1.bf16.msra.mxu0 0
        %2356 = vmatprep.subr.bf16.mxu0 0
        %2357 = vmatpush1.bf16.msra.mxu0 %v1996
        %2358 = vmatprep.subr.bf16.mxu0 0
        %2359 = vmatpush2.bf16.msra.mxu0 0
        %2360 = vmatprep.subr.bf16.mxu0 0
        %2361 = vmatpush2.bf16.msra.mxu0 0
        %2362 = vmatprep.subr.bf16.mxu0 0
        %2363 = vmatpush2.bf16.msra.mxu0 0
        %2364 = vmatprep.subr.bf16.mxu0 0
        %2365 = vmatpush2.bf16.msra.mxu0 0
        %2366 = vmatprep.subr.bf16.mxu0 0
        %2367 = vmatpush2.bf16.msra.mxu0 0
        %2368 = vmatprep.subr.bf16.mxu0 0
        %2369 = vmatpush2.bf16.msra.mxu0 0
        %2370 = vmatprep.subr.bf16.mxu0 0
        %2371 = vmatpush2.bf16.msra.mxu0 0
        %2372 = vmatprep.subr.bf16.mxu0 0
        %2373 = vmatpush2.bf16.msra.mxu0 0
        %2374 = vmatprep.mubr.bf16.mxu0 0
        %2375 = vmatmul.mubr.bf16.gmra.mxu0 %v2340
        %v2376 = vpop.f32.mrf.mxu0
        %v2377 = vadd.f32 0.0, %v2376
        %v2378 = vpop.f32.mrf.mxu0
        %v2379 = vpop.f32.mrf.mxu0
        %v2380 = vpop.f32.mrf.mxu0
        %2381 = vdwg.mxu0
        %v2383 = vsel %vm1660, %v1849, 0
        %2385 = vmatprep.subr.bf16.mxu0 0
        %2386 = vmatpush1.bf16.msra.mxu0 0
        %2387 = vmatprep.subr.bf16.mxu0 0
        %2388 = vmatpush1.bf16.msra.mxu0 0
        %2389 = vmatprep.subr.bf16.mxu0 0
        %2390 = vmatpush1.bf16.msra.mxu0 0
        %2391 = vmatprep.subr.bf16.mxu0 0
        %2392 = vmatpush1.bf16.msra.mxu0 0
        %2393 = vmatprep.subr.bf16.mxu0 0
        %2394 = vmatpush1.bf16.msra.mxu0 0
        %2395 = vmatprep.subr.bf16.mxu0 0
        %2396 = vmatpush1.bf16.msra.mxu0 0
        %2397 = vmatprep.subr.bf16.mxu0 0
        %2398 = vmatpush1.bf16.msra.mxu0 0
        %2399 = vmatprep.subr.bf16.mxu0 0
        %2400 = vmatpush1.bf16.msra.mxu0 %v1858
        %2401 = vmatprep.subr.bf16.mxu0 0
        %2402 = vmatpush2.bf16.msra.mxu0 0
        %2403 = vmatprep.subr.bf16.mxu0 0
        %2404 = vmatpush2.bf16.msra.mxu0 0
        %2405 = vmatprep.subr.bf16.mxu0 0
        %2406 = vmatpush2.bf16.msra.mxu0 0
        %2407 = vmatprep.subr.bf16.mxu0 0
        %2408 = vmatpush2.bf16.msra.mxu0 0
        %2409 = vmatprep.subr.bf16.mxu0 0
        %2410 = vmatpush2.bf16.msra.mxu0 0
        %2411 = vmatprep.subr.bf16.mxu0 0
        %2412 = vmatpush2.bf16.msra.mxu0 0
        %2413 = vmatprep.subr.bf16.mxu0 0
        %2414 = vmatpush2.bf16.msra.mxu0 0
        %2415 = vmatprep.subr.bf16.mxu0 0
        %2416 = vmatpush2.bf16.msra.mxu0 0
        %2417 = vmatprep.mubr.bf16.mxu0 0
        %2418 = vmatmul.mubr.bf16.gmra.mxu0 %v2383
        %v2419 = vpop.f32.mrf.mxu0
        %v2420 = vadd.f32 0.0, %v2419
        %v2421 = vpop.f32.mrf.mxu0
        %v2422 = vpop.f32.mrf.mxu0
        %v2423 = vpop.f32.mrf.mxu0
        %2424 = vdwg.mxu0
        %v2426 = vsel %vm1660, %v1850, 0
        %2428 = vmatprep.subr.bf16.mxu0 0
        %2429 = vmatpush1.bf16.msra.mxu0 0
        %2430 = vmatprep.subr.bf16.mxu0 0
        %2431 = vmatpush1.bf16.msra.mxu0 0
        %2432 = vmatprep.subr.bf16.mxu0 0
        %2433 = vmatpush1.bf16.msra.mxu0 0
        %2434 = vmatprep.subr.bf16.mxu0 0
        %2435 = vmatpush1.bf16.msra.mxu0 0
        %2436 = vmatprep.subr.bf16.mxu0 0
        %2437 = vmatpush1.bf16.msra.mxu0 0
        %2438 = vmatprep.subr.bf16.mxu0 0
        %2439 = vmatpush1.bf16.msra.mxu0 0
        %2440 = vmatprep.subr.bf16.mxu0 0
        %2441 = vmatpush1.bf16.msra.mxu0 0
        %2442 = vmatprep.subr.bf16.mxu0 0
        %2443 = vmatpush1.bf16.msra.mxu0 %v1904
        %2444 = vmatprep.subr.bf16.mxu0 0
        %2445 = vmatpush2.bf16.msra.mxu0 0
        %2446 = vmatprep.subr.bf16.mxu0 0
        %2447 = vmatpush2.bf16.msra.mxu0 0
        %2448 = vmatprep.subr.bf16.mxu0 0
        %2449 = vmatpush2.bf16.msra.mxu0 0
        %2450 = vmatprep.subr.bf16.mxu0 0
        %2451 = vmatpush2.bf16.msra.mxu0 0
        %2452 = vmatprep.subr.bf16.mxu0 0
        %2453 = vmatpush2.bf16.msra.mxu0 0
        %2454 = vmatprep.subr.bf16.mxu0 0
        %2455 = vmatpush2.bf16.msra.mxu0 0
        %2456 = vmatprep.subr.bf16.mxu0 0
        %2457 = vmatpush2.bf16.msra.mxu0 0
        %2458 = vmatprep.subr.bf16.mxu0 0
        %2459 = vmatpush2.bf16.msra.mxu0 0
        %2460 = vmatprep.mubr.bf16.mxu0 0
        %2461 = vmatmul.mubr.bf16.gmra.mxu0 %v2426
        %v2462 = vpop.f32.mrf.mxu0
        %v2463 = vadd.f32 0.0, %v2462
        %v2464 = vpop.f32.mrf.mxu0
        %v2465 = vpop.f32.mrf.mxu0
        %v2466 = vpop.f32.mrf.mxu0
        %2467 = vdwg.mxu0
        %v2469 = vsel %vm1660, %v1851, 0
        %2471 = vmatprep.subr.bf16.mxu0 0
        %2472 = vmatpush1.bf16.msra.mxu0 0
        %2473 = vmatprep.subr.bf16.mxu0 0
        %2474 = vmatpush1.bf16.msra.mxu0 0
        %2475 = vmatprep.subr.bf16.mxu0 0
        %2476 = vmatpush1.bf16.msra.mxu0 0
        %2477 = vmatprep.subr.bf16.mxu0 0
        %2478 = vmatpush1.bf16.msra.mxu0 0
        %2479 = vmatprep.subr.bf16.mxu0 0
        %2480 = vmatpush1.bf16.msra.mxu0 0
        %2481 = vmatprep.subr.bf16.mxu0 0
        %2482 = vmatpush1.bf16.msra.mxu0 0
        %2483 = vmatprep.subr.bf16.mxu0 0
        %2484 = vmatpush1.bf16.msra.mxu0 0
        %2485 = vmatprep.subr.bf16.mxu0 0
        %2486 = vmatpush1.bf16.msra.mxu0 %v1950
        %2487 = vmatprep.subr.bf16.mxu0 0
        %2488 = vmatpush2.bf16.msra.mxu0 0
        %2489 = vmatprep.subr.bf16.mxu0 0
        %2490 = vmatpush2.bf16.msra.mxu0 0
        %2491 = vmatprep.subr.bf16.mxu0 0
        %2492 = vmatpush2.bf16.msra.mxu0 0
        %2493 = vmatprep.subr.bf16.mxu0 0
        %2494 = vmatpush2.bf16.msra.mxu0 0
        %2495 = vmatprep.subr.bf16.mxu0 0
        %2496 = vmatpush2.bf16.msra.mxu0 0
        %2497 = vmatprep.subr.bf16.mxu0 0
        %2498 = vmatpush2.bf16.msra.mxu0 0
        %2499 = vmatprep.subr.bf16.mxu0 0
        %2500 = vmatpush2.bf16.msra.mxu0 0
        %2501 = vmatprep.subr.bf16.mxu0 0
        %2502 = vmatpush2.bf16.msra.mxu0 0
        %2503 = vmatprep.mubr.bf16.mxu0 0
        %2504 = vmatmul.mubr.bf16.gmra.mxu0 %v2469
        %v2505 = vpop.f32.mrf.mxu0
        %v2506 = vadd.f32 0.0, %v2505
        %v2507 = vpop.f32.mrf.mxu0
        %v2508 = vpop.f32.mrf.mxu0
        %v2509 = vpop.f32.mrf.mxu0
        %2510 = vdwg.mxu0
        %v2512 = vsel %vm1660, %v1852, 0
        %2514 = vmatprep.subr.bf16.mxu0 0
        %2515 = vmatpush1.bf16.msra.mxu0 0
        %2516 = vmatprep.subr.bf16.mxu0 0
        %2517 = vmatpush1.bf16.msra.mxu0 0
        %2518 = vmatprep.subr.bf16.mxu0 0
        %2519 = vmatpush1.bf16.msra.mxu0 0
        %2520 = vmatprep.subr.bf16.mxu0 0
        %2521 = vmatpush1.bf16.msra.mxu0 0
        %2522 = vmatprep.subr.bf16.mxu0 0
        %2523 = vmatpush1.bf16.msra.mxu0 0
        %2524 = vmatprep.subr.bf16.mxu0 0
        %2525 = vmatpush1.bf16.msra.mxu0 0
        %2526 = vmatprep.subr.bf16.mxu0 0
        %2527 = vmatpush1.bf16.msra.mxu0 0
        %2528 = vmatprep.subr.bf16.mxu0 0
        %2529 = vmatpush1.bf16.msra.mxu0 %v1996
        %2530 = vmatprep.subr.bf16.mxu0 0
        %2531 = vmatpush2.bf16.msra.mxu0 0
        %2532 = vmatprep.subr.bf16.mxu0 0
        %2533 = vmatpush2.bf16.msra.mxu0 0
        %2534 = vmatprep.subr.bf16.mxu0 0
        %2535 = vmatpush2.bf16.msra.mxu0 0
        %2536 = vmatprep.subr.bf16.mxu0 0
        %2537 = vmatpush2.bf16.msra.mxu0 0
        %2538 = vmatprep.subr.bf16.mxu0 0
        %2539 = vmatpush2.bf16.msra.mxu0 0
        %2540 = vmatprep.subr.bf16.mxu0 0
        %2541 = vmatpush2.bf16.msra.mxu0 0
        %2542 = vmatprep.subr.bf16.mxu0 0
        %2543 = vmatpush2.bf16.msra.mxu0 0
        %2544 = vmatprep.subr.bf16.mxu0 0
        %2545 = vmatpush2.bf16.msra.mxu0 0
        %2546 = vmatprep.mubr.bf16.mxu0 0
        %2547 = vmatmul.mubr.bf16.gmra.mxu0 %v2512
        %v2548 = vpop.f32.mrf.mxu0
        %v2549 = vadd.f32 0.0, %v2548
        %v2550 = vpop.f32.mrf.mxu0
        %v2551 = vpop.f32.mrf.mxu0
        %v2552 = vpop.f32.mrf.mxu0
        %2553 = vdwg.mxu0
        %v2554 = vsel %vm933, %v1895, 0.0
        %v2555 = vsel %vm933, %v1941, 0.0
        %v2556 = vsel %vm933, %v1987, 0.0
        %v2557 = vsel %vm933, %v2033, 0.0
        %v2558 = vadd.f32 %v2554, 0.0
        %v2559 = vadd.f32 %v2555, 0.0
        %v2560 = vadd.f32 %v2556, 0.0
        %v2561 = vadd.f32 %v2557, 0.0
        %v2562 = vsel %vm940, %v2076, 0.0
        %v2563 = vsel %vm940, %v2119, 0.0
        %v2564 = vsel %vm940, %v2162, 0.0
        %v2565 = vsel %vm940, %v2205, 0.0
        %v2566 = vadd.f32 %v2558, %v2562
        %v2567 = vadd.f32 %v2559, %v2563
        %v2568 = vadd.f32 %v2560, %v2564
        %v2569 = vadd.f32 %v2561, %v2565
        %v2570 = vsel %vm947, %v2248, 0.0
        %v2571 = vsel %vm947, %v2291, 0.0
        %v2572 = vsel %vm947, %v2334, 0.0
        %v2573 = vsel %vm947, %v2377, 0.0
        %v2574 = vadd.f32 %v2566, %v2570
        %v2575 = vadd.f32 %v2567, %v2571
        %v2576 = vadd.f32 %v2568, %v2572
        %v2577 = vadd.f32 %v2569, %v2573
        %v2578 = vsel %vm954, %v2420, 0.0
        %v2579 = vsel %vm954, %v2463, 0.0
        %v2580 = vsel %vm954, %v2506, 0.0
        %v2581 = vsel %vm954, %v2549, 0.0
        %v2582 = vadd.f32 %v2574, %v2578
        %v2583 = vadd.f32 %v2575, %v2579
        %v2584 = vadd.f32 %v2576, %v2580
        %v2585 = vadd.f32 %v2577, %v2581
        %v2586 = vpack.c.bf16 %v2583, %v2582
        %v2587 = vpack.c.bf16 %v2585, %v2584
        %v2588 = vld [vmem:[#allocation13] sm:$0xf]
        %v2589 = vld [vmem:[#allocation13 + $0x4] sm:$0xf]
        %v2590 = vld [vmem:[#allocation13 + $0x8] sm:$0xf]
        %v2591 = vld [vmem:[#allocation13 + $0xc] sm:$0xf]
        %v2592 = vld [vmem:[#allocation14] sm:$0x1]
        %v2594 = vlaneseq
        %v2595 = vshrl.u32 %v2594, 7
        %v2596 = vsub.s32 0, %v2595
        %v2597 = vrot.slane %v2592, %v2596
        %v2603 = vunpack.c.l.b16 %v2588
        %v2604 = vunpack.c.l.b16 %v2589
        %v2605 = vunpack.c.l.b16 %v2590
        %v2606 = vunpack.c.l.b16 %v2591
        %v2607 = vpack.c.b16 %v2604, %v2603
        %v2608 = vpack.c.b16 %v2606, %v2605
        %v2612 = vsel %vm706, %v2586, 0
        %v2615 = vsel %vm706, %v2587, 0
        %2617 = vmatprep.subr.bf16.mxu0 0
        %2618 = vmatpush1.bf16.msra.mxu0 0
        %2619 = vmatprep.subr.bf16.mxu0 0
        %2620 = vmatpush1.bf16.msra.mxu0 0
        %2621 = vmatprep.subr.bf16.mxu0 0
        %2622 = vmatpush1.bf16.msra.mxu0 0
        %2623 = vmatprep.subr.bf16.mxu0 0
        %2624 = vmatpush1.bf16.msra.mxu0 0
        %2625 = vmatprep.subr.bf16.mxu0 0
        %2626 = vmatpush1.bf16.msra.mxu0 0
        %2627 = vmatprep.subr.bf16.mxu0 0
        %2628 = vmatpush1.bf16.msra.mxu0 0
        %2629 = vmatprep.subr.bf16.mxu0 0
        %2630 = vmatpush1.bf16.msra.mxu0 %v2608
        %2631 = vmatprep.subr.bf16.mxu0 0
        %2632 = vmatpush1.bf16.msra.mxu0 %v2607
        %2633 = vmatprep.subr.bf16.mxu0 0
        %2634 = vmatpush2.bf16.msra.mxu0 0
        %2635 = vmatprep.subr.bf16.mxu0 0
        %2636 = vmatpush2.bf16.msra.mxu0 0
        %2637 = vmatprep.subr.bf16.mxu0 0
        %2638 = vmatpush2.bf16.msra.mxu0 0
        %2639 = vmatprep.subr.bf16.mxu0 0
        %2640 = vmatpush2.bf16.msra.mxu0 0
        %2641 = vmatprep.subr.bf16.mxu0 0
        %2642 = vmatpush2.bf16.msra.mxu0 0
        %2643 = vmatprep.subr.bf16.mxu0 0
        %2644 = vmatpush2.bf16.msra.mxu0 0
        %2645 = vmatprep.subr.bf16.mxu0 0
        %2646 = vmatpush2.bf16.msra.mxu0 0
        %2647 = vmatprep.subr.bf16.mxu0 0
        %2648 = vmatpush2.bf16.msra.mxu0 0
        %2649 = vmatprep.mubr.bf16.mxu0 0
        %2650 = vmatmul.mubr.bf16.gmra.mxu0 %v2612
        %v2651 = vpop.f32.mrf.mxu0
        %v2652 = vadd.f32 %v2597, %v2651
        %v2653 = vpop.f32.mrf.mxu0
        %v2654 = vpop.f32.mrf.mxu0
        %v2655 = vadd.f32 %v2597, %v2654
        %v2656 = vpop.f32.mrf.mxu0
        %2657 = vmatprep.mubr.bf16.mxu0 0
        %2658 = vmatmul.mubr.bf16.gmra.mxu0 %v2615
        %v2659 = vpop.f32.mrf.mxu0
        %v2660 = vadd.f32 %v2597, %v2659
        %v2661 = vpop.f32.mrf.mxu0
        %v2662 = vpop.f32.mrf.mxu0
        %v2663 = vadd.f32 %v2597, %v2662
        %v2664 = vpop.f32.mrf.mxu0
        %2665 = vdwg.mxu0
        %v2666 = vld [vmem:[%s581] sm:$0xf]
        %v2667 = vld [vmem:[%s581 + $0x4] sm:$0xf]
        %v2668 = vld [vmem:[%s581 + $0x8] sm:$0xf]
        %v2669 = vld [vmem:[%s581 + $0xc] sm:$0xf]
        %v2670 = vld [vmem:[%s10] sm:$0xf]
        %v2671 = vld [vmem:[%s10 + $0x4] sm:$0xf]
        %v2672 = vld [vmem:[%s10 + $0x8] sm:$0xf]
        %v2673 = vld [vmem:[%s10 + $0xc] sm:$0xf]
        %v2674 = vpack.c.bf16 %v2655, %v2652
        %v2675 = vpack.c.bf16 %v2663, %v2660
        %v2676 = vld [vmem:[#allocation16] sm:$0xf]
        %v2677 = vld [vmem:[#allocation16 + $0x4] sm:$0xf]
        %v2678 = vld [vmem:[#allocation16 + $0x8] sm:$0xf]
        %v2679 = vld [vmem:[#allocation16 + $0xc] sm:$0xf]
        %v2684 = vunpack.c.l.b16 %v2676
        %v2685 = vunpack.c.l.b16 %v2677
        %v2686 = vunpack.c.l.b16 %v2678
        %v2687 = vunpack.c.l.b16 %v2679
        %v2688 = vpack.c.b16 %v2685, %v2684
        %v2689 = vpack.c.b16 %v2687, %v2686
        %v2693 = vsel %vm706, %v2674, 0
        %v2696 = vsel %vm706, %v2675, 0
        %2698 = vmatprep.subr.bf16.mxu0 0
        %2699 = vmatpush1.bf16.msra.mxu0 0
        %2700 = vmatprep.subr.bf16.mxu0 0
        %2701 = vmatpush1.bf16.msra.mxu0 0
        %2702 = vmatprep.subr.bf16.mxu0 0
        %2703 = vmatpush1.bf16.msra.mxu0 0
        %2704 = vmatprep.subr.bf16.mxu0 0
        %2705 = vmatpush1.bf16.msra.mxu0 0
        %2706 = vmatprep.subr.bf16.mxu0 0
        %2707 = vmatpush1.bf16.msra.mxu0 0
        %2708 = vmatprep.subr.bf16.mxu0 0
        %2709 = vmatpush1.bf16.msra.mxu0 0
        %2710 = vmatprep.subr.bf16.mxu0 0
        %2711 = vmatpush1.bf16.msra.mxu0 %v2689
        %2712 = vmatprep.subr.bf16.mxu0 0
        %2713 = vmatpush1.bf16.msra.mxu0 %v2688
        %2714 = vmatprep.subr.bf16.mxu0 0
        %2715 = vmatpush2.bf16.msra.mxu0 0
        %2716 = vmatprep.subr.bf16.mxu0 0
        %2717 = vmatpush2.bf16.msra.mxu0 0
        %2718 = vmatprep.subr.bf16.mxu0 0
        %2719 = vmatpush2.bf16.msra.mxu0 0
        %2720 = vmatprep.subr.bf16.mxu0 0
        %2721 = vmatpush2.bf16.msra.mxu0 0
        %2722 = vmatprep.subr.bf16.mxu0 0
        %2723 = vmatpush2.bf16.msra.mxu0 0
        %2724 = vmatprep.subr.bf16.mxu0 0
        %2725 = vmatpush2.bf16.msra.mxu0 0
        %2726 = vmatprep.subr.bf16.mxu0 0
        %2727 = vmatpush2.bf16.msra.mxu0 0
        %2728 = vmatprep.subr.bf16.mxu0 0
        %2729 = vmatpush2.bf16.msra.mxu0 0
        %2730 = vmatprep.mubr.bf16.mxu0 0
        %2731 = vmatmul.mubr.bf16.gmra.mxu0 %v2693
        %v2732 = vpop.f32.mrf.mxu0
        %v2733 = vadd.f32 0.0, %v2732
        %v2734 = vpop.f32.mrf.mxu0
        %v2735 = vpop.f32.mrf.mxu0
        %v2736 = vadd.f32 0.0, %v2735
        %v2737 = vpop.f32.mrf.mxu0
        %2738 = vmatprep.mubr.bf16.mxu0 0
        %2739 = vmatmul.mubr.bf16.gmra.mxu0 %v2696
        %v2740 = vpop.f32.mrf.mxu0
        %v2741 = vadd.f32 0.0, %v2740
        %v2742 = vpop.f32.mrf.mxu0
        %v2743 = vpop.f32.mrf.mxu0
        %v2744 = vadd.f32 0.0, %v2743
        %v2745 = vpop.f32.mrf.mxu0
        %2746 = vdwg.mxu0
        %v2751 = vunpack.c.l.b16 %v2666
        %v2752 = vunpack.c.l.b16 %v2667
        %v2753 = vunpack.c.l.b16 %v2668
        %v2754 = vunpack.c.l.b16 %v2669
        %v2755 = vpack.c.b16 %v2752, %v2751
        %v2756 = vpack.c.b16 %v2754, %v2753
        %v2761 = vunpack.c.l.b16 %v2670
        %v2762 = vunpack.c.l.b16 %v2671
        %v2763 = vunpack.c.l.b16 %v2672
        %v2764 = vunpack.c.l.b16 %v2673
        %v2765 = vpack.c.b16 %v2762, %v2761
        %v2766 = vpack.c.b16 %v2764, %v2763
        %v2770 = vsel %vm706, %v2755, 0
        %v2773 = vsel %vm706, %v2756, 0
        %2775 = vmatprep.subr.bf16.mxu0 0
        %2776 = vmatpush1.bf16.msra.mxu0 0
        %2777 = vmatprep.subr.bf16.mxu0 0
        %2778 = vmatpush1.bf16.msra.mxu0 0
        %2779 = vmatprep.subr.bf16.mxu0 0
        %2780 = vmatpush1.bf16.msra.mxu0 0
        %2781 = vmatprep.subr.bf16.mxu0 0
        %2782 = vmatpush1.bf16.msra.mxu0 0
        %2783 = vmatprep.subr.bf16.mxu0 0
        %2784 = vmatpush1.bf16.msra.mxu0 0
        %2785 = vmatprep.subr.bf16.mxu0 0
        %2786 = vmatpush1.bf16.msra.mxu0 0
        %2787 = vmatprep.subr.bf16.mxu0 0
        %2788 = vmatpush1.bf16.msra.mxu0 %v2766
        %2789 = vmatprep.subr.bf16.mxu0 0
        %2790 = vmatpush1.bf16.msra.mxu0 %v2765
        %2791 = vmatprep.subr.bf16.mxu0 0
        %2792 = vmatpush2.bf16.msra.mxu0 0
        %2793 = vmatprep.subr.bf16.mxu0 0
        %2794 = vmatpush2.bf16.msra.mxu0 0
        %2795 = vmatprep.subr.bf16.mxu0 0
        %2796 = vmatpush2.bf16.msra.mxu0 0
        %2797 = vmatprep.subr.bf16.mxu0 0
        %2798 = vmatpush2.bf16.msra.mxu0 0
        %2799 = vmatprep.subr.bf16.mxu0 0
        %2800 = vmatpush2.bf16.msra.mxu0 0
        %2801 = vmatprep.subr.bf16.mxu0 0
        %2802 = vmatpush2.bf16.msra.mxu0 0
        %2803 = vmatprep.subr.bf16.mxu0 0
        %2804 = vmatpush2.bf16.msra.mxu0 0
        %2805 = vmatprep.subr.bf16.mxu0 0
        %2806 = vmatpush2.bf16.msra.mxu0 0
        %2807 = vmatprep.mubr.bf16.mxu0 0
        %2808 = vmatmul.mubr.bf16.gmra.mxu0 %v2770
        %v2809 = vpop.f32.mrf.mxu0
        %v2810 = vadd.f32 %v2733, %v2809
        %v2811 = vpop.f32.mrf.mxu0
        %v2812 = vpop.f32.mrf.mxu0
        %v2813 = vadd.f32 %v2736, %v2812
        %v2814 = vpop.f32.mrf.mxu0
        %2815 = vmatprep.mubr.bf16.mxu0 0
        %2816 = vmatmul.mubr.bf16.gmra.mxu0 %v2773
        %v2817 = vpop.f32.mrf.mxu0
        %v2818 = vadd.f32 %v2741, %v2817
        %v2819 = vpop.f32.mrf.mxu0
        %v2820 = vpop.f32.mrf.mxu0
        %v2821 = vadd.f32 %v2744, %v2820
        %v2822 = vpop.f32.mrf.mxu0
        %2823 = vdwg.mxu0
        %v2824 = vld [vmem:[%s12] sm:$0x1]
        %v2826 = vlaneseq
        %v2827 = vshrl.u32 %v2826, 7
        %v2828 = vsub.s32 0, %v2827
        %v2829 = vrot.slane %v2824, %v2828
        %v2831 = vadd.f32 %v2810, %v2829
        %v2832 = vadd.f32 %v2813, %v2829
        %v2833 = vadd.f32 %v2818, %v2829
        %v2834 = vadd.f32 %v2821, %v2829
        %v2835 = vmax.f32 %v2831, 0.0
        %v2836 = vmax.f32 %v2832, 0.0
        %v2837 = vmax.f32 %v2833, 0.0
        %v2838 = vmax.f32 %v2834, 0.0
        %v2839 = vpack.c.bf16 %v2836, %v2835
        %v2840 = vpack.c.bf16 %v2838, %v2837
        %v2841 = vld [vmem:[#allocation17] sm:$0xf]
        %v2842 = vld [vmem:[#allocation17 + $0x4] sm:$0xf]
        %v2843 = vld [vmem:[#allocation17 + $0x8] sm:$0xf]
        %v2844 = vld [vmem:[#allocation17 + $0xc] sm:$0xf]
        %v2845 = vld [vmem:[#allocation17 + $0x10] sm:$0xf]
        %v2846 = vld [vmem:[#allocation17 + $0x14] sm:$0xf]
        %v2847 = vld [vmem:[#allocation17 + $0x18] sm:$0xf]
        %v2848 = vld [vmem:[#allocation17 + $0x1c] sm:$0xf]
        %v2849 = vld [vmem:[%s14] sm:$0x1]
        %v2851 = vlaneseq
        %v2852 = vshrl.u32 %v2851, 7
        %v2853 = vsub.s32 0, %v2852
        %v2854 = vrot.slane %v2849, %v2853
        %v2864 = vunpack.c.l.b16 %v2841
        %v2865 = vunpack.c.l.b16 %v2842
        %v2866 = vunpack.c.l.b16 %v2843
        %v2867 = vunpack.c.l.b16 %v2844
        %v2868 = vunpack.c.l.b16 %v2845
        %v2869 = vunpack.c.l.b16 %v2846
        %v2870 = vunpack.c.l.b16 %v2847
        %v2871 = vunpack.c.l.b16 %v2848
        %v2872 = vpack.c.b16 %v2865, %v2864
        %v2873 = vpack.c.b16 %v2867, %v2866
        %v2874 = vpack.c.b16 %v2869, %v2868
        %v2875 = vpack.c.b16 %v2871, %v2870
        %vm2880 = vcmask 523264
        %v2882 = vsel %vm2880, %v2839, 0
        %v2885 = vsel %vm2880, %v2840, 0
        %2887 = vmatprep.subr.bf16.mxu0 0
        %2888 = vmatpush1.bf16.msra.mxu0 0
        %2889 = vmatprep.subr.bf16.mxu0 0
        %2890 = vmatpush1.bf16.msra.mxu0 0
        %2891 = vmatprep.subr.bf16.mxu0 0
        %2892 = vmatpush1.bf16.msra.mxu0 0
        %2893 = vmatprep.subr.bf16.mxu0 0
        %2894 = vmatpush1.bf16.msra.mxu0 0
        %2895 = vmatprep.subr.bf16.mxu0 0
        %2896 = vmatpush1.bf16.msra.mxu0 %v2875
        %2897 = vmatprep.subr.bf16.mxu0 0
        %2898 = vmatpush1.bf16.msra.mxu0 %v2874
        %2899 = vmatprep.subr.bf16.mxu0 0
        %2900 = vmatpush1.bf16.msra.mxu0 %v2873
        %2901 = vmatprep.subr.bf16.mxu0 0
        %2902 = vmatpush1.bf16.msra.mxu0 %v2872
        %2903 = vmatprep.subr.bf16.mxu0 0
        %2904 = vmatpush2.bf16.msra.mxu0 0
        %2905 = vmatprep.subr.bf16.mxu0 0
        %2906 = vmatpush2.bf16.msra.mxu0 0
        %2907 = vmatprep.subr.bf16.mxu0 0
        %2908 = vmatpush2.bf16.msra.mxu0 0
        %2909 = vmatprep.subr.bf16.mxu0 0
        %2910 = vmatpush2.bf16.msra.mxu0 0
        %2911 = vmatprep.subr.bf16.mxu0 0
        %2912 = vmatpush2.bf16.msra.mxu0 0
        %2913 = vmatprep.subr.bf16.mxu0 0
        %2914 = vmatpush2.bf16.msra.mxu0 0
        %2915 = vmatprep.subr.bf16.mxu0 0
        %2916 = vmatpush2.bf16.msra.mxu0 0
        %2917 = vmatprep.subr.bf16.mxu0 0
        %2918 = vmatpush2.bf16.msra.mxu0 0
        %2919 = vmatprep.mubr.bf16.mxu0 0
        %2920 = vmatmul.mubr.bf16.gmra.mxu0 %v2882
        %v2921 = vpop.f32.mrf.mxu0
        %v2922 = vadd.f32 %v2854, %v2921
        %v2923 = vpop.f32.mrf.mxu0
        %v2924 = vpop.f32.mrf.mxu0
        %v2925 = vadd.f32 %v2854, %v2924
        %v2926 = vpop.f32.mrf.mxu0
        %2927 = vmatprep.mubr.bf16.mxu0 0
        %2928 = vmatmul.mubr.bf16.gmra.mxu0 %v2885
        %v2929 = vpop.f32.mrf.mxu0
        %v2930 = vadd.f32 %v2854, %v2929
        %v2931 = vpop.f32.mrf.mxu0
        %v2932 = vpop.f32.mrf.mxu0
        %v2933 = vadd.f32 %v2854, %v2932
        %v2934 = vpop.f32.mrf.mxu0
        %2935 = vdwg.mxu0
        %2936 = vst [vmem:[%s664] sm:$0xff] %v2922
        %2937 = vst [vmem:[%s664 + $0x8] sm:$0xff] %v2925
        %2938 = vst [vmem:[%s664 + $0x10] sm:$0xff] %v2930
        %2939 = vst [vmem:[%s664 + $0x18] sm:$0xff] %v2933
        %s2940 = sand.u32 %s372, 1
        %s2941 = scalar_lea.sflag [#allocation4], %s2940
        %s2942 = sand.u32 %s372, 1
        %s2943 = smul.addr %s2942, 32
        %s2944 = scalar_lea.vmem [#allocation19], %s2943
        // Predicated region
        $region121: #{tpu_custom_call.1} parent=79 // pred_check
          %p2945 = pneg %p382
        $region122: #{tpu_custom_call.1} parent=79 // pred_check_branch
          %2947 = sbr.rel (%p2945) target = $region124
        $region123: #{tpu_custom_call.1} parent=79 // pred_region
          %s2948 = smul.u32 4, %s39
          %s2950 = ssub.s32 512, 512
          %2951 = vsyncadd %s2941, %s2950
          %s2952 = smul.addr %s2948, 128
          %s2953 = scalar_lea.hbm %s15, %s2952
          %s2954 = sshll.u32 %s2944, 4
          %s2955 = int_to_ptr.vmem [resolvable:$true] %s2954
          %2960 = dma.vmem_to_hbm [thread:$0]  %s2955, 512, %s2953, %s2941, 128, 128, 8
        $region124: #{tpu_custom_call.1} parent=79 // pred_fallthru
          _
      $region80: #{tpu_custom_call.1} parent=5 // pred_fallthru
        _
      %p2961 = scmp.le.s32.totalorder 2, %s34
      // Predicated region
      $region125: #{tpu_custom_call.1} parent=5 // pred_check
        %p2962 = pneg %p2961
      $region126: #{tpu_custom_call.1} parent=5 // pred_check_branch
        %2964 = sbr.rel (%p2962) target = $region128
      $region127: #{tpu_custom_call.1} parent=5 // pred_region
        %s2965 = ssub.s32 %s34, 2
        // Predicated region
        $region129: #{tpu_custom_call.1} parent=127 // pred_check
          %p2966 = pneg %p388
        $region130: #{tpu_custom_call.1} parent=127 // pred_check_branch
          %2968 = sbr.rel (%p2966) target = $region132
        $region131: #{tpu_custom_call.1} parent=127 // pred_region
          %s2969 = sand.u32 %s373, 1
          %s2970 = scalar_lea.sflag [#allocation4], %s2969
          %s2971 = sand.u32 %s373, 1
          %s2972 = smul.addr %s2971, 32
          %s2973 = scalar_lea.vmem [#allocation19], %s2972
          %2974 = dma.done %s2970, 512
        $region132: #{tpu_custom_call.1} parent=127 // pred_fallthru
          _
      $region128: #{tpu_custom_call.1} parent=5 // pred_fallthru
        _
    $region6: #{tpu_custom_call.1} parent=1 // loop_footer
      %s38 = sadd.s32 1, %s34
    $region7: #{tpu_custom_call.1} parent=1 // loop_footer_branch
      %33 = sbr.rel target = $region3
    $region8: #{tpu_custom_call.1} parent=1 // loop_exit
      _
    %2975 = vsyncpa [#allocation3], 1
    %s2976 = scalar_lea.sflag [#allocation3], 1
    %2977 = vsyncpa %s2976, 1
    %2978 = vsyncpa [#allocation6], 1
    %s2979 = scalar_lea.sflag [#allocation6], 1
    %2980 = vsyncpa %s2979, 1
    %2981 = vsyncpa [#allocation9], 1
    %2982 = vsyncpa [#allocation12], 1
    %2983 = vsyncpa [#allocation15], 1
    %2984 = vsyncpa [#allocation18], 1
    %2985 = vsyncpa [#allocation4], 1
    %s2986 = scalar_lea.sflag [#allocation4], 1
    %2987 = vsyncpa %s2986, 1

</llo_original>
